<compile_context>
chip_gen: v5e
topology: v5e:2x2
jax: 0.10.0
libtpu: 0.0.40
codegen_flags: <defaults>
</compile_context>

<pallas_src>
import functools

import numpy as np

import jax
import jax.numpy as jnp
from jax.experimental import pallas as pl
from jax.experimental.pallas import tpu as pltpu


# ---------------------------------------------------------------------------
# Fused forward kernel (one grid step == one batch tile, everything in VMEM)
# ---------------------------------------------------------------------------

def _fused_forward_kernel(
    x_ref,     # (B, 50, 50)      input tile
    m1_ref,    # (3, 50, 288)     conv1 lane-mixing matrices (per kernel row i)
    b1w_ref,   # (1, 288)         conv1 bias, repeated per 48-wide column block
    p1r_ref,   # (2, B*24, B*48)  pool1 row (H) selection, even / odd
    p1c_ref,   # (2, 288, 144)    pool1 col (W) selection, even / odd
    r2_ref,    # (3, B*22, B*24)  conv2 row-shift selection (per kernel row i)
    m2_ref,    # (3, 144, 352)    conv2 lane-mixing matrices
    b2w_ref,   # (1, 352)
    p2r_ref,   # (2, B*11, B*22)  pool2 row selection
    p2c_ref,   # (2, 352, 176)    pool2 col selection
    s1_ref,    # (11, B, B*11)    fc1 row-gather (one per pooled output row)
    w1_ref,    # (11, 176, 128)   fc1 weights, split by pooled output row
    b1_ref,    # (1, 128)
    w2_ref,    # (128, 64)
    b2_ref,    # (1, 64)
    w3_ref,    # (64, 3)
    b3_ref,    # (1, 3)
    o_ref,     # (B, 3)           output tile (log-probabilities)
    *,
    b_tile,
):
    B = b_tile
    f32 = jnp.float32

    def mm(a, b):
        return jnp.dot(a, b, preferred_element_type=f32)

    # ---- conv1 (1 -> 6, 3x3 valid) + bias + relu --------------------------
    # wide layout: (B*48, 6*48), row = b*48 + oh, col = oc*48 + ow
    y1 = None
    for i in range(3):
        slab = x_ref[:, pl.ds(i, 48), :].reshape(B * 48, 50)
        t = mm(slab, m1_ref[i])
        y1 = t if y1 is None else y1 + t
    y1 = jnp.maximum(y1 + b1w_ref[...], 0.0)

    # ---- maxpool 2x2 -> (B*24, 6*24) --------------------------------------
    h1 = jnp.maximum(mm(p1r_ref[0], y1), mm(p1r_ref[1], y1))
    p1 = jnp.maximum(mm(h1, p1c_ref[0]), mm(h1, p1c_ref[1]))

    # ---- conv2 (6 -> 16, 3x3 valid) + bias + relu -------------------------
    # wide layout: (B*22, 16*22), row = b*22 + oh, col = oc*22 + ow
    y2 = None
    for i in range(3):
        t = mm(mm(r2_ref[i], p1), m2_ref[i])
        y2 = t if y2 is None else y2 + t
    y2 = jnp.maximum(y2 + b2w_ref[...], 0.0)

    # ---- maxpool 2x2 -> (B*11, 16*11) -------------------------------------
    h2 = jnp.maximum(mm(p2r_ref[0], y2), mm(p2r_ref[1], y2))
    p2 = jnp.maximum(mm(h2, p2c_ref[0]), mm(h2, p2c_ref[1]))

    # ---- fc1 (torch NCHW flatten folded into per-row weight slices) + relu
    acc = None
    for oh in range(11):
        xoh = mm(s1_ref[oh], p2)            # (B, 176): pooled row `oh` per sample
        t = mm(xoh, w1_ref[oh])             # (B, 128)
        acc = t if acc is None else acc + t
    a1 = jnp.maximum(acc + b1_ref[...], 0.0)

    # ---- fc2 + relu, fc3 + log-softmax ------------------------------------
    a2 = jnp.maximum(mm(a1, w2_ref[...]) + b2_ref[...], 0.0)
    logits = mm(a2, w3_ref[...]) + b3_ref[...]
    z = logits - jnp.max(logits, axis=-1, keepdims=True)
    out = z - jnp.log(jnp.sum(jnp.exp(z), axis=-1, keepdims=True))
    o_ref[...] = out.astype(o_ref.dtype)


# ---------------------------------------------------------------------------
# One-time host-side parameter preprocessing (numpy)
# ---------------------------------------------------------------------------

def prepare_params(params, b_tile):
    """Build lane-mixing / selection matrices so the kernel is pure 2-D matmuls."""
    B = b_tile
    c1w = np.asarray(params["conv1_w"], np.float32)   # (6, 1, 3, 3)
    c1b = np.asarray(params["conv1_b"], np.float32)
    c2w = np.asarray(params["conv2_w"], np.float32)   # (16, 6, 3, 3)
    c2b = np.asarray(params["conv2_b"], np.float32)
    f1w = np.asarray(params["fc1_w"], np.float32)     # (128, 1936)
    f1b = np.asarray(params["fc1_b"], np.float32)
    f2w = np.asarray(params["fc2_w"], np.float32)     # (64, 128)
    f2b = np.asarray(params["fc2_b"], np.float32)
    f3w = np.asarray(params["fc3_w"], np.float32)     # (3, 64)
    f3b = np.asarray(params["fc3_b"], np.float32)

    # conv1: out[b*48+oh, oc*48+ow] = sum_i sum_m x[b, oh+i, m] * m1[i][m, oc*48+ow]
    m1 = np.zeros((3, 50, 6 * 48), np.float32)
    for i in range(3):
        for oc in range(6):
            for ow in range(48):
                for j in range(3):
                    m1[i, ow + j, oc * 48 + ow] = c1w[oc, 0, i, j]
    b1w = np.repeat(c1b, 48)[None, :]                                 # (1, 288)

    # pool1: H via row-selection, W via column-selection
    p1r = np.zeros((2, B * 24, B * 48), np.float32)
    for b in range(B):
        for k in range(24):
            p1r[0, b * 24 + k, b * 48 + 2 * k] = 1.0
            p1r[1, b * 24 + k, b * 48 + 2 * k + 1] = 1.0
    p1c = np.zeros((2, 6 * 48, 6 * 24), np.float32)
    for c in range(6):
        for k in range(24):
            p1c[0, c * 48 + 2 * k, c * 24 + k] = 1.0
            p1c[1, c * 48 + 2 * k + 1, c * 24 + k] = 1.0

    # conv2: rows shifted by i via r2[i], channel/tap mixing via m2[i]
    r2 = np.zeros((3, B * 22, B * 24), np.float32)
    for i in range(3):
        for b in range(B):
            for oh in range(22):
                r2[i, b * 22 + oh, b * 24 + oh + i] = 1.0
    m2 = np.zeros((3, 6 * 24, 16 * 22), np.float32)
    for i in range(3):
        for oc in range(16):
            for c in range(6):
                for ow in range(22):
                    for j in range(3):
                        m2[i, c * 24 + ow + j, oc * 22 + ow] = c2w[oc, c, i, j]
    b2w = np.repeat(c2b, 22)[None, :]                                 # (1, 352)

    # pool2
    p2r = np.zeros((2, B * 11, B * 22), np.float32)
    for b in range(B):
        for k in range(11):
            p2r[0, b * 11 + k, b * 22 + 2 * k] = 1.0
            p2r[1, b * 11 + k, b * 22 + 2 * k + 1] = 1.0
    p2c = np.zeros((2, 16 * 22, 16 * 11), np.float32)
    for c in range(16):
        for k in range(11):
            p2c[0, c * 22 + 2 * k, c * 11 + k] = 1.0
            p2c[1, c * 22 + 2 * k + 1, c * 11 + k] = 1.0

    # fc1: gather pooled row oh of every sample; weights permuted so that
    # summing over oh reproduces torch's (c, h, w) flatten contraction exactly.
    s1 = np.zeros((11, B, B * 11), np.float32)
    for oh in range(11):
        for b in range(B):
            s1[oh, b, b * 11 + oh] = 1.0
    w1 = np.transpose(f1w.reshape(128, 16, 11, 11), (2, 1, 3, 0))     # (h, c, w, n)
    w1 = np.ascontiguousarray(w1.reshape(11, 16 * 11, 128), np.float32)

    prepped = [
        m1, b1w, p1r, p1c, r2, m2, b2w, p2r, p2c, s1, w1,
        f1b[None, :], np.ascontiguousarray(f2w.T), f2b[None, :],
        np.ascontiguousarray(f3w.T), f3b[None, :],
    ]
    return [jnp.asarray(a, jnp.float32) for a in prepped]


# ---------------------------------------------------------------------------
# Forward wrapper (single pallas_call, batch-parallel grid)
# ---------------------------------------------------------------------------

def _resident_spec(a):
    nd = a.ndim
    return pl.BlockSpec(a.shape, lambda i, _nd=nd: (0,) * _nd)


def forward(x, prepped, b_tile):
    """x: (N, 1, 50, 50) float32 -> (N, 3) log-probabilities."""
    N = x.shape[0]
    assert x.shape[1:] == (1, 50, 50), x.shape
    assert N % b_tile == 0, (N, b_tile)
    x3 = x.reshape(N, 50, 50).astype(jnp.float32)

    in_specs = [pl.BlockSpec((b_tile, 50, 50), lambda i: (i, 0, 0))]
    in_specs += [_resident_spec(a) for a in prepped]

    kernel = functools.partial(_fused_forward_kernel, b_tile=b_tile)
    return pl.pallas_call(
        kernel,
        out_shape=jax.ShapeDtypeStruct((N, 3), jnp.float32),
        grid=(N // b_tile,),
        in_specs=in_specs,
        out_specs=pl.BlockSpec((b_tile, 3), lambda i: (i, 0)),
        compiler_params=pltpu.CompilerParams(
            dimension_semantics=("parallel",),
        ),
    )(x3, *prepped)


# ---------------------------------------------------------------------------
# Parameters (PyTorch-convention shapes) and a float64 numpy reference
# ---------------------------------------------------------------------------

def init_params(key):
    ks = jax.random.split(key, 10)

    def nrm(k, shape, scale=0.1):
        return scale * jax.random.normal(k, shape, dtype=jnp.float32)

    return {
        "conv1_w": nrm(ks[0], (6, 1, 3, 3)),
        "conv1_b": nrm(ks[1], (6,)),
        "conv2_w": nrm(ks[2], (16, 6, 3, 3)),
        "conv2_b": nrm(ks[3], (16,)),
        "fc1_w": nrm(ks[4], (128, 16 * 11 * 11)),
        "fc1_b": nrm(ks[5], (128,)),
        "fc2_w": nrm(ks[6], (64, 128)),
        "fc2_b": nrm(ks[7], (64,)),
        "fc3_w": nrm(ks[8], (3, 64)),
        "fc3_b": nrm(ks[9], (3,)),
    }


def _reference_forward_np(params, x):
    xp = np.asarray(x, np.float64)[:, 0]
    c1w = np.asarray(params["conv1_w"], np.float64)
    c1b = np.asarray(params["conv1_b"], np.float64)
    c2w = np.asarray(params["conv2_w"], np.float64)
    c2b = np.asarray(params["conv2_b"], np.float64)
    f1w = np.asarray(params["fc1_w"], np.float64)
    f1b = np.asarray(params["fc1_b"], np.float64)
    f2w = np.asarray(params["fc2_w"], np.float64)
    f2b = np.asarray(params["fc2_b"], np.float64)
    f3w = np.asarray(params["fc3_w"], np.float64)
    f3b = np.asarray(params["fc3_b"], np.float64)

    N = xp.shape[0]
    y1 = np.zeros((N, 6, 48, 48))
    for i in range(3):
        for j in range(3):
            y1 += c1w[:, 0, i, j][None, :, None, None] * xp[:, None, i:i + 48, j:j + 48]
    y1 = np.maximum(y1 + c1b[None, :, None, None], 0.0)
    p1 = y1.reshape(N, 6, 24, 2, 24, 2).max(axis=(3, 5))

    y2 = np.zeros((N, 16, 22, 22))
    for i in range(3):
        for j in range(3):
            y2 += np.einsum("nchw,oc->nohw", p1[:, :, i:i + 22, j:j + 22], c2w[:, :, i, j])
    y2 = np.maximum(y2 + c2b[None, :, None, None], 0.0)
    p2 = y2.reshape(N, 16, 11, 2, 11, 2).max(axis=(3, 5))

    a1 = np.maximum(p2.reshape(N, -1) @ f1w.T + f1b, 0.0)
    a2 = np.maximum(a1 @ f2w.T + f2b, 0.0)
    logits = a2 @ f3w.T + f3b
    z = logits - logits.max(axis=-1, keepdims=True)
    return z - np.log(np.exp(z).sum(axis=-1, keepdims=True))


if __name__ == "__main__":
    key = jax.random.PRNGKey(0)
    pkey, xkey = jax.random.split(key)
    params = init_params(pkey)

    # Input shape implied by fc1 (16 * 11 * 11): (batch, 1, 50, 50)
    x = jax.random.normal(xkey, (2, 1, 50, 50), dtype=jnp.float32)
    N = x.shape[0]
    # Batch tile: 8 rows per grid step when possible (8-aligned output block),
    # otherwise process the whole (small) batch in one step.
    b_tile = 8 if N % 8 == 0 else N

    prepped = prepare_params(params, b_tile)
    out = forward(x, prepped, b_tile)
    out = jax.block_until_ready(out)

    assert out.shape == (N, 3), out.shape
    row_sums = jnp.sum(jnp.exp(out), axis=-1)
    assert jnp.allclose(row_sums, 1.0, atol=1e-5), row_sums

    ref = _reference_forward_np(params, x)
    err = np.max(np.abs(np.asarray(out) - ref))
    assert np.allclose(np.asarray(out), ref, atol=2e-2, rtol=2e-2), err

    print("KERNEL_OK")
</pallas_src>

<mosaic_0001>
module attributes {stable_mosaic.version = 11 : i64} {
  func.func @_fused_forward_kernel(%arg0: i32, %arg1: memref<2x50x50xf32, #tpu.memory_space<vmem>>, %arg2: memref<3x50x288xf32, #tpu.memory_space<vmem>>, %arg3: memref<1x288xf32, #tpu.memory_space<vmem>>, %arg4: memref<2x48x96xf32, #tpu.memory_space<vmem>>, %arg5: memref<2x288x144xf32, #tpu.memory_space<vmem>>, %arg6: memref<3x44x48xf32, #tpu.memory_space<vmem>>, %arg7: memref<3x144x352xf32, #tpu.memory_space<vmem>>, %arg8: memref<1x352xf32, #tpu.memory_space<vmem>>, %arg9: memref<2x22x44xf32, #tpu.memory_space<vmem>>, %arg10: memref<2x352x176xf32, #tpu.memory_space<vmem>>, %arg11: memref<11x2x22xf32, #tpu.memory_space<vmem>>, %arg12: memref<11x176x128xf32, #tpu.memory_space<vmem>>, %arg13: memref<1x128xf32, #tpu.memory_space<vmem>>, %arg14: memref<128x64xf32, #tpu.memory_space<vmem>>, %arg15: memref<1x64xf32, #tpu.memory_space<vmem>>, %arg16: memref<64x3xf32, #tpu.memory_space<vmem>>, %arg17: memref<1x3xf32, #tpu.memory_space<vmem>>, %arg18: memref<2x3xf32, #tpu.memory_space<vmem>>) attributes {dimension_semantics = [#tpu.dimension_semantics<parallel>], iteration_bounds = array<i64: 1>, scalar_prefetch = 0 : i64, scratch_operands = 0 : i64, tpu.core_type = #tpu.core_type<tc>, window_params = [{transform_indices = @transform_0, window_bounds = array<i64: 2, 50, 50>}, {pipeline_mode = #tpu.pipeline_mode<synchronous>, transform_indices = @transform_1, window_bounds = array<i64: 3, 50, 288>}, {pipeline_mode = #tpu.pipeline_mode<synchronous>, transform_indices = @transform_2, window_bounds = array<i64: 1, 288>}, {pipeline_mode = #tpu.pipeline_mode<synchronous>, transform_indices = @transform_3, window_bounds = array<i64: 2, 48, 96>}, {pipeline_mode = #tpu.pipeline_mode<synchronous>, transform_indices = @transform_4, window_bounds = array<i64: 2, 288, 144>}, {pipeline_mode = #tpu.pipeline_mode<synchronous>, transform_indices = @transform_5, window_bounds = array<i64: 3, 44, 48>}, {pipeline_mode = #tpu.pipeline_mode<synchronous>, transform_indices = @transform_6, window_bounds = array<i64: 3, 144, 352>}, {pipeline_mode = #tpu.pipeline_mode<synchronous>, transform_indices = @transform_7, window_bounds = array<i64: 1, 352>}, {pipeline_mode = #tpu.pipeline_mode<synchronous>, transform_indices = @transform_8, window_bounds = array<i64: 2, 22, 44>}, {pipeline_mode = #tpu.pipeline_mode<synchronous>, transform_indices = @transform_9, window_bounds = array<i64: 2, 352, 176>}, {pipeline_mode = #tpu.pipeline_mode<synchronous>, transform_indices = @transform_10, window_bounds = array<i64: 11, 2, 22>}, {pipeline_mode = #tpu.pipeline_mode<synchronous>, transform_indices = @transform_11, window_bounds = array<i64: 11, 176, 128>}, {pipeline_mode = #tpu.pipeline_mode<synchronous>, transform_indices = @transform_12, window_bounds = array<i64: 1, 128>}, {pipeline_mode = #tpu.pipeline_mode<synchronous>, transform_indices = @transform_13, window_bounds = array<i64: 128, 64>}, {pipeline_mode = #tpu.pipeline_mode<synchronous>, transform_indices = @transform_14, window_bounds = array<i64: 1, 64>}, {pipeline_mode = #tpu.pipeline_mode<synchronous>, transform_indices = @transform_15, window_bounds = array<i64: 64, 3>}, {pipeline_mode = #tpu.pipeline_mode<synchronous>, transform_indices = @transform_16, window_bounds = array<i64: 1, 3>}, {transform_indices = @transform_17, window_bounds = array<i64: 2, 3>}]} {
    %c0 = arith.constant 0 : index
    %c0_0 = arith.constant 0 : index
    %c0_1 = arith.constant 0 : index
    %0 = vector.load %arg1[%c0, %c0_0, %c0_1] : memref<2x50x50xf32, #tpu.memory_space<vmem>>, vector<2x48x50xf32>
    %1 = vector.shape_cast %0 : vector<2x48x50xf32> to vector<96x50xf32>
    %c0_2 = arith.constant 0 : index
    %c0_3 = arith.constant 0 : index
    %c0_4 = arith.constant 0 : index
    %2 = vector.load %arg2[%c0_2, %c0_3, %c0_4] : memref<3x50x288xf32, #tpu.memory_space<vmem>>, vector<1x50x288xf32>
    %3 = vector.shape_cast %2 : vector<1x50x288xf32> to vector<50x288xf32>
    %cst = arith.constant dense<0.000000e+00> : vector<96x288xf32>
    %4 = tpu.matmul %1, %3, %cst {dimension_numbers = #tpu.dot_dimension_numbers<[1], [0], [0], [1], [0, 0, 1, 1], [], []>} : vector<96x50xf32>, vector<50x288xf32>, vector<96x288xf32> -> vector<96x288xf32>
    %c0_5 = arith.constant 0 : index
    %c1 = arith.constant 1 : index
    %c0_6 = arith.constant 0 : index
    %5 = vector.load %arg1[%c0_5, %c1, %c0_6] : memref<2x50x50xf32, #tpu.memory_space<vmem>>, vector<2x48x50xf32>
    %6 = vector.shape_cast %5 : vector<2x48x50xf32> to vector<96x50xf32>
    %c1_7 = arith.constant 1 : index
    %c0_8 = arith.constant 0 : index
    %c0_9 = arith.constant 0 : index
    %7 = vector.load %arg2[%c1_7, %c0_8, %c0_9] : memref<3x50x288xf32, #tpu.memory_space<vmem>>, vector<1x50x288xf32>
    %8 = vector.shape_cast %7 : vector<1x50x288xf32> to vector<50x288xf32>
    %cst_10 = arith.constant dense<0.000000e+00> : vector<96x288xf32>
    %9 = tpu.matmul %6, %8, %cst_10 {dimension_numbers = #tpu.dot_dimension_numbers<[1], [0], [0], [1], [0, 0, 1, 1], [], []>} : vector<96x50xf32>, vector<50x288xf32>, vector<96x288xf32> -> vector<96x288xf32>
    %10 = arith.addf %4, %9 : vector<96x288xf32>
    %c0_11 = arith.constant 0 : index
    %c2 = arith.constant 2 : index
    %c0_12 = arith.constant 0 : index
    %11 = vector.load %arg1[%c0_11, %c2, %c0_12] : memref<2x50x50xf32, #tpu.memory_space<vmem>>, vector<2x48x50xf32>
    %12 = vector.shape_cast %11 : vector<2x48x50xf32> to vector<96x50xf32>
    %c2_13 = arith.constant 2 : index
    %c0_14 = arith.constant 0 : index
    %c0_15 = arith.constant 0 : index
    %13 = vector.load %arg2[%c2_13, %c0_14, %c0_15] : memref<3x50x288xf32, #tpu.memory_space<vmem>>, vector<1x50x288xf32>
    %14 = vector.shape_cast %13 : vector<1x50x288xf32> to vector<50x288xf32>
    %cst_16 = arith.constant dense<0.000000e+00> : vector<96x288xf32>
    %15 = tpu.matmul %12, %14, %cst_16 {dimension_numbers = #tpu.dot_dimension_numbers<[1], [0], [0], [1], [0, 0, 1, 1], [], []>} : vector<96x50xf32>, vector<50x288xf32>, vector<96x288xf32> -> vector<96x288xf32>
    %16 = arith.addf %10, %15 : vector<96x288xf32>
    %c0_17 = arith.constant 0 : index
    %c0_18 = arith.constant 0 : index
    %17 = vector.load %arg3[%c0_17, %c0_18] : memref<1x288xf32, #tpu.memory_space<vmem>>, vector<1x288xf32>
    %18 = vector.broadcast %17 : vector<1x288xf32> to vector<96x288xf32>
    %19 = arith.addf %16, %18 : vector<96x288xf32>
    %cst_19 = arith.constant 0.000000e+00 : f32
    %20 = vector.broadcast %cst_19 : f32 to vector<96x288xf32>
    %21 = arith.maximumf %19, %20 : vector<96x288xf32>
    %c0_20 = arith.constant 0 : index
    %c0_21 = arith.constant 0 : index
    %c0_22 = arith.constant 0 : index
    %22 = vector.load %arg4[%c0_20, %c0_21, %c0_22] : memref<2x48x96xf32, #tpu.memory_space<vmem>>, vector<1x48x96xf32>
    %23 = vector.shape_cast %22 : vector<1x48x96xf32> to vector<48x96xf32>
    %cst_23 = arith.constant dense<0.000000e+00> : vector<48x288xf32>
    %24 = tpu.matmul %23, %21, %cst_23 {dimension_numbers = #tpu.dot_dimension_numbers<[1], [0], [0], [1], [0, 0, 1, 1], [], []>} : vector<48x96xf32>, vector<96x288xf32>, vector<48x288xf32> -> vector<48x288xf32>
    %c1_24 = arith.constant 1 : index
    %c0_25 = arith.constant 0 : index
    %c0_26 = arith.constant 0 : index
    %25 = vector.load %arg4[%c1_24, %c0_25, %c0_26] : memref<2x48x96xf32, #tpu.memory_space<vmem>>, vector<1x48x96xf32>
    %26 = vector.shape_cast %25 : vector<1x48x96xf32> to vector<48x96xf32>
    %cst_27 = arith.constant dense<0.000000e+00> : vector<48x288xf32>
    %27 = tpu.matmul %26, %21, %cst_27 {dimension_numbers = #tpu.dot_dimension_numbers<[1], [0], [0], [1], [0, 0, 1, 1], [], []>} : vector<48x96xf32>, vector<96x288xf32>, vector<48x288xf32> -> vector<48x288xf32>
    %28 = arith.maximumf %24, %27 : vector<48x288xf32>
    %c0_28 = arith.constant 0 : index
    %c0_29 = arith.constant 0 : index
    %c0_30 = arith.constant 0 : index
    %29 = vector.load %arg5[%c0_28, %c0_29, %c0_30] : memref<2x288x144xf32, #tpu.memory_space<vmem>>, vector<1x288x144xf32>
    %30 = vector.shape_cast %29 : vector<1x288x144xf32> to vector<288x144xf32>
    %cst_31 = arith.constant dense<0.000000e+00> : vector<48x144xf32>
    %31 = tpu.matmul %28, %30, %cst_31 {dimension_numbers = #tpu.dot_dimension_numbers<[1], [0], [0], [1], [0, 0, 1, 1], [], []>} : vector<48x288xf32>, vector<288x144xf32>, vector<48x144xf32> -> vector<48x144xf32>
    %c1_32 = arith.constant 1 : index
    %c0_33 = arith.constant 0 : index
    %c0_34 = arith.constant 0 : index
    %32 = vector.load %arg5[%c1_32, %c0_33, %c0_34] : memref<2x288x144xf32, #tpu.memory_space<vmem>>, vector<1x288x144xf32>
    %33 = vector.shape_cast %32 : vector<1x288x144xf32> to vector<288x144xf32>
    %cst_35 = arith.constant dense<0.000000e+00> : vector<48x144xf32>
    %34 = tpu.matmul %28, %33, %cst_35 {dimension_numbers = #tpu.dot_dimension_numbers<[1], [0], [0], [1], [0, 0, 1, 1], [], []>} : vector<48x288xf32>, vector<288x144xf32>, vector<48x144xf32> -> vector<48x144xf32>
    %35 = arith.maximumf %31, %34 : vector<48x144xf32>
    %c0_36 = arith.constant 0 : index
    %c0_37 = arith.constant 0 : index
    %c0_38 = arith.constant 0 : index
    %36 = vector.load %arg6[%c0_36, %c0_37, %c0_38] : memref<3x44x48xf32, #tpu.memory_space<vmem>>, vector<1x44x48xf32>
    %37 = vector.shape_cast %36 : vector<1x44x48xf32> to vector<44x48xf32>
    %cst_39 = arith.constant dense<0.000000e+00> : vector<44x144xf32>
    %38 = tpu.matmul %37, %35, %cst_39 {dimension_numbers = #tpu.dot_dimension_numbers<[1], [0], [0], [1], [0, 0, 1, 1], [], []>} : vector<44x48xf32>, vector<48x144xf32>, vector<44x144xf32> -> vector<44x144xf32>
    %c0_40 = arith.constant 0 : index
    %c0_41 = arith.constant 0 : index
    %c0_42 = arith.constant 0 : index
    %39 = vector.load %arg7[%c0_40, %c0_41, %c0_42] : memref<3x144x352xf32, #tpu.memory_space<vmem>>, vector<1x144x352xf32>
    %40 = vector.shape_cast %39 : vector<1x144x352xf32> to vector<144x352xf32>
    %cst_43 = arith.constant dense<0.000000e+00> : vector<44x352xf32>
    %41 = tpu.matmul %38, %40, %cst_43 {dimension_numbers = #tpu.dot_dimension_numbers<[1], [0], [0], [1], [0, 0, 1, 1], [], []>} : vector<44x144xf32>, vector<144x352xf32>, vector<44x352xf32> -> vector<44x352xf32>
    %c1_44 = arith.constant 1 : index
    %c0_45 = arith.constant 0 : index
    %c0_46 = arith.constant 0 : index
    %42 = vector.load %arg6[%c1_44, %c0_45, %c0_46] : memref<3x44x48xf32, #tpu.memory_space<vmem>>, vector<1x44x48xf32>
    %43 = vector.shape_cast %42 : vector<1x44x48xf32> to vector<44x48xf32>
    %cst_47 = arith.constant dense<0.000000e+00> : vector<44x144xf32>
    %44 = tpu.matmul %43, %35, %cst_47 {dimension_numbers = #tpu.dot_dimension_numbers<[1], [0], [0], [1], [0, 0, 1, 1], [], []>} : vector<44x48xf32>, vector<48x144xf32>, vector<44x144xf32> -> vector<44x144xf32>
    %c1_48 = arith.constant 1 : index
    %c0_49 = arith.constant 0 : index
    %c0_50 = arith.constant 0 : index
    %45 = vector.load %arg7[%c1_48, %c0_49, %c0_50] : memref<3x144x352xf32, #tpu.memory_space<vmem>>, vector<1x144x352xf32>
    %46 = vector.shape_cast %45 : vector<1x144x352xf32> to vector<144x352xf32>
    %cst_51 = arith.constant dense<0.000000e+00> : vector<44x352xf32>
    %47 = tpu.matmul %44, %46, %cst_51 {dimension_numbers = #tpu.dot_dimension_numbers<[1], [0], [0], [1], [0, 0, 1, 1], [], []>} : vector<44x144xf32>, vector<144x352xf32>, vector<44x352xf32> -> vector<44x352xf32>
    %48 = arith.addf %41, %47 : vector<44x352xf32>
    %c2_52 = arith.constant 2 : index
    %c0_53 = arith.constant 0 : index
    %c0_54 = arith.constant 0 : index
    %49 = vector.load %arg6[%c2_52, %c0_53, %c0_54] : memref<3x44x48xf32, #tpu.memory_space<vmem>>, vector<1x44x48xf32>
    %50 = vector.shape_cast %49 : vector<1x44x48xf32> to vector<44x48xf32>
    %cst_55 = arith.constant dense<0.000000e+00> : vector<44x144xf32>
    %51 = tpu.matmul %50, %35, %cst_55 {dimension_numbers = #tpu.dot_dimension_numbers<[1], [0], [0], [1], [0, 0, 1, 1], [], []>} : vector<44x48xf32>, vector<48x144xf32>, vector<44x144xf32> -> vector<44x144xf32>
    %c2_56 = arith.constant 2 : index
    %c0_57 = arith.constant 0 : index
    %c0_58 = arith.constant 0 : index
    %52 = vector.load %arg7[%c2_56, %c0_57, %c0_58] : memref<3x144x352xf32, #tpu.memory_space<vmem>>, vector<1x144x352xf32>
    %53 = vector.shape_cast %52 : vector<1x144x352xf32> to vector<144x352xf32>
    %cst_59 = arith.constant dense<0.000000e+00> : vector<44x352xf32>
    %54 = tpu.matmul %51, %53, %cst_59 {dimension_numbers = #tpu.dot_dimension_numbers<[1], [0], [0], [1], [0, 0, 1, 1], [], []>} : vector<44x144xf32>, vector<144x352xf32>, vector<44x352xf32> -> vector<44x352xf32>
    %55 = arith.addf %48, %54 : vector<44x352xf32>
    %c0_60 = arith.constant 0 : index
    %c0_61 = arith.constant 0 : index
    %56 = vector.load %arg8[%c0_60, %c0_61] : memref<1x352xf32, #tpu.memory_space<vmem>>, vector<1x352xf32>
    %57 = vector.broadcast %56 : vector<1x352xf32> to vector<44x352xf32>
    %58 = arith.addf %55, %57 : vector<44x352xf32>
    %cst_62 = arith.constant 0.000000e+00 : f32
    %59 = vector.broadcast %cst_62 : f32 to vector<44x352xf32>
    %60 = arith.maximumf %58, %59 : vector<44x352xf32>
    %c0_63 = arith.constant 0 : index
    %c0_64 = arith.constant 0 : index
    %c0_65 = arith.constant 0 : index
    %61 = vector.load %arg9[%c0_63, %c0_64, %c0_65] : memref<2x22x44xf32, #tpu.memory_space<vmem>>, vector<1x22x44xf32>
    %62 = vector.shape_cast %61 : vector<1x22x44xf32> to vector<22x44xf32>
    %cst_66 = arith.constant dense<0.000000e+00> : vector<22x352xf32>
    %63 = tpu.matmul %62, %60, %cst_66 {dimension_numbers = #tpu.dot_dimension_numbers<[1], [0], [0], [1], [0, 0, 1, 1], [], []>} : vector<22x44xf32>, vector<44x352xf32>, vector<22x352xf32> -> vector<22x352xf32>
    %c1_67 = arith.constant 1 : index
    %c0_68 = arith.constant 0 : index
    %c0_69 = arith.constant 0 : index
    %64 = vector.load %arg9[%c1_67, %c0_68, %c0_69] : memref<2x22x44xf32, #tpu.memory_space<vmem>>, vector<1x22x44xf32>
    %65 = vector.shape_cast %64 : vector<1x22x44xf32> to vector<22x44xf32>
    %cst_70 = arith.constant dense<0.000000e+00> : vector<22x352xf32>
    %66 = tpu.matmul %65, %60, %cst_70 {dimension_numbers = #tpu.dot_dimension_numbers<[1], [0], [0], [1], [0, 0, 1, 1], [], []>} : vector<22x44xf32>, vector<44x352xf32>, vector<22x352xf32> -> vector<22x352xf32>
    %67 = arith.maximumf %63, %66 : vector<22x352xf32>
    %c0_71 = arith.constant 0 : index
    %c0_72 = arith.constant 0 : index
    %c0_73 = arith.constant 0 : index
    %68 = vector.load %arg10[%c0_71, %c0_72, %c0_73] : memref<2x352x176xf32, #tpu.memory_space<vmem>>, vector<1x352x176xf32>
    %69 = vector.shape_cast %68 : vector<1x352x176xf32> to vector<352x176xf32>
    %cst_74 = arith.constant dense<0.000000e+00> : vector<22x176xf32>
    %70 = tpu.matmul %67, %69, %cst_74 {dimension_numbers = #tpu.dot_dimension_numbers<[1], [0], [0], [1], [0, 0, 1, 1], [], []>} : vector<22x352xf32>, vector<352x176xf32>, vector<22x176xf32> -> vector<22x176xf32>
    %c1_75 = arith.constant 1 : index
    %c0_76 = arith.constant 0 : index
    %c0_77 = arith.constant 0 : index
    %71 = vector.load %arg10[%c1_75, %c0_76, %c0_77] : memref<2x352x176xf32, #tpu.memory_space<vmem>>, vector<1x352x176xf32>
    %72 = vector.shape_cast %71 : vector<1x352x176xf32> to vector<352x176xf32>
    %cst_78 = arith.constant dense<0.000000e+00> : vector<22x176xf32>
    %73 = tpu.matmul %67, %72, %cst_78 {dimension_numbers = #tpu.dot_dimension_numbers<[1], [0], [0], [1], [0, 0, 1, 1], [], []>} : vector<22x352xf32>, vector<352x176xf32>, vector<22x176xf32> -> vector<22x176xf32>
    %74 = arith.maximumf %70, %73 : vector<22x176xf32>
    %c0_79 = arith.constant 0 : index
    %c0_80 = arith.constant 0 : index
    %c0_81 = arith.constant 0 : index
    %75 = vector.load %arg11[%c0_79, %c0_80, %c0_81] : memref<11x2x22xf32, #tpu.memory_space<vmem>>, vector<1x2x22xf32>
    %76 = vector.shape_cast %75 : vector<1x2x22xf32> to vector<2x22xf32>
    %cst_82 = arith.constant dense<0.000000e+00> : vector<2x176xf32>
    %77 = tpu.matmul %76, %74, %cst_82 {dimension_numbers = #tpu.dot_dimension_numbers<[1], [0], [0], [1], [0, 0, 1, 1], [], []>} : vector<2x22xf32>, vector<22x176xf32>, vector<2x176xf32> -> vector<2x176xf32>
    %c0_83 = arith.constant 0 : index
    %c0_84 = arith.constant 0 : index
    %c0_85 = arith.constant 0 : index
    %78 = vector.load %arg12[%c0_83, %c0_84, %c0_85] : memref<11x176x128xf32, #tpu.memory_space<vmem>>, vector<1x176x128xf32>
    %79 = vector.shape_cast %78 : vector<1x176x128xf32> to vector<176x128xf32>
    %cst_86 = arith.constant dense<0.000000e+00> : vector<2x128xf32>
    %80 = tpu.matmul %77, %79, %cst_86 {dimension_numbers = #tpu.dot_dimension_numbers<[1], [0], [0], [1], [0, 0, 1, 1], [], []>} : vector<2x176xf32>, vector<176x128xf32>, vector<2x128xf32> -> vector<2x128xf32>
    %c1_87 = arith.constant 1 : index
    %c0_88 = arith.constant 0 : index
    %c0_89 = arith.constant 0 : index
    %81 = vector.load %arg11[%c1_87, %c0_88, %c0_89] : memref<11x2x22xf32, #tpu.memory_space<vmem>>, vector<1x2x22xf32>
    %82 = vector.shape_cast %81 : vector<1x2x22xf32> to vector<2x22xf32>
    %cst_90 = arith.constant dense<0.000000e+00> : vector<2x176xf32>
    %83 = tpu.matmul %82, %74, %cst_90 {dimension_numbers = #tpu.dot_dimension_numbers<[1], [0], [0], [1], [0, 0, 1, 1], [], []>} : vector<2x22xf32>, vector<22x176xf32>, vector<2x176xf32> -> vector<2x176xf32>
    %c1_91 = arith.constant 1 : index
    %c0_92 = arith.constant 0 : index
    %c0_93 = arith.constant 0 : index
    %84 = vector.load %arg12[%c1_91, %c0_92, %c0_93] : memref<11x176x128xf32, #tpu.memory_space<vmem>>, vector<1x176x128xf32>
    %85 = vector.shape_cast %84 : vector<1x176x128xf32> to vector<176x128xf32>
    %cst_94 = arith.constant dense<0.000000e+00> : vector<2x128xf32>
    %86 = tpu.matmul %83, %85, %cst_94 {dimension_numbers = #tpu.dot_dimension_numbers<[1], [0], [0], [1], [0, 0, 1, 1], [], []>} : vector<2x176xf32>, vector<176x128xf32>, vector<2x128xf32> -> vector<2x128xf32>
    %87 = arith.addf %80, %86 : vector<2x128xf32>
    %c2_95 = arith.constant 2 : index
    %c0_96 = arith.constant 0 : index
    %c0_97 = arith.constant 0 : index
    %88 = vector.load %arg11[%c2_95, %c0_96, %c0_97] : memref<11x2x22xf32, #tpu.memory_space<vmem>>, vector<1x2x22xf32>
    %89 = vector.shape_cast %88 : vector<1x2x22xf32> to vector<2x22xf32>
    %cst_98 = arith.constant dense<0.000000e+00> : vector<2x176xf32>
    %90 = tpu.matmul %89, %74, %cst_98 {dimension_numbers = #tpu.dot_dimension_numbers<[1], [0], [0], [1], [0, 0, 1, 1], [], []>} : vector<2x22xf32>, vector<22x176xf32>, vector<2x176xf32> -> vector<2x176xf32>
    %c2_99 = arith.constant 2 : index
    %c0_100 = arith.constant 0 : index
    %c0_101 = arith.constant 0 : index
    %91 = vector.load %arg12[%c2_99, %c0_100, %c0_101] : memref<11x176x128xf32, #tpu.memory_space<vmem>>, vector<1x176x128xf32>
    %92 = vector.shape_cast %91 : vector<1x176x128xf32> to vector<176x128xf32>
    %cst_102 = arith.constant dense<0.000000e+00> : vector<2x128xf32>
    %93 = tpu.matmul %90, %92, %cst_102 {dimension_numbers = #tpu.dot_dimension_numbers<[1], [0], [0], [1], [0, 0, 1, 1], [], []>} : vector<2x176xf32>, vector<176x128xf32>, vector<2x128xf32> -> vector<2x128xf32>
    %94 = arith.addf %87, %93 : vector<2x128xf32>
    %c3 = arith.constant 3 : index
    %c0_103 = arith.constant 0 : index
    %c0_104 = arith.constant 0 : index
    %95 = vector.load %arg11[%c3, %c0_103, %c0_104] : memref<11x2x22xf32, #tpu.memory_space<vmem>>, vector<1x2x22xf32>
    %96 = vector.shape_cast %95 : vector<1x2x22xf32> to vector<2x22xf32>
    %cst_105 = arith.constant dense<0.000000e+00> : vector<2x176xf32>
    %97 = tpu.matmul %96, %74, %cst_105 {dimension_numbers = #tpu.dot_dimension_numbers<[1], [0], [0], [1], [0, 0, 1, 1], [], []>} : vector<2x22xf32>, vector<22x176xf32>, vector<2x176xf32> -> vector<2x176xf32>
    %c3_106 = arith.constant 3 : index
    %c0_107 = arith.constant 0 : index
    %c0_108 = arith.constant 0 : index
    %98 = vector.load %arg12[%c3_106, %c0_107, %c0_108] : memref<11x176x128xf32, #tpu.memory_space<vmem>>, vector<1x176x128xf32>
    %99 = vector.shape_cast %98 : vector<1x176x128xf32> to vector<176x128xf32>
    %cst_109 = arith.constant dense<0.000000e+00> : vector<2x128xf32>
    %100 = tpu.matmul %97, %99, %cst_109 {dimension_numbers = #tpu.dot_dimension_numbers<[1], [0], [0], [1], [0, 0, 1, 1], [], []>} : vector<2x176xf32>, vector<176x128xf32>, vector<2x128xf32> -> vector<2x128xf32>
    %101 = arith.addf %94, %100 : vector<2x128xf32>
    %c4 = arith.constant 4 : index
    %c0_110 = arith.constant 0 : index
    %c0_111 = arith.constant 0 : index
    %102 = vector.load %arg11[%c4, %c0_110, %c0_111] : memref<11x2x22xf32, #tpu.memory_space<vmem>>, vector<1x2x22xf32>
    %103 = vector.shape_cast %102 : vector<1x2x22xf32> to vector<2x22xf32>
    %cst_112 = arith.constant dense<0.000000e+00> : vector<2x176xf32>
    %104 = tpu.matmul %103, %74, %cst_112 {dimension_numbers = #tpu.dot_dimension_numbers<[1], [0], [0], [1], [0, 0, 1, 1], [], []>} : vector<2x22xf32>, vector<22x176xf32>, vector<2x176xf32> -> vector<2x176xf32>
    %c4_113 = arith.constant 4 : index
    %c0_114 = arith.constant 0 : index
    %c0_115 = arith.constant 0 : index
    %105 = vector.load %arg12[%c4_113, %c0_114, %c0_115] : memref<11x176x128xf32, #tpu.memory_space<vmem>>, vector<1x176x128xf32>
    %106 = vector.shape_cast %105 : vector<1x176x128xf32> to vector<176x128xf32>
    %cst_116 = arith.constant dense<0.000000e+00> : vector<2x128xf32>
    %107 = tpu.matmul %104, %106, %cst_116 {dimension_numbers = #tpu.dot_dimension_numbers<[1], [0], [0], [1], [0, 0, 1, 1], [], []>} : vector<2x176xf32>, vector<176x128xf32>, vector<2x128xf32> -> vector<2x128xf32>
    %108 = arith.addf %101, %107 : vector<2x128xf32>
    %c5 = arith.constant 5 : index
    %c0_117 = arith.constant 0 : index
    %c0_118 = arith.constant 0 : index
    %109 = vector.load %arg11[%c5, %c0_117, %c0_118] : memref<11x2x22xf32, #tpu.memory_space<vmem>>, vector<1x2x22xf32>
    %110 = vector.shape_cast %109 : vector<1x2x22xf32> to vector<2x22xf32>
    %cst_119 = arith.constant dense<0.000000e+00> : vector<2x176xf32>
    %111 = tpu.matmul %110, %74, %cst_119 {dimension_numbers = #tpu.dot_dimension_numbers<[1], [0], [0], [1], [0, 0, 1, 1], [], []>} : vector<2x22xf32>, vector<22x176xf32>, vector<2x176xf32> -> vector<2x176xf32>
    %c5_120 = arith.constant 5 : index
    %c0_121 = arith.constant 0 : index
    %c0_122 = arith.constant 0 : index
    %112 = vector.load %arg12[%c5_120, %c0_121, %c0_122] : memref<11x176x128xf32, #tpu.memory_space<vmem>>, vector<1x176x128xf32>
    %113 = vector.shape_cast %112 : vector<1x176x128xf32> to vector<176x128xf32>
    %cst_123 = arith.constant dense<0.000000e+00> : vector<2x128xf32>
    %114 = tpu.matmul %111, %113, %cst_123 {dimension_numbers = #tpu.dot_dimension_numbers<[1], [0], [0], [1], [0, 0, 1, 1], [], []>} : vector<2x176xf32>, vector<176x128xf32>, vector<2x128xf32> -> vector<2x128xf32>
    %115 = arith.addf %108, %114 : vector<2x128xf32>
    %c6 = arith.constant 6 : index
    %c0_124 = arith.constant 0 : index
    %c0_125 = arith.constant 0 : index
    %116 = vector.load %arg11[%c6, %c0_124, %c0_125] : memref<11x2x22xf32, #tpu.memory_space<vmem>>, vector<1x2x22xf32>
    %117 = vector.shape_cast %116 : vector<1x2x22xf32> to vector<2x22xf32>
    %cst_126 = arith.constant dense<0.000000e+00> : vector<2x176xf32>
    %118 = tpu.matmul %117, %74, %cst_126 {dimension_numbers = #tpu.dot_dimension_numbers<[1], [0], [0], [1], [0, 0, 1, 1], [], []>} : vector<2x22xf32>, vector<22x176xf32>, vector<2x176xf32> -> vector<2x176xf32>
    %c6_127 = arith.constant 6 : index
    %c0_128 = arith.constant 0 : index
    %c0_129 = arith.constant 0 : index
    %119 = vector.load %arg12[%c6_127, %c0_128, %c0_129] : memref<11x176x128xf32, #tpu.memory_space<vmem>>, vector<1x176x128xf32>
    %120 = vector.shape_cast %119 : vector<1x176x128xf32> to vector<176x128xf32>
    %cst_130 = arith.constant dense<0.000000e+00> : vector<2x128xf32>
    %121 = tpu.matmul %118, %120, %cst_130 {dimension_numbers = #tpu.dot_dimension_numbers<[1], [0], [0], [1], [0, 0, 1, 1], [], []>} : vector<2x176xf32>, vector<176x128xf32>, vector<2x128xf32> -> vector<2x128xf32>
    %122 = arith.addf %115, %121 : vector<2x128xf32>
    %c7 = arith.constant 7 : index
    %c0_131 = arith.constant 0 : index
    %c0_132 = arith.constant 0 : index
    %123 = vector.load %arg11[%c7, %c0_131, %c0_132] : memref<11x2x22xf32, #tpu.memory_space<vmem>>, vector<1x2x22xf32>
    %124 = vector.shape_cast %123 : vector<1x2x22xf32> to vector<2x22xf32>
    %cst_133 = arith.constant dense<0.000000e+00> : vector<2x176xf32>
    %125 = tpu.matmul %124, %74, %cst_133 {dimension_numbers = #tpu.dot_dimension_numbers<[1], [0], [0], [1], [0, 0, 1, 1], [], []>} : vector<2x22xf32>, vector<22x176xf32>, vector<2x176xf32> -> vector<2x176xf32>
    %c7_134 = arith.constant 7 : index
    %c0_135 = arith.constant 0 : index
    %c0_136 = arith.constant 0 : index
    %126 = vector.load %arg12[%c7_134, %c0_135, %c0_136] : memref<11x176x128xf32, #tpu.memory_space<vmem>>, vector<1x176x128xf32>
    %127 = vector.shape_cast %126 : vector<1x176x128xf32> to vector<176x128xf32>
    %cst_137 = arith.constant dense<0.000000e+00> : vector<2x128xf32>
    %128 = tpu.matmul %125, %127, %cst_137 {dimension_numbers = #tpu.dot_dimension_numbers<[1], [0], [0], [1], [0, 0, 1, 1], [], []>} : vector<2x176xf32>, vector<176x128xf32>, vector<2x128xf32> -> vector<2x128xf32>
    %129 = arith.addf %122, %128 : vector<2x128xf32>
    %c8 = arith.constant 8 : index
    %c0_138 = arith.constant 0 : index
    %c0_139 = arith.constant 0 : index
    %130 = vector.load %arg11[%c8, %c0_138, %c0_139] : memref<11x2x22xf32, #tpu.memory_space<vmem>>, vector<1x2x22xf32>
    %131 = vector.shape_cast %130 : vector<1x2x22xf32> to vector<2x22xf32>
    %cst_140 = arith.constant dense<0.000000e+00> : vector<2x176xf32>
    %132 = tpu.matmul %131, %74, %cst_140 {dimension_numbers = #tpu.dot_dimension_numbers<[1], [0], [0], [1], [0, 0, 1, 1], [], []>} : vector<2x22xf32>, vector<22x176xf32>, vector<2x176xf32> -> vector<2x176xf32>
    %c8_141 = arith.constant 8 : index
    %c0_142 = arith.constant 0 : index
    %c0_143 = arith.constant 0 : index
    %133 = vector.load %arg12[%c8_141, %c0_142, %c0_143] : memref<11x176x128xf32, #tpu.memory_space<vmem>>, vector<1x176x128xf32>
    %134 = vector.shape_cast %133 : vector<1x176x128xf32> to vector<176x128xf32>
    %cst_144 = arith.constant dense<0.000000e+00> : vector<2x128xf32>
    %135 = tpu.matmul %132, %134, %cst_144 {dimension_numbers = #tpu.dot_dimension_numbers<[1], [0], [0], [1], [0, 0, 1, 1], [], []>} : vector<2x176xf32>, vector<176x128xf32>, vector<2x128xf32> -> vector<2x128xf32>
    %136 = arith.addf %129, %135 : vector<2x128xf32>
    %c9 = arith.constant 9 : index
    %c0_145 = arith.constant 0 : index
    %c0_146 = arith.constant 0 : index
    %137 = vector.load %arg11[%c9, %c0_145, %c0_146] : memref<11x2x22xf32, #tpu.memory_space<vmem>>, vector<1x2x22xf32>
    %138 = vector.shape_cast %137 : vector<1x2x22xf32> to vector<2x22xf32>
    %cst_147 = arith.constant dense<0.000000e+00> : vector<2x176xf32>
    %139 = tpu.matmul %138, %74, %cst_147 {dimension_numbers = #tpu.dot_dimension_numbers<[1], [0], [0], [1], [0, 0, 1, 1], [], []>} : vector<2x22xf32>, vector<22x176xf32>, vector<2x176xf32> -> vector<2x176xf32>
    %c9_148 = arith.constant 9 : index
    %c0_149 = arith.constant 0 : index
    %c0_150 = arith.constant 0 : index
    %140 = vector.load %arg12[%c9_148, %c0_149, %c0_150] : memref<11x176x128xf32, #tpu.memory_space<vmem>>, vector<1x176x128xf32>
    %141 = vector.shape_cast %140 : vector<1x176x128xf32> to vector<176x128xf32>
    %cst_151 = arith.constant dense<0.000000e+00> : vector<2x128xf32>
    %142 = tpu.matmul %139, %141, %cst_151 {dimension_numbers = #tpu.dot_dimension_numbers<[1], [0], [0], [1], [0, 0, 1, 1], [], []>} : vector<2x176xf32>, vector<176x128xf32>, vector<2x128xf32> -> vector<2x128xf32>
    %143 = arith.addf %136, %142 : vector<2x128xf32>
    %c10 = arith.constant 10 : index
    %c0_152 = arith.constant 0 : index
    %c0_153 = arith.constant 0 : index
    %144 = vector.load %arg11[%c10, %c0_152, %c0_153] : memref<11x2x22xf32, #tpu.memory_space<vmem>>, vector<1x2x22xf32>
    %145 = vector.shape_cast %144 : vector<1x2x22xf32> to vector<2x22xf32>
    %cst_154 = arith.constant dense<0.000000e+00> : vector<2x176xf32>
    %146 = tpu.matmul %145, %74, %cst_154 {dimension_numbers = #tpu.dot_dimension_numbers<[1], [0], [0], [1], [0, 0, 1, 1], [], []>} : vector<2x22xf32>, vector<22x176xf32>, vector<2x176xf32> -> vector<2x176xf32>
    %c10_155 = arith.constant 10 : index
    %c0_156 = arith.constant 0 : index
    %c0_157 = arith.constant 0 : index
    %147 = vector.load %arg12[%c10_155, %c0_156, %c0_157] : memref<11x176x128xf32, #tpu.memory_space<vmem>>, vector<1x176x128xf32>
    %148 = vector.shape_cast %147 : vector<1x176x128xf32> to vector<176x128xf32>
    %cst_158 = arith.constant dense<0.000000e+00> : vector<2x128xf32>
    %149 = tpu.matmul %146, %148, %cst_158 {dimension_numbers = #tpu.dot_dimension_numbers<[1], [0], [0], [1], [0, 0, 1, 1], [], []>} : vector<2x176xf32>, vector<176x128xf32>, vector<2x128xf32> -> vector<2x128xf32>
    %150 = arith.addf %143, %149 : vector<2x128xf32>
    %c0_159 = arith.constant 0 : index
    %c0_160 = arith.constant 0 : index
    %151 = vector.load %arg13[%c0_159, %c0_160] : memref<1x128xf32, #tpu.memory_space<vmem>>, vector<1x128xf32>
    %152 = vector.broadcast %151 : vector<1x128xf32> to vector<2x128xf32>
    %153 = arith.addf %150, %152 : vector<2x128xf32>
    %cst_161 = arith.constant 0.000000e+00 : f32
    %154 = vector.broadcast %cst_161 : f32 to vector<2x128xf32>
    %155 = arith.maximumf %153, %154 : vector<2x128xf32>
    %c0_162 = arith.constant 0 : index
    %c0_163 = arith.constant 0 : index
    %156 = vector.load %arg14[%c0_162, %c0_163] : memref<128x64xf32, #tpu.memory_space<vmem>>, vector<128x64xf32>
    %cst_164 = arith.constant dense<0.000000e+00> : vector<2x64xf32>
    %157 = tpu.matmul %155, %156, %cst_164 {dimension_numbers = #tpu.dot_dimension_numbers<[1], [0], [0], [1], [0, 0, 1, 1], [], []>} : vector<2x128xf32>, vector<128x64xf32>, vector<2x64xf32> -> vector<2x64xf32>
    %c0_165 = arith.constant 0 : index
    %c0_166 = arith.constant 0 : index
    %158 = vector.load %arg15[%c0_165, %c0_166] : memref<1x64xf32, #tpu.memory_space<vmem>>, vector<1x64xf32>
    %159 = vector.broadcast %158 : vector<1x64xf32> to vector<2x64xf32>
    %160 = arith.addf %157, %159 : vector<2x64xf32>
    %cst_167 = arith.constant 0.000000e+00 : f32
    %161 = vector.broadcast %cst_167 : f32 to vector<2x64xf32>
    %162 = arith.maximumf %160, %161 : vector<2x64xf32>
    %c0_168 = arith.constant 0 : index
    %c0_169 = arith.constant 0 : index
    %163 = vector.load %arg16[%c0_168, %c0_169] : memref<64x3xf32, #tpu.memory_space<vmem>>, vector<64x3xf32>
    %cst_170 = arith.constant dense<0.000000e+00> : vector<2x3xf32>
    %164 = tpu.matmul %162, %163, %cst_170 {dimension_numbers = #tpu.dot_dimension_numbers<[1], [0], [0], [1], [0, 0, 1, 1], [], []>} : vector<2x64xf32>, vector<64x3xf32>, vector<2x3xf32> -> vector<2x3xf32>
    %c0_171 = arith.constant 0 : index
    %c0_172 = arith.constant 0 : index
    %165 = vector.load %arg17[%c0_171, %c0_172] : memref<1x3xf32, #tpu.memory_space<vmem>>, vector<1x3xf32>
    %166 = vector.broadcast %165 : vector<1x3xf32> to vector<2x3xf32>
    %167 = arith.addf %164, %166 : vector<2x3xf32>
    %cst_173 = arith.constant dense<0xFF800000> : vector<2xf32>
    %168 = vector.multi_reduction <maximumf>, %167, %cst_173 [1] : vector<2x3xf32> to vector<2xf32>
    %169 = vector.shape_cast %168 : vector<2xf32> to vector<2x1xf32>
    %170 = vector.broadcast %169 : vector<2x1xf32> to vector<2x3xf32>
    %171 = arith.subf %167, %170 : vector<2x3xf32>
    %172 = math.exp %171 : vector<2x3xf32>
    %cst_174 = arith.constant dense<0.000000e+00> : vector<2xf32>
    %173 = vector.multi_reduction <add>, %172, %cst_174 [1] : vector<2x3xf32> to vector<2xf32>
    %174 = vector.shape_cast %173 : vector<2xf32> to vector<2x1xf32>
    %175 = math.log %174 : vector<2x1xf32>
    %176 = vector.broadcast %175 : vector<2x1xf32> to vector<2x3xf32>
    %177 = arith.subf %171, %176 : vector<2x3xf32>
    %c0_175 = arith.constant 0 : index
    %c0_176 = arith.constant 0 : index
    %178 = vector.load %arg18[%c0_175, %c0_176] : memref<2x3xf32, #tpu.memory_space<vmem>>, vector<2x3xf32>
    tpu.vector_store %arg18[%c0_175, %c0_176], %177 {strides = array<i32>} : memref<2x3xf32, #tpu.memory_space<vmem>>, vector<2x3xf32>,
    return
  }
  func.func @transform_0(%arg0: i32) -> (i32, i32, i32) {
    %c0_i32 = arith.constant 0 : i32
    %c0_i32_0 = arith.constant 0 : i32
    %c0_i32_1 = arith.constant 0 : i32
    return %arg0, %c0_i32, %c0_i32_0 : i32, i32, i32
  }
  func.func @transform_1(%arg0: i32) -> (i32, i32, i32) {
    %c0_i32 = arith.constant 0 : i32
    %c0_i32_0 = arith.constant 0 : i32
    %c0_i32_1 = arith.constant 0 : i32
    %c0_i32_2 = arith.constant 0 : i32
    return %c0_i32, %c0_i32_0, %c0_i32_1 : i32, i32, i32
  }
  func.func @transform_2(%arg0: i32) -> (i32, i32) {
    %c0_i32 = arith.constant 0 : i32
    %c0_i32_0 = arith.constant 0 : i32
    %c0_i32_1 = arith.constant 0 : i32
    return %c0_i32, %c0_i32_0 : i32, i32
  }
  func.func @transform_3(%arg0: i32) -> (i32, i32, i32) {
    %c0_i32 = arith.constant 0 : i32
    %c0_i32_0 = arith.constant 0 : i32
    %c0_i32_1 = arith.constant 0 : i32
    %c0_i32_2 = arith.constant 0 : i32
    return %c0_i32, %c0_i32_0, %c0_i32_1 : i32, i32, i32
  }
  func.func @transform_4(%arg0: i32) -> (i32, i32, i32) {
    %c0_i32 = arith.constant 0 : i32
    %c0_i32_0 = arith.constant 0 : i32
    %c0_i32_1 = arith.constant 0 : i32
    %c0_i32_2 = arith.constant 0 : i32
    return %c0_i32, %c0_i32_0, %c0_i32_1 : i32, i32, i32
  }
  func.func @transform_5(%arg0: i32) -> (i32, i32, i32) {
    %c0_i32 = arith.constant 0 : i32
    %c0_i32_0 = arith.constant 0 : i32
    %c0_i32_1 = arith.constant 0 : i32
    %c0_i32_2 = arith.constant 0 : i32
    return %c0_i32, %c0_i32_0, %c0_i32_1 : i32, i32, i32
  }
  func.func @transform_6(%arg0: i32) -> (i32, i32, i32) {
    %c0_i32 = arith.constant 0 : i32
    %c0_i32_0 = arith.constant 0 : i32
    %c0_i32_1 = arith.constant 0 : i32
    %c0_i32_2 = arith.constant 0 : i32
    return %c0_i32, %c0_i32_0, %c0_i32_1 : i32, i32, i32
  }
  func.func @transform_7(%arg0: i32) -> (i32, i32) {
    %c0_i32 = arith.constant 0 : i32
    %c0_i32_0 = arith.constant 0 : i32
    %c0_i32_1 = arith.constant 0 : i32
    return %c0_i32, %c0_i32_0 : i32, i32
  }
  func.func @transform_8(%arg0: i32) -> (i32, i32, i32) {
    %c0_i32 = arith.constant 0 : i32
    %c0_i32_0 = arith.constant 0 : i32
    %c0_i32_1 = arith.constant 0 : i32
    %c0_i32_2 = arith.constant 0 : i32
    return %c0_i32, %c0_i32_0, %c0_i32_1 : i32, i32, i32
  }
  func.func @transform_9(%arg0: i32) -> (i32, i32, i32) {
    %c0_i32 = arith.constant 0 : i32
    %c0_i32_0 = arith.constant 0 : i32
    %c0_i32_1 = arith.constant 0 : i32
    %c0_i32_2 = arith.constant 0 : i32
    return %c0_i32, %c0_i32_0, %c0_i32_1 : i32, i32, i32
  }
  func.func @transform_10(%arg0: i32) -> (i32, i32, i32) {
    %c0_i32 = arith.constant 0 : i32
    %c0_i32_0 = arith.constant 0 : i32
    %c0_i32_1 = arith.constant 0 : i32
    %c0_i32_2 = arith.constant 0 : i32
    return %c0_i32, %c0_i32_0, %c0_i32_1 : i32, i32, i32
  }
  func.func @transform_11(%arg0: i32) -> (i32, i32, i32) {
    %c0_i32 = arith.constant 0 : i32
    %c0_i32_0 = arith.constant 0 : i32
    %c0_i32_1 = arith.constant 0 : i32
    %c0_i32_2 = arith.constant 0 : i32
    return %c0_i32, %c0_i32_0, %c0_i32_1 : i32, i32, i32
  }
  func.func @transform_12(%arg0: i32) -> (i32, i32) {
    %c0_i32 = arith.constant 0 : i32
    %c0_i32_0 = arith.constant 0 : i32
    %c0_i32_1 = arith.constant 0 : i32
    return %c0_i32, %c0_i32_0 : i32, i32
  }
  func.func @transform_13(%arg0: i32) -> (i32, i32) {
    %c0_i32 = arith.constant 0 : i32
    %c0_i32_0 = arith.constant 0 : i32
    %c0_i32_1 = arith.constant 0 : i32
    return %c0_i32, %c0_i32_0 : i32, i32
  }
  func.func @transform_14(%arg0: i32) -> (i32, i32) {
    %c0_i32 = arith.constant 0 : i32
    %c0_i32_0 = arith.constant 0 : i32
    %c0_i32_1 = arith.constant 0 : i32
    return %c0_i32, %c0_i32_0 : i32, i32
  }
  func.func @transform_15(%arg0: i32) -> (i32, i32) {
    %c0_i32 = arith.constant 0 : i32
    %c0_i32_0 = arith.constant 0 : i32
    %c0_i32_1 = arith.constant 0 : i32
    return %c0_i32, %c0_i32_0 : i32, i32
  }
  func.func @transform_16(%arg0: i32) -> (i32, i32) {
    %c0_i32 = arith.constant 0 : i32
    %c0_i32_0 = arith.constant 0 : i32
    %c0_i32_1 = arith.constant 0 : i32
    return %c0_i32, %c0_i32_0 : i32, i32
  }
  func.func @transform_17(%arg0: i32) -> (i32, i32) {
    %c0_i32 = arith.constant 0 : i32
    %c0_i32_0 = arith.constant 0 : i32
    return %arg0, %c0_i32 : i32, i32
  }
}

</mosaic_0001>

<llo_original>
// kernel: tpu_custom_call.1
$region0: #{tpu_custom_call.1}
  #allocation0 [shape = 'u32[]', space=smem, size = 0x4, offset = 0x4, fixed_abs, tag = 'smem constant byte address 0x4 - core index']
  #allocation1 [shape = 'u32[72,128]{1,0:T(1,128)}', space=vmem, size = 0x9000, scoped, tag = 'internal scratch']
  %s0 = inlined_call_operand.vmem [shape: f32[2,50,50], index: 0, kind: input, shape index: {}]
  %s1 = inlined_call_operand.vmem [shape: f32[3,50,288], index: 1, kind: input, shape index: {}]
  %s2 = inlined_call_operand.vmem [shape: f32[1,288], index: 2, kind: input, shape index: {}]
  %s3 = inlined_call_operand.hbm [shape: f32[2,48,96], index: 3, kind: input, shape index: {}]
  %s4 = inlined_call_operand.vmem [shape: f32[2,288,144], index: 4, kind: input, shape index: {}]
  %s5 = inlined_call_operand.hbm [shape: f32[3,44,48], index: 5, kind: input, shape index: {}]
  %s6 = inlined_call_operand.vmem [shape: f32[3,144,352], index: 6, kind: input, shape index: {}]
  %s7 = inlined_call_operand.vmem [shape: f32[1,352], index: 7, kind: input, shape index: {}]
  %s8 = inlined_call_operand.vmem [shape: f32[2,22,44], index: 8, kind: input, shape index: {}]
  %s9 = inlined_call_operand.vmem [shape: f32[2,352,176], index: 9, kind: input, shape index: {}]
  %s10 = inlined_call_operand.vmem [shape: f32[11,2,22], index: 10, kind: input, shape index: {}]
  %s11 = inlined_call_operand.vmem [shape: f32[11,176,128], index: 11, kind: input, shape index: {}]
  %s12 = inlined_call_operand.vmem [shape: f32[1,128], index: 12, kind: input, shape index: {}]
  %s13 = inlined_call_operand.vmem [shape: f32[128,64], index: 13, kind: input, shape index: {}]
  %s14 = inlined_call_operand.vmem [shape: f32[1,64], index: 14, kind: input, shape index: {}]
  %s15 = inlined_call_operand.vmem [shape: f32[64,3], index: 15, kind: input, shape index: {}]
  %s16 = inlined_call_operand.vmem [shape: f32[1,3], index: 16, kind: input, shape index: {}]
  %s17 = inlined_call_operand.hbm [shape: f32[2,3], index: 17, kind: output, shape index: {}]
  %s18 = sld [smem:[#allocation0]]
  $region86: #{tpu_custom_call.1} parent=0
    _
  %s20 = ssub.s32 1, %s18
  %s21 = scalar_select 0, %s20, %s18
  $region1: #{tpu_custom_call.1} parent=0
    #allocation2 [shape = 'u8[49152]{0}', space=vmem, size = 0xc000, scoped, tag = 'input window, operand 3, single buffered']
    #allocation3 [shape = 's32[1]{0}', space=sflag, size = 0x4, scoped, tag = 'scoped memory for tpu_custom_call.1']
    #allocation4 [shape = 's32[1]{0}', space=sflag, size = 0x4, scoped, tag = 'scoped memory for tpu_custom_call.1']
    #allocation5 [shape = 'u8[73728]{0}', space=vmem, size = 0x12000, scoped, tag = 'input window, operand 5, single buffered']
    #allocation6 [shape = 's32[1]{0}', space=sflag, size = 0x4, scoped, tag = 'scoped memory for tpu_custom_call.1']
    #allocation7 [shape = 'u8[1024]{0}', space=vmem, size = 0x400, scoped, tag = 'output window, operand 0, single buffered']
    %22 = vsyncpa [#allocation3], 0
    %23 = vsyncpa [#allocation6], 0
    %24 = vsyncpa [#allocation4], 0
    // Predicated region
    $region2: #{tpu_custom_call.1} parent=1 // pred_check
      _
    $region3: #{tpu_custom_call.1} parent=1 // pred_check_branch
      %26 = sbr.rel (0) target = $region5
    $region4: #{tpu_custom_call.1} parent=1 // pred_region
      _
    $region5: #{tpu_custom_call.1} parent=1 // pred_fallthru
      _
    // Predicated region
    $region6: #{tpu_custom_call.1} parent=1 // pred_check
      _
    $region7: #{tpu_custom_call.1} parent=1 // pred_check_branch
      %28 = sbr.rel (0) target = $region9
    $region8: #{tpu_custom_call.1} parent=1 // pred_region
      _
    $region9: #{tpu_custom_call.1} parent=1 // pred_fallthru
      _
    // Predicated region
    $region10: #{tpu_custom_call.1} parent=1 // pred_check
      _
    $region11: #{tpu_custom_call.1} parent=1 // pred_check_branch
      %30 = sbr.rel (0) target = $region13
    $region12: #{tpu_custom_call.1} parent=1 // pred_region
      _
    $region13: #{tpu_custom_call.1} parent=1 // pred_fallthru
      _
    // Predicated region
    $region14: #{tpu_custom_call.1} parent=1 // pred_check
      _
    $region15: #{tpu_custom_call.1} parent=1 // pred_check_branch
      %32 = sbr.rel (0) target = $region17
    $region16: #{tpu_custom_call.1} parent=1 // pred_region
      %34 = vsyncadd [#allocation3], 0
      %s35 = sshll.u32 %s3, 4
      %s36 = int_to_ptr.hbm [resolvable:$true] %s35
      %s37 = sshll.u32 [#allocation2], 4
      %s38 = int_to_ptr.vmem [resolvable:$true] %s37
      %43 = dma.hbm_to_vmem [thread:$0]  %s36, 1536, %s38, [#allocation3], 128, 128, 8
    $region17: #{tpu_custom_call.1} parent=1 // pred_fallthru
      _
    // Predicated region
    $region18: #{tpu_custom_call.1} parent=1 // pred_check
      _
    $region19: #{tpu_custom_call.1} parent=1 // pred_check_branch
      %45 = sbr.rel (0) target = $region21
    $region20: #{tpu_custom_call.1} parent=1 // pred_region
      _
    $region21: #{tpu_custom_call.1} parent=1 // pred_fallthru
      _
    // Predicated region
    $region22: #{tpu_custom_call.1} parent=1 // pred_check
      _
    $region23: #{tpu_custom_call.1} parent=1 // pred_check_branch
      %47 = sbr.rel (0) target = $region25
    $region24: #{tpu_custom_call.1} parent=1 // pred_region
      %49 = vsyncadd [#allocation6], 0
      %s50 = sshll.u32 %s5, 4
      %s51 = int_to_ptr.hbm [resolvable:$true] %s50
      %s52 = sshll.u32 [#allocation5], 4
      %s53 = int_to_ptr.vmem [resolvable:$true] %s52
      %58 = dma.hbm_to_vmem [thread:$0]  %s51, 2304, %s53, [#allocation6], 128, 128, 8
    $region25: #{tpu_custom_call.1} parent=1 // pred_fallthru
      _
    // Predicated region
    $region26: #{tpu_custom_call.1} parent=1 // pred_check
      _
    $region27: #{tpu_custom_call.1} parent=1 // pred_check_branch
      %60 = sbr.rel (0) target = $region29
    $region28: #{tpu_custom_call.1} parent=1 // pred_region
      _
    $region29: #{tpu_custom_call.1} parent=1 // pred_fallthru
      _
    // Predicated region
    $region30: #{tpu_custom_call.1} parent=1 // pred_check
      _
    $region31: #{tpu_custom_call.1} parent=1 // pred_check_branch
      %62 = sbr.rel (0) target = $region33
    $region32: #{tpu_custom_call.1} parent=1 // pred_region
      _
    $region33: #{tpu_custom_call.1} parent=1 // pred_fallthru
      _
    // Predicated region
    $region34: #{tpu_custom_call.1} parent=1 // pred_check
      _
    $region35: #{tpu_custom_call.1} parent=1 // pred_check_branch
      %64 = sbr.rel (0) target = $region37
    $region36: #{tpu_custom_call.1} parent=1 // pred_region
      _
    $region37: #{tpu_custom_call.1} parent=1 // pred_fallthru
      _
    // Predicated region
    $region38: #{tpu_custom_call.1} parent=1 // pred_check
      _
    $region39: #{tpu_custom_call.1} parent=1 // pred_check_branch
      %66 = sbr.rel (0) target = $region41
    $region40: #{tpu_custom_call.1} parent=1 // pred_region
      _
    $region41: #{tpu_custom_call.1} parent=1 // pred_fallthru
      _
    // Predicated region
    $region42: #{tpu_custom_call.1} parent=1 // pred_check
      _
    $region43: #{tpu_custom_call.1} parent=1 // pred_check_branch
      %68 = sbr.rel (0) target = $region45
    $region44: #{tpu_custom_call.1} parent=1 // pred_region
      _
    $region45: #{tpu_custom_call.1} parent=1 // pred_fallthru
      _
    // Predicated region
    $region46: #{tpu_custom_call.1} parent=1 // pred_check
      _
    $region47: #{tpu_custom_call.1} parent=1 // pred_check_branch
      %70 = sbr.rel (0) target = $region49
    $region48: #{tpu_custom_call.1} parent=1 // pred_region
      _
    $region49: #{tpu_custom_call.1} parent=1 // pred_fallthru
      _
    // Predicated region
    $region50: #{tpu_custom_call.1} parent=1 // pred_check
      _
    $region51: #{tpu_custom_call.1} parent=1 // pred_check_branch
      %72 = sbr.rel (0) target = $region53
    $region52: #{tpu_custom_call.1} parent=1 // pred_region
      _
    $region53: #{tpu_custom_call.1} parent=1 // pred_fallthru
      _
    // Predicated region
    $region54: #{tpu_custom_call.1} parent=1 // pred_check
      _
    $region55: #{tpu_custom_call.1} parent=1 // pred_check_branch
      %74 = sbr.rel (0) target = $region57
    $region56: #{tpu_custom_call.1} parent=1 // pred_region
      _
    $region57: #{tpu_custom_call.1} parent=1 // pred_fallthru
      _
    // Predicated region
    $region58: #{tpu_custom_call.1} parent=1 // pred_check
      _
    $region59: #{tpu_custom_call.1} parent=1 // pred_check_branch
      %76 = sbr.rel (0) target = $region61
    $region60: #{tpu_custom_call.1} parent=1 // pred_region
      _
    $region61: #{tpu_custom_call.1} parent=1 // pred_fallthru
      _
    // Predicated region
    $region62: #{tpu_custom_call.1} parent=1 // pred_check
      _
    $region63: #{tpu_custom_call.1} parent=1 // pred_check_branch
      %78 = sbr.rel (0) target = $region65
    $region64: #{tpu_custom_call.1} parent=1 // pred_region
      _
    $region65: #{tpu_custom_call.1} parent=1 // pred_fallthru
      _
    // Predicated region
    $region66: #{tpu_custom_call.1} parent=1 // pred_check
      _
    $region67: #{tpu_custom_call.1} parent=1 // pred_check_branch
      %80 = sbr.rel (0) target = $region69
    $region68: #{tpu_custom_call.1} parent=1 // pred_region
      _
    $region69: #{tpu_custom_call.1} parent=1 // pred_fallthru
      _
    // Predicated region
    $region70: #{tpu_custom_call.1} parent=1 // pred_check
      _
    $region71: #{tpu_custom_call.1} parent=1 // pred_check_branch
      %82 = sbr.rel (0) target = $region73
    $region72: #{tpu_custom_call.1} parent=1 // pred_region
      %84 = dma.done [#allocation3], 1536
    $region73: #{tpu_custom_call.1} parent=1 // pred_fallthru
      _
    // Predicated region
    $region74: #{tpu_custom_call.1} parent=1 // pred_check
      _
    $region75: #{tpu_custom_call.1} parent=1 // pred_check_branch
      %86 = sbr.rel (0) target = $region77
    $region76: #{tpu_custom_call.1} parent=1 // pred_region
      %88 = dma.done [#allocation6], 2304
    $region77: #{tpu_custom_call.1} parent=1 // pred_fallthru
      _
    %v89 = vld [vmem:[%s0] sm:$0xff]
    %v90 = vld [vmem:[%s0 + $0x8] sm:$0xff]
    %v91 = vld [vmem:[%s0 + $0x10] sm:$0xff]
    %v92 = vld [vmem:[%s0 + $0x18] sm:$0xff]
    %v93 = vld [vmem:[%s0 + $0x20] sm:$0xff]
    %v94 = vld [vmem:[%s0 + $0x28] sm:$0xff]
    %v95 = vld [vmem:[%s0 + $0x38] sm:$0xff]
    %v96 = vld [vmem:[%s0 + $0x40] sm:$0xff]
    %v97 = vld [vmem:[%s0 + $0x48] sm:$0xff]
    %v98 = vld [vmem:[%s0 + $0x50] sm:$0xff]
    %v99 = vld [vmem:[%s0 + $0x58] sm:$0xff]
    %v100 = vld [vmem:[%s0 + $0x60] sm:$0xff]
    %v101 = vld [vmem:[%s1] sm:$0xff]
    %v102 = vld [vmem:[%s1 + $0x8] sm:$0xff]
    %v103 = vld [vmem:[%s1 + $0x10] sm:$0xff]
    %v104 = vld [vmem:[%s1 + $0x18] sm:$0xff]
    %v105 = vld [vmem:[%s1 + $0x20] sm:$0xff]
    %v106 = vld [vmem:[%s1 + $0x28] sm:$0xff]
    %v107 = vld [vmem:[%s1 + $0x30] sm:$0xff]
    %v108 = vld [vmem:[%s1 + $0x38] sm:$0xff]
    %v109 = vld [vmem:[%s1 + $0x40] sm:$0xff]
    %v110 = vld [vmem:[%s1 + $0x48] sm:$0xff]
    %v111 = vld [vmem:[%s1 + $0x50] sm:$0xff]
    %v112 = vld [vmem:[%s1 + $0x58] sm:$0xff]
    %v113 = vld [vmem:[%s1 + $0x60] sm:$0xff]
    %v114 = vld [vmem:[%s1 + $0x68] sm:$0xff]
    %v115 = vld [vmem:[%s1 + $0x70] sm:$0xff]
    %v116 = vld [vmem:[%s1 + $0x78] sm:$0xff]
    %v117 = vld [vmem:[%s1 + $0x80] sm:$0xff]
    %v118 = vld [vmem:[%s1 + $0x88] sm:$0xff]
    %v119 = vld [vmem:[%s1 + $0x90] sm:$0x3]
    %v120 = vld [vmem:[%s1 + $0x98] sm:$0x3]
    %v121 = vld [vmem:[%s1 + $0xa0] sm:$0x3]
    %v122 = vld [vmem:[%s0 + $0x1] sm:$0xff]
    %v123 = vld [vmem:[%s0 + $0x9] sm:$0xff]
    %v124 = vld [vmem:[%s0 + $0x11] sm:$0xff]
    %v125 = vld [vmem:[%s0 + $0x19] sm:$0xff]
    %v126 = vld [vmem:[%s0 + $0x21] sm:$0xff]
    %v127 = vld [vmem:[%s0 + $0x29] sm:$0xff]
    %v128 = vld [vmem:[%s0 + $0x39] sm:$0xff]
    %v129 = vld [vmem:[%s0 + $0x41] sm:$0xff]
    %v130 = vld [vmem:[%s0 + $0x49] sm:$0xff]
    %v131 = vld [vmem:[%s0 + $0x51] sm:$0xff]
    %v132 = vld [vmem:[%s0 + $0x59] sm:$0xff]
    %v133 = vld [vmem:[%s0 + $0x61] sm:$0xff]
    %s134 = scalar_lea.vmem %s1, 168
    %v135 = vld [vmem:[%s134] sm:$0xff]
    %v136 = vld [vmem:[%s134 + $0x8] sm:$0xff]
    %v137 = vld [vmem:[%s134 + $0x10] sm:$0xff]
    %v138 = vld [vmem:[%s134 + $0x18] sm:$0xff]
    %v139 = vld [vmem:[%s134 + $0x20] sm:$0xff]
    %v140 = vld [vmem:[%s134 + $0x28] sm:$0xff]
    %v141 = vld [vmem:[%s134 + $0x30] sm:$0xff]
    %v142 = vld [vmem:[%s134 + $0x38] sm:$0xff]
    %v143 = vld [vmem:[%s134 + $0x40] sm:$0xff]
    %v144 = vld [vmem:[%s134 + $0x48] sm:$0xff]
    %v145 = vld [vmem:[%s134 + $0x50] sm:$0xff]
    %v146 = vld [vmem:[%s134 + $0x58] sm:$0xff]
    %v147 = vld [vmem:[%s134 + $0x60] sm:$0xff]
    %v148 = vld [vmem:[%s134 + $0x68] sm:$0xff]
    %v149 = vld [vmem:[%s134 + $0x70] sm:$0xff]
    %v150 = vld [vmem:[%s134 + $0x78] sm:$0xff]
    %v151 = vld [vmem:[%s134 + $0x80] sm:$0xff]
    %v152 = vld [vmem:[%s134 + $0x88] sm:$0xff]
    %v153 = vld [vmem:[%s134 + $0x90] sm:$0x3]
    %v154 = vld [vmem:[%s134 + $0x98] sm:$0x3]
    %v155 = vld [vmem:[%s134 + $0xa0] sm:$0x3]
    %vm156 = vcmask 408576
    %v158 = vsel %vm156, %v122, 0
    %v161 = vsel %vm156, %v123, 0
    %v164 = vsel %vm156, %v124, 0
    %v167 = vsel %vm156, %v125, 0
    %v170 = vsel %vm156, %v126, 0
    %v173 = vsel %vm156, %v127, 0
    %v176 = vsel %vm156, %v128, 0
    %v179 = vsel %vm156, %v129, 0
    %v182 = vsel %vm156, %v130, 0
    %v185 = vsel %vm156, %v131, 0
    %v188 = vsel %vm156, %v132, 0
    %v191 = vsel %vm156, %v133, 0
    %vm193 = vcmask 1041408
    %v195 = vsel %vm193, %v153, 0
    %v198 = vsel %vm193, %v154, 0
    %v201 = vsel %vm193, %v155, 0
    %203 = vmatpush.msra.mxu0 0.0
    %204 = vmatpush.msra.mxu0 0.0
    %205 = vmatpush.msra.mxu0 0.0
    %206 = vmatpush.msra.mxu0 0.0
    %207 = vmatpush.msra.mxu0 0.0
    %208 = vmatpush.msra.mxu0 0.0
    %209 = vmatpush.msra.mxu0 0.0
    %210 = vmatpush.msra.mxu0 0.0
    %211 = vmatpush.msra.mxu0 0.0
    %212 = vmatpush.msra.mxu0 %v195
    %213 = vmatpush.msra.mxu0 %v150
    %214 = vmatpush.msra.mxu0 %v147
    %215 = vmatpush.msra.mxu0 %v144
    %216 = vmatpush.msra.mxu0 %v141
    %217 = vmatpush.msra.mxu0 %v138
    %218 = vmatpush.msra.mxu0 %v135
    %219 = vmatmul.f32.gmra.mxu0 %v158
    %v220 = vpop.f32.mrf.mxu0
    %v221 = vadd.f32 0.0, %v220
    %222 = vmatmul.f32.gmra.mxu0 %v161
    %v223 = vpop.f32.mrf.mxu0
    %v224 = vadd.f32 0.0, %v223
    %225 = vmatmul.f32.gmra.mxu0 %v164
    %v226 = vpop.f32.mrf.mxu0
    %v227 = vadd.f32 0.0, %v226
    %228 = vmatmul.f32.gmra.mxu0 %v167
    %v229 = vpop.f32.mrf.mxu0
    %v230 = vadd.f32 0.0, %v229
    %231 = vmatmul.f32.gmra.mxu0 %v170
    %v232 = vpop.f32.mrf.mxu0
    %v233 = vadd.f32 0.0, %v232
    %234 = vmatmul.f32.gmra.mxu0 %v173
    %v235 = vpop.f32.mrf.mxu0
    %v236 = vadd.f32 0.0, %v235
    %237 = vmatmul.f32.gmra.mxu0 %v176
    %v238 = vpop.f32.mrf.mxu0
    %v239 = vadd.f32 0.0, %v238
    %240 = vmatmul.f32.gmra.mxu0 %v179
    %v241 = vpop.f32.mrf.mxu0
    %v242 = vadd.f32 0.0, %v241
    %243 = vmatmul.f32.gmra.mxu0 %v182
    %v244 = vpop.f32.mrf.mxu0
    %v245 = vadd.f32 0.0, %v244
    %246 = vmatmul.f32.gmra.mxu0 %v185
    %v247 = vpop.f32.mrf.mxu0
    %v248 = vadd.f32 0.0, %v247
    %249 = vmatmul.f32.gmra.mxu0 %v188
    %v250 = vpop.f32.mrf.mxu0
    %v251 = vadd.f32 0.0, %v250
    %252 = vmatmul.f32.gmra.mxu0 %v191
    %v253 = vpop.f32.mrf.mxu0
    %v254 = vadd.f32 0.0, %v253
    %255 = vdwg.mxu0
    %256 = vmatpush.msra.mxu0 0.0
    %257 = vmatpush.msra.mxu0 0.0
    %258 = vmatpush.msra.mxu0 0.0
    %259 = vmatpush.msra.mxu0 0.0
    %260 = vmatpush.msra.mxu0 0.0
    %261 = vmatpush.msra.mxu0 0.0
    %262 = vmatpush.msra.mxu0 0.0
    %263 = vmatpush.msra.mxu0 0.0
    %264 = vmatpush.msra.mxu0 0.0
    %265 = vmatpush.msra.mxu0 %v198
    %266 = vmatpush.msra.mxu0 %v151
    %267 = vmatpush.msra.mxu0 %v148
    %268 = vmatpush.msra.mxu0 %v145
    %269 = vmatpush.msra.mxu0 %v142
    %270 = vmatpush.msra.mxu0 %v139
    %271 = vmatpush.msra.mxu0 %v136
    %272 = vmatmul.f32.gmra.mxu0 %v158
    %v273 = vpop.f32.mrf.mxu0
    %v274 = vadd.f32 0.0, %v273
    %275 = vmatmul.f32.gmra.mxu0 %v161
    %v276 = vpop.f32.mrf.mxu0
    %v277 = vadd.f32 0.0, %v276
    %278 = vmatmul.f32.gmra.mxu0 %v164
    %v279 = vpop.f32.mrf.mxu0
    %v280 = vadd.f32 0.0, %v279
    %281 = vmatmul.f32.gmra.mxu0 %v167
    %v282 = vpop.f32.mrf.mxu0
    %v283 = vadd.f32 0.0, %v282
    %284 = vmatmul.f32.gmra.mxu0 %v170
    %v285 = vpop.f32.mrf.mxu0
    %v286 = vadd.f32 0.0, %v285
    %287 = vmatmul.f32.gmra.mxu0 %v173
    %v288 = vpop.f32.mrf.mxu0
    %v289 = vadd.f32 0.0, %v288
    %290 = vmatmul.f32.gmra.mxu0 %v176
    %v291 = vpop.f32.mrf.mxu0
    %v292 = vadd.f32 0.0, %v291
    %293 = vmatmul.f32.gmra.mxu0 %v179
    %v294 = vpop.f32.mrf.mxu0
    %v295 = vadd.f32 0.0, %v294
    %296 = vmatmul.f32.gmra.mxu0 %v182
    %v297 = vpop.f32.mrf.mxu0
    %v298 = vadd.f32 0.0, %v297
    %299 = vmatmul.f32.gmra.mxu0 %v185
    %v300 = vpop.f32.mrf.mxu0
    %v301 = vadd.f32 0.0, %v300
    %302 = vmatmul.f32.gmra.mxu0 %v188
    %v303 = vpop.f32.mrf.mxu0
    %v304 = vadd.f32 0.0, %v303
    %305 = vmatmul.f32.gmra.mxu0 %v191
    %v306 = vpop.f32.mrf.mxu0
    %v307 = vadd.f32 0.0, %v306
    %308 = vdwg.mxu0
    %309 = vmatpush.msra.mxu0 0.0
    %310 = vmatpush.msra.mxu0 0.0
    %311 = vmatpush.msra.mxu0 0.0
    %312 = vmatpush.msra.mxu0 0.0
    %313 = vmatpush.msra.mxu0 0.0
    %314 = vmatpush.msra.mxu0 0.0
    %315 = vmatpush.msra.mxu0 0.0
    %316 = vmatpush.msra.mxu0 0.0
    %317 = vmatpush.msra.mxu0 0.0
    %318 = vmatpush.msra.mxu0 %v201
    %319 = vmatpush.msra.mxu0 %v152
    %320 = vmatpush.msra.mxu0 %v149
    %321 = vmatpush.msra.mxu0 %v146
    %322 = vmatpush.msra.mxu0 %v143
    %323 = vmatpush.msra.mxu0 %v140
    %324 = vmatpush.msra.mxu0 %v137
    %325 = vmatmul.f32.gmra.mxu0 %v158
    %v326 = vpop.f32.mrf.mxu0
    %v327 = vadd.f32 0.0, %v326
    %328 = vmatmul.f32.gmra.mxu0 %v161
    %v329 = vpop.f32.mrf.mxu0
    %v330 = vadd.f32 0.0, %v329
    %331 = vmatmul.f32.gmra.mxu0 %v164
    %v332 = vpop.f32.mrf.mxu0
    %v333 = vadd.f32 0.0, %v332
    %334 = vmatmul.f32.gmra.mxu0 %v167
    %v335 = vpop.f32.mrf.mxu0
    %v336 = vadd.f32 0.0, %v335
    %337 = vmatmul.f32.gmra.mxu0 %v170
    %v338 = vpop.f32.mrf.mxu0
    %v339 = vadd.f32 0.0, %v338
    %340 = vmatmul.f32.gmra.mxu0 %v173
    %v341 = vpop.f32.mrf.mxu0
    %v342 = vadd.f32 0.0, %v341
    %343 = vmatmul.f32.gmra.mxu0 %v176
    %v344 = vpop.f32.mrf.mxu0
    %v345 = vadd.f32 0.0, %v344
    %346 = vmatmul.f32.gmra.mxu0 %v179
    %v347 = vpop.f32.mrf.mxu0
    %v348 = vadd.f32 0.0, %v347
    %349 = vmatmul.f32.gmra.mxu0 %v182
    %v350 = vpop.f32.mrf.mxu0
    %v351 = vadd.f32 0.0, %v350
    %352 = vmatmul.f32.gmra.mxu0 %v185
    %v353 = vpop.f32.mrf.mxu0
    %v354 = vadd.f32 0.0, %v353
    %355 = vmatmul.f32.gmra.mxu0 %v188
    %v356 = vpop.f32.mrf.mxu0
    %v357 = vadd.f32 0.0, %v356
    %358 = vmatmul.f32.gmra.mxu0 %v191
    %v359 = vpop.f32.mrf.mxu0
    %v360 = vadd.f32 0.0, %v359
    %361 = vdwg.mxu0
    %v363 = vsel %vm156, %v89, 0
    %v366 = vsel %vm156, %v90, 0
    %v369 = vsel %vm156, %v91, 0
    %v372 = vsel %vm156, %v92, 0
    %v375 = vsel %vm156, %v93, 0
    %v378 = vsel %vm156, %v94, 0
    %v381 = vsel %vm156, %v95, 0
    %v384 = vsel %vm156, %v96, 0
    %v387 = vsel %vm156, %v97, 0
    %v390 = vsel %vm156, %v98, 0
    %v393 = vsel %vm156, %v99, 0
    %v396 = vsel %vm156, %v100, 0
    %v399 = vsel %vm193, %v119, 0
    %v402 = vsel %vm193, %v120, 0
    %v405 = vsel %vm193, %v121, 0
    %407 = vmatpush.msra.mxu0 0.0
    %408 = vmatpush.msra.mxu0 0.0
    %409 = vmatpush.msra.mxu0 0.0
    %410 = vmatpush.msra.mxu0 0.0
    %411 = vmatpush.msra.mxu0 0.0
    %412 = vmatpush.msra.mxu0 0.0
    %413 = vmatpush.msra.mxu0 0.0
    %414 = vmatpush.msra.mxu0 0.0
    %415 = vmatpush.msra.mxu0 0.0
    %416 = vmatpush.msra.mxu0 %v399
    %417 = vmatpush.msra.mxu0 %v116
    %418 = vmatpush.msra.mxu0 %v113
    %419 = vmatpush.msra.mxu0 %v110
    %420 = vmatpush.msra.mxu0 %v107
    %421 = vmatpush.msra.mxu0 %v104
    %422 = vmatpush.msra.mxu0 %v101
    %423 = vmatmul.f32.gmra.mxu0 %v363
    %v424 = vpop.f32.mrf.mxu0
    %v425 = vadd.f32 %v221, %v424
    %426 = vmatmul.f32.gmra.mxu0 %v366
    %v427 = vpop.f32.mrf.mxu0
    %v428 = vadd.f32 %v224, %v427
    %429 = vmatmul.f32.gmra.mxu0 %v369
    %v430 = vpop.f32.mrf.mxu0
    %v431 = vadd.f32 %v227, %v430
    %432 = vmatmul.f32.gmra.mxu0 %v372
    %v433 = vpop.f32.mrf.mxu0
    %v434 = vadd.f32 %v230, %v433
    %435 = vmatmul.f32.gmra.mxu0 %v375
    %v436 = vpop.f32.mrf.mxu0
    %v437 = vadd.f32 %v233, %v436
    %438 = vmatmul.f32.gmra.mxu0 %v378
    %v439 = vpop.f32.mrf.mxu0
    %v440 = vadd.f32 %v236, %v439
    %441 = vmatmul.f32.gmra.mxu0 %v381
    %v442 = vpop.f32.mrf.mxu0
    %v443 = vadd.f32 %v239, %v442
    %444 = vmatmul.f32.gmra.mxu0 %v384
    %v445 = vpop.f32.mrf.mxu0
    %v446 = vadd.f32 %v242, %v445
    %447 = vmatmul.f32.gmra.mxu0 %v387
    %v448 = vpop.f32.mrf.mxu0
    %v449 = vadd.f32 %v245, %v448
    %450 = vmatmul.f32.gmra.mxu0 %v390
    %v451 = vpop.f32.mrf.mxu0
    %v452 = vadd.f32 %v248, %v451
    %453 = vmatmul.f32.gmra.mxu0 %v393
    %v454 = vpop.f32.mrf.mxu0
    %v455 = vadd.f32 %v251, %v454
    %456 = vmatmul.f32.gmra.mxu0 %v396
    %v457 = vpop.f32.mrf.mxu0
    %v458 = vadd.f32 %v254, %v457
    %459 = vdwg.mxu0
    %460 = vmatpush.msra.mxu0 0.0
    %461 = vmatpush.msra.mxu0 0.0
    %462 = vmatpush.msra.mxu0 0.0
    %463 = vmatpush.msra.mxu0 0.0
    %464 = vmatpush.msra.mxu0 0.0
    %465 = vmatpush.msra.mxu0 0.0
    %466 = vmatpush.msra.mxu0 0.0
    %467 = vmatpush.msra.mxu0 0.0
    %468 = vmatpush.msra.mxu0 0.0
    %469 = vmatpush.msra.mxu0 %v402
    %470 = vmatpush.msra.mxu0 %v117
    %471 = vmatpush.msra.mxu0 %v114
    %472 = vmatpush.msra.mxu0 %v111
    %473 = vmatpush.msra.mxu0 %v108
    %474 = vmatpush.msra.mxu0 %v105
    %475 = vmatpush.msra.mxu0 %v102
    %476 = vmatmul.f32.gmra.mxu0 %v363
    %v477 = vpop.f32.mrf.mxu0
    %v478 = vadd.f32 %v274, %v477
    %479 = vmatmul.f32.gmra.mxu0 %v366
    %v480 = vpop.f32.mrf.mxu0
    %v481 = vadd.f32 %v277, %v480
    %482 = vmatmul.f32.gmra.mxu0 %v369
    %v483 = vpop.f32.mrf.mxu0
    %v484 = vadd.f32 %v280, %v483
    %485 = vmatmul.f32.gmra.mxu0 %v372
    %v486 = vpop.f32.mrf.mxu0
    %v487 = vadd.f32 %v283, %v486
    %488 = vmatmul.f32.gmra.mxu0 %v375
    %v489 = vpop.f32.mrf.mxu0
    %v490 = vadd.f32 %v286, %v489
    %491 = vmatmul.f32.gmra.mxu0 %v378
    %v492 = vpop.f32.mrf.mxu0
    %v493 = vadd.f32 %v289, %v492
    %494 = vmatmul.f32.gmra.mxu0 %v381
    %v495 = vpop.f32.mrf.mxu0
    %v496 = vadd.f32 %v292, %v495
    %497 = vmatmul.f32.gmra.mxu0 %v384
    %v498 = vpop.f32.mrf.mxu0
    %v499 = vadd.f32 %v295, %v498
    %500 = vmatmul.f32.gmra.mxu0 %v387
    %v501 = vpop.f32.mrf.mxu0
    %v502 = vadd.f32 %v298, %v501
    %503 = vmatmul.f32.gmra.mxu0 %v390
    %v504 = vpop.f32.mrf.mxu0
    %v505 = vadd.f32 %v301, %v504
    %506 = vmatmul.f32.gmra.mxu0 %v393
    %v507 = vpop.f32.mrf.mxu0
    %v508 = vadd.f32 %v304, %v507
    %509 = vmatmul.f32.gmra.mxu0 %v396
    %v510 = vpop.f32.mrf.mxu0
    %v511 = vadd.f32 %v307, %v510
    %512 = vdwg.mxu0
    %513 = vmatpush.msra.mxu0 0.0
    %514 = vmatpush.msra.mxu0 0.0
    %515 = vmatpush.msra.mxu0 0.0
    %516 = vmatpush.msra.mxu0 0.0
    %517 = vmatpush.msra.mxu0 0.0
    %518 = vmatpush.msra.mxu0 0.0
    %519 = vmatpush.msra.mxu0 0.0
    %520 = vmatpush.msra.mxu0 0.0
    %521 = vmatpush.msra.mxu0 0.0
    %522 = vmatpush.msra.mxu0 %v405
    %523 = vmatpush.msra.mxu0 %v118
    %524 = vmatpush.msra.mxu0 %v115
    %525 = vmatpush.msra.mxu0 %v112
    %526 = vmatpush.msra.mxu0 %v109
    %527 = vmatpush.msra.mxu0 %v106
    %528 = vmatpush.msra.mxu0 %v103
    %529 = vmatmul.f32.gmra.mxu0 %v363
    %v530 = vpop.f32.mrf.mxu0
    %v531 = vadd.f32 %v327, %v530
    %532 = vmatmul.f32.gmra.mxu0 %v366
    %v533 = vpop.f32.mrf.mxu0
    %v534 = vadd.f32 %v330, %v533
    %535 = vmatmul.f32.gmra.mxu0 %v369
    %v536 = vpop.f32.mrf.mxu0
    %v537 = vadd.f32 %v333, %v536
    %538 = vmatmul.f32.gmra.mxu0 %v372
    %v539 = vpop.f32.mrf.mxu0
    %v540 = vadd.f32 %v336, %v539
    %541 = vmatmul.f32.gmra.mxu0 %v375
    %v542 = vpop.f32.mrf.mxu0
    %v543 = vadd.f32 %v339, %v542
    %544 = vmatmul.f32.gmra.mxu0 %v378
    %v545 = vpop.f32.mrf.mxu0
    %v546 = vadd.f32 %v342, %v545
    %547 = vmatmul.f32.gmra.mxu0 %v381
    %v548 = vpop.f32.mrf.mxu0
    %v549 = vadd.f32 %v345, %v548
    %550 = vmatmul.f32.gmra.mxu0 %v384
    %v551 = vpop.f32.mrf.mxu0
    %v552 = vadd.f32 %v348, %v551
    %553 = vmatmul.f32.gmra.mxu0 %v387
    %v554 = vpop.f32.mrf.mxu0
    %v555 = vadd.f32 %v351, %v554
    %556 = vmatmul.f32.gmra.mxu0 %v390
    %v557 = vpop.f32.mrf.mxu0
    %v558 = vadd.f32 %v354, %v557
    %559 = vmatmul.f32.gmra.mxu0 %v393
    %v560 = vpop.f32.mrf.mxu0
    %v561 = vadd.f32 %v357, %v560
    %562 = vmatmul.f32.gmra.mxu0 %v396
    %v563 = vpop.f32.mrf.mxu0
    %v564 = vadd.f32 %v360, %v563
    %565 = vdwg.mxu0
    %v566 = vld [vmem:[%s0 + $0x2] sm:$0xff]
    %v567 = vld [vmem:[%s0 + $0xa] sm:$0xff]
    %v568 = vld [vmem:[%s0 + $0x12] sm:$0xff]
    %v569 = vld [vmem:[%s0 + $0x1a] sm:$0xff]
    %v570 = vld [vmem:[%s0 + $0x22] sm:$0xff]
    %v571 = vld [vmem:[%s0 + $0x2a] sm:$0xff]
    %v572 = vld [vmem:[%s0 + $0x3a] sm:$0xff]
    %v573 = vld [vmem:[%s0 + $0x42] sm:$0xff]
    %v574 = vld [vmem:[%s0 + $0x4a] sm:$0xff]
    %v575 = vld [vmem:[%s0 + $0x52] sm:$0xff]
    %v576 = vld [vmem:[%s0 + $0x5a] sm:$0xff]
    %v577 = vld [vmem:[%s0 + $0x62] sm:$0xff]
    %s578 = scalar_lea.vmem %s1, 336
    %v579 = vld [vmem:[%s578] sm:$0xff]
    %v580 = vld [vmem:[%s578 + $0x8] sm:$0xff]
    %v581 = vld [vmem:[%s578 + $0x10] sm:$0xff]
    %v582 = vld [vmem:[%s578 + $0x18] sm:$0xff]
    %v583 = vld [vmem:[%s578 + $0x20] sm:$0xff]
    %v584 = vld [vmem:[%s578 + $0x28] sm:$0xff]
    %v585 = vld [vmem:[%s578 + $0x30] sm:$0xff]
    %v586 = vld [vmem:[%s578 + $0x38] sm:$0xff]
    %v587 = vld [vmem:[%s578 + $0x40] sm:$0xff]
    %v588 = vld [vmem:[%s578 + $0x48] sm:$0xff]
    %v589 = vld [vmem:[%s578 + $0x50] sm:$0xff]
    %v590 = vld [vmem:[%s578 + $0x58] sm:$0xff]
    %v591 = vld [vmem:[%s578 + $0x60] sm:$0xff]
    %v592 = vld [vmem:[%s578 + $0x68] sm:$0xff]
    %v593 = vld [vmem:[%s578 + $0x70] sm:$0xff]
    %v594 = vld [vmem:[%s578 + $0x78] sm:$0xff]
    %v595 = vld [vmem:[%s578 + $0x80] sm:$0xff]
    %v596 = vld [vmem:[%s578 + $0x88] sm:$0xff]
    %v597 = vld [vmem:[%s578 + $0x90] sm:$0x3]
    %v598 = vld [vmem:[%s578 + $0x98] sm:$0x3]
    %v599 = vld [vmem:[%s578 + $0xa0] sm:$0x3]
    %v601 = vsel %vm156, %v566, 0
    %v604 = vsel %vm156, %v567, 0
    %v607 = vsel %vm156, %v568, 0
    %v610 = vsel %vm156, %v569, 0
    %v613 = vsel %vm156, %v570, 0
    %v616 = vsel %vm156, %v571, 0
    %v619 = vsel %vm156, %v572, 0
    %v622 = vsel %vm156, %v573, 0
    %v625 = vsel %vm156, %v574, 0
    %v628 = vsel %vm156, %v575, 0
    %v631 = vsel %vm156, %v576, 0
    %v634 = vsel %vm156, %v577, 0
    %v637 = vsel %vm193, %v597, 0
    %v640 = vsel %vm193, %v598, 0
    %v643 = vsel %vm193, %v599, 0
    %645 = vmatpush.msra.mxu0 0.0
    %646 = vmatpush.msra.mxu0 0.0
    %647 = vmatpush.msra.mxu0 0.0
    %648 = vmatpush.msra.mxu0 0.0
    %649 = vmatpush.msra.mxu0 0.0
    %650 = vmatpush.msra.mxu0 0.0
    %651 = vmatpush.msra.mxu0 0.0
    %652 = vmatpush.msra.mxu0 0.0
    %653 = vmatpush.msra.mxu0 0.0
    %654 = vmatpush.msra.mxu0 %v637
    %655 = vmatpush.msra.mxu0 %v594
    %656 = vmatpush.msra.mxu0 %v591
    %657 = vmatpush.msra.mxu0 %v588
    %658 = vmatpush.msra.mxu0 %v585
    %659 = vmatpush.msra.mxu0 %v582
    %660 = vmatpush.msra.mxu0 %v579
    %661 = vmatmul.f32.gmra.mxu0 %v601
    %v662 = vpop.f32.mrf.mxu0
    %v663 = vadd.f32 0.0, %v662
    %664 = vmatmul.f32.gmra.mxu0 %v604
    %v665 = vpop.f32.mrf.mxu0
    %v666 = vadd.f32 0.0, %v665
    %667 = vmatmul.f32.gmra.mxu0 %v607
    %v668 = vpop.f32.mrf.mxu0
    %v669 = vadd.f32 0.0, %v668
    %670 = vmatmul.f32.gmra.mxu0 %v610
    %v671 = vpop.f32.mrf.mxu0
    %v672 = vadd.f32 0.0, %v671
    %673 = vmatmul.f32.gmra.mxu0 %v613
    %v674 = vpop.f32.mrf.mxu0
    %v675 = vadd.f32 0.0, %v674
    %676 = vmatmul.f32.gmra.mxu0 %v616
    %v677 = vpop.f32.mrf.mxu0
    %v678 = vadd.f32 0.0, %v677
    %679 = vmatmul.f32.gmra.mxu0 %v619
    %v680 = vpop.f32.mrf.mxu0
    %v681 = vadd.f32 0.0, %v680
    %682 = vmatmul.f32.gmra.mxu0 %v622
    %v683 = vpop.f32.mrf.mxu0
    %v684 = vadd.f32 0.0, %v683
    %685 = vmatmul.f32.gmra.mxu0 %v625
    %v686 = vpop.f32.mrf.mxu0
    %v687 = vadd.f32 0.0, %v686
    %688 = vmatmul.f32.gmra.mxu0 %v628
    %v689 = vpop.f32.mrf.mxu0
    %v690 = vadd.f32 0.0, %v689
    %691 = vmatmul.f32.gmra.mxu0 %v631
    %v692 = vpop.f32.mrf.mxu0
    %v693 = vadd.f32 0.0, %v692
    %694 = vmatmul.f32.gmra.mxu0 %v634
    %v695 = vpop.f32.mrf.mxu0
    %v696 = vadd.f32 0.0, %v695
    %697 = vdwg.mxu0
    %698 = vmatpush.msra.mxu0 0.0
    %699 = vmatpush.msra.mxu0 0.0
    %700 = vmatpush.msra.mxu0 0.0
    %701 = vmatpush.msra.mxu0 0.0
    %702 = vmatpush.msra.mxu0 0.0
    %703 = vmatpush.msra.mxu0 0.0
    %704 = vmatpush.msra.mxu0 0.0
    %705 = vmatpush.msra.mxu0 0.0
    %706 = vmatpush.msra.mxu0 0.0
    %707 = vmatpush.msra.mxu0 %v640
    %708 = vmatpush.msra.mxu0 %v595
    %709 = vmatpush.msra.mxu0 %v592
    %710 = vmatpush.msra.mxu0 %v589
    %711 = vmatpush.msra.mxu0 %v586
    %712 = vmatpush.msra.mxu0 %v583
    %713 = vmatpush.msra.mxu0 %v580
    %714 = vmatmul.f32.gmra.mxu0 %v601
    %v715 = vpop.f32.mrf.mxu0
    %v716 = vadd.f32 0.0, %v715
    %717 = vmatmul.f32.gmra.mxu0 %v604
    %v718 = vpop.f32.mrf.mxu0
    %v719 = vadd.f32 0.0, %v718
    %720 = vmatmul.f32.gmra.mxu0 %v607
    %v721 = vpop.f32.mrf.mxu0
    %v722 = vadd.f32 0.0, %v721
    %723 = vmatmul.f32.gmra.mxu0 %v610
    %v724 = vpop.f32.mrf.mxu0
    %v725 = vadd.f32 0.0, %v724
    %726 = vmatmul.f32.gmra.mxu0 %v613
    %v727 = vpop.f32.mrf.mxu0
    %v728 = vadd.f32 0.0, %v727
    %729 = vmatmul.f32.gmra.mxu0 %v616
    %v730 = vpop.f32.mrf.mxu0
    %v731 = vadd.f32 0.0, %v730
    %732 = vmatmul.f32.gmra.mxu0 %v619
    %v733 = vpop.f32.mrf.mxu0
    %v734 = vadd.f32 0.0, %v733
    %735 = vmatmul.f32.gmra.mxu0 %v622
    %v736 = vpop.f32.mrf.mxu0
    %v737 = vadd.f32 0.0, %v736
    %738 = vmatmul.f32.gmra.mxu0 %v625
    %v739 = vpop.f32.mrf.mxu0
    %v740 = vadd.f32 0.0, %v739
    %741 = vmatmul.f32.gmra.mxu0 %v628
    %v742 = vpop.f32.mrf.mxu0
    %v743 = vadd.f32 0.0, %v742
    %744 = vmatmul.f32.gmra.mxu0 %v631
    %v745 = vpop.f32.mrf.mxu0
    %v746 = vadd.f32 0.0, %v745
    %747 = vmatmul.f32.gmra.mxu0 %v634
    %v748 = vpop.f32.mrf.mxu0
    %v749 = vadd.f32 0.0, %v748
    %750 = vdwg.mxu0
    %751 = vmatpush.msra.mxu0 0.0
    %752 = vmatpush.msra.mxu0 0.0
    %753 = vmatpush.msra.mxu0 0.0
    %754 = vmatpush.msra.mxu0 0.0
    %755 = vmatpush.msra.mxu0 0.0
    %756 = vmatpush.msra.mxu0 0.0
    %757 = vmatpush.msra.mxu0 0.0
    %758 = vmatpush.msra.mxu0 0.0
    %759 = vmatpush.msra.mxu0 0.0
    %760 = vmatpush.msra.mxu0 %v643
    %761 = vmatpush.msra.mxu0 %v596
    %762 = vmatpush.msra.mxu0 %v593
    %763 = vmatpush.msra.mxu0 %v590
    %764 = vmatpush.msra.mxu0 %v587
    %765 = vmatpush.msra.mxu0 %v584
    %766 = vmatpush.msra.mxu0 %v581
    %767 = vmatmul.f32.gmra.mxu0 %v601
    %v768 = vpop.f32.mrf.mxu0
    %v769 = vadd.f32 0.0, %v768
    %770 = vmatmul.f32.gmra.mxu0 %v604
    %v771 = vpop.f32.mrf.mxu0
    %v772 = vadd.f32 0.0, %v771
    %773 = vmatmul.f32.gmra.mxu0 %v607
    %v774 = vpop.f32.mrf.mxu0
    %v775 = vadd.f32 0.0, %v774
    %776 = vmatmul.f32.gmra.mxu0 %v610
    %v777 = vpop.f32.mrf.mxu0
    %v778 = vadd.f32 0.0, %v777
    %779 = vmatmul.f32.gmra.mxu0 %v613
    %v780 = vpop.f32.mrf.mxu0
    %v781 = vadd.f32 0.0, %v780
    %782 = vmatmul.f32.gmra.mxu0 %v616
    %v783 = vpop.f32.mrf.mxu0
    %v784 = vadd.f32 0.0, %v783
    %785 = vmatmul.f32.gmra.mxu0 %v619
    %v786 = vpop.f32.mrf.mxu0
    %v787 = vadd.f32 0.0, %v786
    %788 = vmatmul.f32.gmra.mxu0 %v622
    %v789 = vpop.f32.mrf.mxu0
    %v790 = vadd.f32 0.0, %v789
    %791 = vmatmul.f32.gmra.mxu0 %v625
    %v792 = vpop.f32.mrf.mxu0
    %v793 = vadd.f32 0.0, %v792
    %794 = vmatmul.f32.gmra.mxu0 %v628
    %v795 = vpop.f32.mrf.mxu0
    %v796 = vadd.f32 0.0, %v795
    %797 = vmatmul.f32.gmra.mxu0 %v631
    %v798 = vpop.f32.mrf.mxu0
    %v799 = vadd.f32 0.0, %v798
    %800 = vmatmul.f32.gmra.mxu0 %v634
    %v801 = vpop.f32.mrf.mxu0
    %v802 = vadd.f32 0.0, %v801
    %803 = vdwg.mxu0
    %v804 = vadd.f32 %v425, %v663
    %v805 = vadd.f32 %v478, %v716
    %v806 = vadd.f32 %v531, %v769
    %v807 = vadd.f32 %v428, %v666
    %v808 = vadd.f32 %v481, %v719
    %v809 = vadd.f32 %v534, %v772
    %v810 = vadd.f32 %v431, %v669
    %v811 = vadd.f32 %v484, %v722
    %v812 = vadd.f32 %v537, %v775
    %v813 = vadd.f32 %v434, %v672
    %v814 = vadd.f32 %v487, %v725
    %v815 = vadd.f32 %v540, %v778
    %v816 = vadd.f32 %v437, %v675
    %v817 = vadd.f32 %v490, %v728
    %v818 = vadd.f32 %v543, %v781
    %v819 = vadd.f32 %v440, %v678
    %v820 = vadd.f32 %v493, %v731
    %v821 = vadd.f32 %v546, %v784
    %v822 = vadd.f32 %v443, %v681
    %v823 = vadd.f32 %v496, %v734
    %v824 = vadd.f32 %v549, %v787
    %v825 = vadd.f32 %v446, %v684
    %v826 = vadd.f32 %v499, %v737
    %v827 = vadd.f32 %v552, %v790
    %v828 = vadd.f32 %v449, %v687
    %v829 = vadd.f32 %v502, %v740
    %v830 = vadd.f32 %v555, %v793
    %v831 = vadd.f32 %v452, %v690
    %v832 = vadd.f32 %v505, %v743
    %v833 = vadd.f32 %v558, %v796
    %v834 = vadd.f32 %v455, %v693
    %v835 = vadd.f32 %v508, %v746
    %v836 = vadd.f32 %v561, %v799
    %v837 = vadd.f32 %v458, %v696
    %v838 = vadd.f32 %v511, %v749
    %v839 = vadd.f32 %v564, %v802
    %v840 = vld [vmem:[%s2] sm:$0x7]
    %v842 = vperm.slane %v840, 0
    %v843 = vperm.slane %v840, 1
    %v844 = vperm.slane %v840, 2
    %v848 = vadd.f32 %v804, %v842
    %v849 = vadd.f32 %v805, %v843
    %v850 = vadd.f32 %v806, %v844
    %v851 = vadd.f32 %v807, %v842
    %v852 = vadd.f32 %v808, %v843
    %v853 = vadd.f32 %v809, %v844
    %v854 = vadd.f32 %v810, %v842
    %v855 = vadd.f32 %v811, %v843
    %v856 = vadd.f32 %v812, %v844
    %v857 = vadd.f32 %v813, %v842
    %v858 = vadd.f32 %v814, %v843
    %v859 = vadd.f32 %v815, %v844
    %v860 = vadd.f32 %v816, %v842
    %v861 = vadd.f32 %v817, %v843
    %v862 = vadd.f32 %v818, %v844
    %v863 = vadd.f32 %v819, %v842
    %v864 = vadd.f32 %v820, %v843
    %v865 = vadd.f32 %v821, %v844
    %v866 = vadd.f32 %v822, %v842
    %v867 = vadd.f32 %v823, %v843
    %v868 = vadd.f32 %v824, %v844
    %v869 = vadd.f32 %v825, %v842
    %v870 = vadd.f32 %v826, %v843
    %v871 = vadd.f32 %v827, %v844
    %v872 = vadd.f32 %v828, %v842
    %v873 = vadd.f32 %v829, %v843
    %v874 = vadd.f32 %v830, %v844
    %v875 = vadd.f32 %v831, %v842
    %v876 = vadd.f32 %v832, %v843
    %v877 = vadd.f32 %v833, %v844
    %v878 = vadd.f32 %v834, %v842
    %v879 = vadd.f32 %v835, %v843
    %v880 = vadd.f32 %v836, %v844
    %v881 = vadd.f32 %v837, %v842
    %v882 = vadd.f32 %v838, %v843
    %v883 = vadd.f32 %v839, %v844
    %v884 = vmax.f32 %v848, 0.0
    %v885 = vmax.f32 %v849, 0.0
    %v886 = vmax.f32 %v850, 0.0
    %v887 = vmax.f32 %v851, 0.0
    %v888 = vmax.f32 %v852, 0.0
    %v889 = vmax.f32 %v853, 0.0
    %v890 = vmax.f32 %v854, 0.0
    %v891 = vmax.f32 %v855, 0.0
    %v892 = vmax.f32 %v856, 0.0
    %v893 = vmax.f32 %v857, 0.0
    %v894 = vmax.f32 %v858, 0.0
    %v895 = vmax.f32 %v859, 0.0
    %v896 = vmax.f32 %v860, 0.0
    %v897 = vmax.f32 %v861, 0.0
    %v898 = vmax.f32 %v862, 0.0
    %v899 = vmax.f32 %v863, 0.0
    %v900 = vmax.f32 %v864, 0.0
    %v901 = vmax.f32 %v865, 0.0
    %v902 = vmax.f32 %v866, 0.0
    %v903 = vmax.f32 %v867, 0.0
    %v904 = vmax.f32 %v868, 0.0
    %v905 = vmax.f32 %v869, 0.0
    %v906 = vmax.f32 %v870, 0.0
    %v907 = vmax.f32 %v871, 0.0
    %v908 = vmax.f32 %v872, 0.0
    %v909 = vmax.f32 %v873, 0.0
    %v910 = vmax.f32 %v874, 0.0
    %v911 = vmax.f32 %v875, 0.0
    %v912 = vmax.f32 %v876, 0.0
    %v913 = vmax.f32 %v877, 0.0
    %v914 = vmax.f32 %v878, 0.0
    %v915 = vmax.f32 %v879, 0.0
    %v916 = vmax.f32 %v880, 0.0
    %v917 = vmax.f32 %v881, 0.0
    %v918 = vmax.f32 %v882, 0.0
    %v919 = vmax.f32 %v883, 0.0
    %v920 = vld [vmem:[#allocation2] sm:$0xff]
    %v921 = vld [vmem:[#allocation2 + $0x8] sm:$0xff]
    %v922 = vld [vmem:[#allocation2 + $0x10] sm:$0xff]
    %v923 = vld [vmem:[#allocation2 + $0x18] sm:$0xff]
    %v924 = vld [vmem:[#allocation2 + $0x20] sm:$0xff]
    %v925 = vld [vmem:[#allocation2 + $0x28] sm:$0xff]
    %vm926 = vcmask 785408
    %v928 = vsel %vm926, %v920, 0
    %v931 = vsel %vm926, %v921, 0
    %v934 = vsel %vm926, %v922, 0
    %v937 = vsel %vm926, %v923, 0
    %v940 = vsel %vm926, %v924, 0
    %v943 = vsel %vm926, %v925, 0
    %945 = vmatpush.msra.mxu0 0.0
    %946 = vmatpush.msra.mxu0 0.0
    %947 = vmatpush.msra.mxu0 0.0
    %948 = vmatpush.msra.mxu0 0.0
    %949 = vmatpush.msra.mxu0 %v917
    %950 = vmatpush.msra.mxu0 %v914
    %951 = vmatpush.msra.mxu0 %v911
    %952 = vmatpush.msra.mxu0 %v908
    %953 = vmatpush.msra.mxu0 %v905
    %954 = vmatpush.msra.mxu0 %v902
    %955 = vmatpush.msra.mxu0 %v899
    %956 = vmatpush.msra.mxu0 %v896
    %957 = vmatpush.msra.mxu0 %v893
    %958 = vmatpush.msra.mxu0 %v890
    %959 = vmatpush.msra.mxu0 %v887
    %960 = vmatpush.msra.mxu0 %v884
    %961 = vmatmul.f32.gmra.mxu0 %v928
    %v962 = vpop.f32.mrf.mxu0
    %v963 = vadd.f32 0.0, %v962
    %964 = vmatmul.f32.gmra.mxu0 %v931
    %v965 = vpop.f32.mrf.mxu0
    %v966 = vadd.f32 0.0, %v965
    %967 = vmatmul.f32.gmra.mxu0 %v934
    %v968 = vpop.f32.mrf.mxu0
    %v969 = vadd.f32 0.0, %v968
    %970 = vmatmul.f32.gmra.mxu0 %v937
    %v971 = vpop.f32.mrf.mxu0
    %v972 = vadd.f32 0.0, %v971
    %973 = vmatmul.f32.gmra.mxu0 %v940
    %v974 = vpop.f32.mrf.mxu0
    %v975 = vadd.f32 0.0, %v974
    %976 = vmatmul.f32.gmra.mxu0 %v943
    %v977 = vpop.f32.mrf.mxu0
    %v978 = vadd.f32 0.0, %v977
    %979 = vdwg.mxu0
    %980 = vmatpush.msra.mxu0 0.0
    %981 = vmatpush.msra.mxu0 0.0
    %982 = vmatpush.msra.mxu0 0.0
    %983 = vmatpush.msra.mxu0 0.0
    %984 = vmatpush.msra.mxu0 %v918
    %985 = vmatpush.msra.mxu0 %v915
    %986 = vmatpush.msra.mxu0 %v912
    %987 = vmatpush.msra.mxu0 %v909
    %988 = vmatpush.msra.mxu0 %v906
    %989 = vmatpush.msra.mxu0 %v903
    %990 = vmatpush.msra.mxu0 %v900
    %991 = vmatpush.msra.mxu0 %v897
    %992 = vmatpush.msra.mxu0 %v894
    %993 = vmatpush.msra.mxu0 %v891
    %994 = vmatpush.msra.mxu0 %v888
    %995 = vmatpush.msra.mxu0 %v885
    %996 = vmatmul.f32.gmra.mxu0 %v928
    %v997 = vpop.f32.mrf.mxu0
    %v998 = vadd.f32 0.0, %v997
    %999 = vmatmul.f32.gmra.mxu0 %v931
    %v1000 = vpop.f32.mrf.mxu0
    %v1001 = vadd.f32 0.0, %v1000
    %1002 = vmatmul.f32.gmra.mxu0 %v934
    %v1003 = vpop.f32.mrf.mxu0
    %v1004 = vadd.f32 0.0, %v1003
    %1005 = vmatmul.f32.gmra.mxu0 %v937
    %v1006 = vpop.f32.mrf.mxu0
    %v1007 = vadd.f32 0.0, %v1006
    %1008 = vmatmul.f32.gmra.mxu0 %v940
    %v1009 = vpop.f32.mrf.mxu0
    %v1010 = vadd.f32 0.0, %v1009
    %1011 = vmatmul.f32.gmra.mxu0 %v943
    %v1012 = vpop.f32.mrf.mxu0
    %v1013 = vadd.f32 0.0, %v1012
    %1014 = vdwg.mxu0
    %1015 = vmatpush.msra.mxu0 0.0
    %1016 = vmatpush.msra.mxu0 0.0
    %1017 = vmatpush.msra.mxu0 0.0
    %1018 = vmatpush.msra.mxu0 0.0
    %1019 = vmatpush.msra.mxu0 %v919
    %1020 = vmatpush.msra.mxu0 %v916
    %1021 = vmatpush.msra.mxu0 %v913
    %1022 = vmatpush.msra.mxu0 %v910
    %1023 = vmatpush.msra.mxu0 %v907
    %1024 = vmatpush.msra.mxu0 %v904
    %1025 = vmatpush.msra.mxu0 %v901
    %1026 = vmatpush.msra.mxu0 %v898
    %1027 = vmatpush.msra.mxu0 %v895
    %1028 = vmatpush.msra.mxu0 %v892
    %1029 = vmatpush.msra.mxu0 %v889
    %1030 = vmatpush.msra.mxu0 %v886
    %1031 = vmatmul.f32.gmra.mxu0 %v928
    %v1032 = vpop.f32.mrf.mxu0
    %v1033 = vadd.f32 0.0, %v1032
    %1034 = vmatmul.f32.gmra.mxu0 %v931
    %v1035 = vpop.f32.mrf.mxu0
    %v1036 = vadd.f32 0.0, %v1035
    %1037 = vmatmul.f32.gmra.mxu0 %v934
    %v1038 = vpop.f32.mrf.mxu0
    %v1039 = vadd.f32 0.0, %v1038
    %1040 = vmatmul.f32.gmra.mxu0 %v937
    %v1041 = vpop.f32.mrf.mxu0
    %v1042 = vadd.f32 0.0, %v1041
    %1043 = vmatmul.f32.gmra.mxu0 %v940
    %v1044 = vpop.f32.mrf.mxu0
    %v1045 = vadd.f32 0.0, %v1044
    %1046 = vmatmul.f32.gmra.mxu0 %v943
    %v1047 = vpop.f32.mrf.mxu0
    %v1048 = vadd.f32 0.0, %v1047
    %1049 = vdwg.mxu0
    %s1050 = scalar_lea.vmem [#allocation2], 48
    %v1051 = vld [vmem:[%s1050] sm:$0xff]
    %v1052 = vld [vmem:[%s1050 + $0x8] sm:$0xff]
    %v1053 = vld [vmem:[%s1050 + $0x10] sm:$0xff]
    %v1054 = vld [vmem:[%s1050 + $0x18] sm:$0xff]
    %v1055 = vld [vmem:[%s1050 + $0x20] sm:$0xff]
    %v1056 = vld [vmem:[%s1050 + $0x28] sm:$0xff]
    %v1058 = vsel %vm926, %v1051, 0
    %v1061 = vsel %vm926, %v1052, 0
    %v1064 = vsel %vm926, %v1053, 0
    %v1067 = vsel %vm926, %v1054, 0
    %v1070 = vsel %vm926, %v1055, 0
    %v1073 = vsel %vm926, %v1056, 0
    %1075 = vmatpush.msra.mxu0 0.0
    %1076 = vmatpush.msra.mxu0 0.0
    %1077 = vmatpush.msra.mxu0 0.0
    %1078 = vmatpush.msra.mxu0 0.0
    %1079 = vmatpush.msra.mxu0 %v917
    %1080 = vmatpush.msra.mxu0 %v914
    %1081 = vmatpush.msra.mxu0 %v911
    %1082 = vmatpush.msra.mxu0 %v908
    %1083 = vmatpush.msra.mxu0 %v905
    %1084 = vmatpush.msra.mxu0 %v902
    %1085 = vmatpush.msra.mxu0 %v899
    %1086 = vmatpush.msra.mxu0 %v896
    %1087 = vmatpush.msra.mxu0 %v893
    %1088 = vmatpush.msra.mxu0 %v890
    %1089 = vmatpush.msra.mxu0 %v887
    %1090 = vmatpush.msra.mxu0 %v884
    %1091 = vmatmul.f32.gmra.mxu0 %v1058
    %v1092 = vpop.f32.mrf.mxu0
    %v1093 = vadd.f32 0.0, %v1092
    %1094 = vmatmul.f32.gmra.mxu0 %v1061
    %v1095 = vpop.f32.mrf.mxu0
    %v1096 = vadd.f32 0.0, %v1095
    %1097 = vmatmul.f32.gmra.mxu0 %v1064
    %v1098 = vpop.f32.mrf.mxu0
    %v1099 = vadd.f32 0.0, %v1098
    %1100 = vmatmul.f32.gmra.mxu0 %v1067
    %v1101 = vpop.f32.mrf.mxu0
    %v1102 = vadd.f32 0.0, %v1101
    %1103 = vmatmul.f32.gmra.mxu0 %v1070
    %v1104 = vpop.f32.mrf.mxu0
    %v1105 = vadd.f32 0.0, %v1104
    %1106 = vmatmul.f32.gmra.mxu0 %v1073
    %v1107 = vpop.f32.mrf.mxu0
    %v1108 = vadd.f32 0.0, %v1107
    %1109 = vdwg.mxu0
    %1110 = vmatpush.msra.mxu0 0.0
    %1111 = vmatpush.msra.mxu0 0.0
    %1112 = vmatpush.msra.mxu0 0.0
    %1113 = vmatpush.msra.mxu0 0.0
    %1114 = vmatpush.msra.mxu0 %v918
    %1115 = vmatpush.msra.mxu0 %v915
    %1116 = vmatpush.msra.mxu0 %v912
    %1117 = vmatpush.msra.mxu0 %v909
    %1118 = vmatpush.msra.mxu0 %v906
    %1119 = vmatpush.msra.mxu0 %v903
    %1120 = vmatpush.msra.mxu0 %v900
    %1121 = vmatpush.msra.mxu0 %v897
    %1122 = vmatpush.msra.mxu0 %v894
    %1123 = vmatpush.msra.mxu0 %v891
    %1124 = vmatpush.msra.mxu0 %v888
    %1125 = vmatpush.msra.mxu0 %v885
    %1126 = vmatmul.f32.gmra.mxu0 %v1058
    %v1127 = vpop.f32.mrf.mxu0
    %v1128 = vadd.f32 0.0, %v1127
    %1129 = vmatmul.f32.gmra.mxu0 %v1061
    %v1130 = vpop.f32.mrf.mxu0
    %v1131 = vadd.f32 0.0, %v1130
    %1132 = vmatmul.f32.gmra.mxu0 %v1064
    %v1133 = vpop.f32.mrf.mxu0
    %v1134 = vadd.f32 0.0, %v1133
    %1135 = vmatmul.f32.gmra.mxu0 %v1067
    %v1136 = vpop.f32.mrf.mxu0
    %v1137 = vadd.f32 0.0, %v1136
    %1138 = vmatmul.f32.gmra.mxu0 %v1070
    %v1139 = vpop.f32.mrf.mxu0
    %v1140 = vadd.f32 0.0, %v1139
    %1141 = vmatmul.f32.gmra.mxu0 %v1073
    %v1142 = vpop.f32.mrf.mxu0
    %v1143 = vadd.f32 0.0, %v1142
    %1144 = vdwg.mxu0
    %1145 = vmatpush.msra.mxu0 0.0
    %1146 = vmatpush.msra.mxu0 0.0
    %1147 = vmatpush.msra.mxu0 0.0
    %1148 = vmatpush.msra.mxu0 0.0
    %1149 = vmatpush.msra.mxu0 %v919
    %1150 = vmatpush.msra.mxu0 %v916
    %1151 = vmatpush.msra.mxu0 %v913
    %1152 = vmatpush.msra.mxu0 %v910
    %1153 = vmatpush.msra.mxu0 %v907
    %1154 = vmatpush.msra.mxu0 %v904
    %1155 = vmatpush.msra.mxu0 %v901
    %1156 = vmatpush.msra.mxu0 %v898
    %1157 = vmatpush.msra.mxu0 %v895
    %1158 = vmatpush.msra.mxu0 %v892
    %1159 = vmatpush.msra.mxu0 %v889
    %1160 = vmatpush.msra.mxu0 %v886
    %1161 = vmatmul.f32.gmra.mxu0 %v1058
    %v1162 = vpop.f32.mrf.mxu0
    %v1163 = vadd.f32 0.0, %v1162
    %1164 = vmatmul.f32.gmra.mxu0 %v1061
    %v1165 = vpop.f32.mrf.mxu0
    %v1166 = vadd.f32 0.0, %v1165
    %1167 = vmatmul.f32.gmra.mxu0 %v1064
    %v1168 = vpop.f32.mrf.mxu0
    %v1169 = vadd.f32 0.0, %v1168
    %1170 = vmatmul.f32.gmra.mxu0 %v1067
    %v1171 = vpop.f32.mrf.mxu0
    %v1172 = vadd.f32 0.0, %v1171
    %1173 = vmatmul.f32.gmra.mxu0 %v1070
    %v1174 = vpop.f32.mrf.mxu0
    %v1175 = vadd.f32 0.0, %v1174
    %1176 = vmatmul.f32.gmra.mxu0 %v1073
    %v1177 = vpop.f32.mrf.mxu0
    %v1178 = vadd.f32 0.0, %v1177
    %1179 = vdwg.mxu0
    %v1180 = vmax.f32 %v963, %v1093
    %v1181 = vmax.f32 %v998, %v1128
    %v1182 = vmax.f32 %v1033, %v1163
    %v1183 = vmax.f32 %v966, %v1096
    %v1184 = vmax.f32 %v1001, %v1131
    %v1185 = vmax.f32 %v1036, %v1166
    %v1186 = vmax.f32 %v969, %v1099
    %v1187 = vmax.f32 %v1004, %v1134
    %v1188 = vmax.f32 %v1039, %v1169
    %v1189 = vmax.f32 %v972, %v1102
    %v1190 = vmax.f32 %v1007, %v1137
    %v1191 = vmax.f32 %v1042, %v1172
    %v1192 = vmax.f32 %v975, %v1105
    %v1193 = vmax.f32 %v1010, %v1140
    %v1194 = vmax.f32 %v1045, %v1175
    %v1195 = vmax.f32 %v978, %v1108
    %v1196 = vmax.f32 %v1013, %v1143
    %v1197 = vmax.f32 %v1048, %v1178
    %v1198 = vld [vmem:[%s4] sm:$0xff]
    %v1199 = vld [vmem:[%s4 + $0x8] sm:$0xff]
    %v1200 = vld [vmem:[%s4 + $0x10] sm:$0xff]
    %v1201 = vld [vmem:[%s4 + $0x18] sm:$0xff]
    %v1202 = vld [vmem:[%s4 + $0x20] sm:$0xff]
    %v1203 = vld [vmem:[%s4 + $0x28] sm:$0xff]
    %v1204 = vld [vmem:[%s4 + $0x30] sm:$0xff]
    %v1205 = vld [vmem:[%s4 + $0x38] sm:$0xff]
    %v1206 = vld [vmem:[%s4 + $0x40] sm:$0xff]
    %v1207 = vld [vmem:[%s4 + $0x48] sm:$0xff]
    %v1208 = vld [vmem:[%s4 + $0x50] sm:$0xff]
    %v1209 = vld [vmem:[%s4 + $0x58] sm:$0xff]
    %v1210 = vld [vmem:[%s4 + $0x60] sm:$0xff]
    %v1211 = vld [vmem:[%s4 + $0x68] sm:$0xff]
    %v1212 = vld [vmem:[%s4 + $0x70] sm:$0xff]
    %v1213 = vld [vmem:[%s4 + $0x78] sm:$0xff]
    %v1214 = vld [vmem:[%s4 + $0x80] sm:$0xff]
    %v1215 = vld [vmem:[%s4 + $0x88] sm:$0xff]
    %v1216 = vld [vmem:[%s4 + $0x90] sm:$0xff]
    %v1217 = vld [vmem:[%s4 + $0x98] sm:$0xff]
    %v1218 = vld [vmem:[%s4 + $0xa0] sm:$0xff]
    %v1219 = vld [vmem:[%s4 + $0xa8] sm:$0xff]
    %v1220 = vld [vmem:[%s4 + $0xb0] sm:$0xff]
    %v1221 = vld [vmem:[%s4 + $0xb8] sm:$0xff]
    %v1222 = vld [vmem:[%s4 + $0xc0] sm:$0xff]
    %v1223 = vld [vmem:[%s4 + $0xc8] sm:$0xff]
    %v1224 = vld [vmem:[%s4 + $0xd0] sm:$0xff]
    %v1225 = vld [vmem:[%s4 + $0xd8] sm:$0xff]
    %v1226 = vld [vmem:[%s4 + $0xe0] sm:$0xff]
    %v1227 = vld [vmem:[%s4 + $0xe8] sm:$0xff]
    %v1228 = vld [vmem:[%s4 + $0xf0] sm:$0xff]
    %v1229 = vld [vmem:[%s4 + $0xf8] sm:$0xff]
    %v1230 = vld [vmem:[%s4 + $0x100] sm:$0xff]
    %v1231 = vld [vmem:[%s4 + $0x108] sm:$0xff]
    %v1232 = vld [vmem:[%s4 + $0x110] sm:$0xff]
    %v1233 = vld [vmem:[%s4 + $0x118] sm:$0xff]
    %v1234 = vld [vmem:[%s4 + $0x120] sm:$0xff]
    %v1235 = vld [vmem:[%s4 + $0x128] sm:$0xff]
    %v1236 = vld [vmem:[%s4 + $0x130] sm:$0xff]
    %v1237 = vld [vmem:[%s4 + $0x138] sm:$0xff]
    %v1238 = vld [vmem:[%s4 + $0x140] sm:$0xff]
    %v1239 = vld [vmem:[%s4 + $0x148] sm:$0xff]
    %v1240 = vld [vmem:[%s4 + $0x150] sm:$0xff]
    %v1241 = vld [vmem:[%s4 + $0x158] sm:$0xff]
    %v1242 = vld [vmem:[%s4 + $0x160] sm:$0xff]
    %v1243 = vld [vmem:[%s4 + $0x168] sm:$0xff]
    %v1244 = vld [vmem:[%s4 + $0x170] sm:$0xff]
    %v1245 = vld [vmem:[%s4 + $0x178] sm:$0xff]
    %v1246 = vld [vmem:[%s4 + $0x180] sm:$0xff]
    %v1247 = vld [vmem:[%s4 + $0x188] sm:$0xff]
    %v1248 = vld [vmem:[%s4 + $0x190] sm:$0xff]
    %v1249 = vld [vmem:[%s4 + $0x198] sm:$0xff]
    %v1250 = vld [vmem:[%s4 + $0x1a0] sm:$0xff]
    %v1251 = vld [vmem:[%s4 + $0x1a8] sm:$0xff]
    %v1252 = vld [vmem:[%s4 + $0x1b0] sm:$0xff]
    %v1253 = vld [vmem:[%s4 + $0x1b8] sm:$0xff]
    %v1254 = vld [vmem:[%s4 + $0x1c0] sm:$0xff]
    %v1255 = vld [vmem:[%s4 + $0x1c8] sm:$0xff]
    %v1256 = vld [vmem:[%s4 + $0x1d0] sm:$0xff]
    %v1257 = vld [vmem:[%s4 + $0x1d8] sm:$0xff]
    %v1258 = vld [vmem:[%s4 + $0x1e0] sm:$0xff]
    %v1259 = vld [vmem:[%s4 + $0x1e8] sm:$0xff]
    %v1260 = vld [vmem:[%s4 + $0x1f0] sm:$0xff]
    %v1261 = vld [vmem:[%s4 + $0x1f8] sm:$0xff]
    %v1262 = vld [vmem:[%s4 + $0x200] sm:$0xff]
    %v1263 = vld [vmem:[%s4 + $0x208] sm:$0xff]
    %v1264 = vld [vmem:[%s4 + $0x210] sm:$0xff]
    %v1265 = vld [vmem:[%s4 + $0x218] sm:$0xff]
    %v1266 = vld [vmem:[%s4 + $0x220] sm:$0xff]
    %v1267 = vld [vmem:[%s4 + $0x228] sm:$0xff]
    %v1268 = vld [vmem:[%s4 + $0x230] sm:$0xff]
    %v1269 = vld [vmem:[%s4 + $0x238] sm:$0xff]
    %vm1270 = vcmask 261120
    %v1272 = vsel %vm1270, %v1182, 0
    %v1275 = vsel %vm1270, %v1185, 0
    %v1278 = vsel %vm1270, %v1188, 0
    %v1281 = vsel %vm1270, %v1191, 0
    %v1284 = vsel %vm1270, %v1194, 0
    %v1287 = vsel %vm1270, %v1197, 0
    %1289 = vmatpush.msra.mxu0 %v1228
    %1290 = vmatpush.msra.mxu0 %v1226
    %1291 = vmatpush.msra.mxu0 %v1224
    %1292 = vmatpush.msra.mxu0 %v1222
    %1293 = vmatpush.msra.mxu0 %v1220
    %1294 = vmatpush.msra.mxu0 %v1218
    %1295 = vmatpush.msra.mxu0 %v1216
    %1296 = vmatpush.msra.mxu0 %v1214
    %1297 = vmatpush.msra.mxu0 %v1212
    %1298 = vmatpush.msra.mxu0 %v1210
    %1299 = vmatpush.msra.mxu0 %v1208
    %1300 = vmatpush.msra.mxu0 %v1206
    %1301 = vmatpush.msra.mxu0 %v1204
    %1302 = vmatpush.msra.mxu0 %v1202
    %1303 = vmatpush.msra.mxu0 %v1200
    %1304 = vmatpush.msra.mxu0 %v1198
    %1305 = vmatmul.f32.gmra.mxu0 %v1180
    %v1306 = vpop.f32.mrf.mxu0
    %v1307 = vadd.f32 0.0, %v1306
    %1308 = vmatmul.f32.gmra.mxu0 %v1183
    %v1309 = vpop.f32.mrf.mxu0
    %v1310 = vadd.f32 0.0, %v1309
    %1311 = vmatmul.f32.gmra.mxu0 %v1186
    %v1312 = vpop.f32.mrf.mxu0
    %v1313 = vadd.f32 0.0, %v1312
    %1314 = vmatmul.f32.gmra.mxu0 %v1189
    %v1315 = vpop.f32.mrf.mxu0
    %v1316 = vadd.f32 0.0, %v1315
    %1317 = vmatmul.f32.gmra.mxu0 %v1192
    %v1318 = vpop.f32.mrf.mxu0
    %v1319 = vadd.f32 0.0, %v1318
    %1320 = vmatmul.f32.gmra.mxu0 %v1195
    %v1321 = vpop.f32.mrf.mxu0
    %v1322 = vadd.f32 0.0, %v1321
    %1323 = vdwg.mxu0
    %1324 = vmatpush.msra.mxu0 %v1260
    %1325 = vmatpush.msra.mxu0 %v1258
    %1326 = vmatpush.msra.mxu0 %v1256
    %1327 = vmatpush.msra.mxu0 %v1254
    %1328 = vmatpush.msra.mxu0 %v1252
    %1329 = vmatpush.msra.mxu0 %v1250
    %1330 = vmatpush.msra.mxu0 %v1248
    %1331 = vmatpush.msra.mxu0 %v1246
    %1332 = vmatpush.msra.mxu0 %v1244
    %1333 = vmatpush.msra.mxu0 %v1242
    %1334 = vmatpush.msra.mxu0 %v1240
    %1335 = vmatpush.msra.mxu0 %v1238
    %1336 = vmatpush.msra.mxu0 %v1236
    %1337 = vmatpush.msra.mxu0 %v1234
    %1338 = vmatpush.msra.mxu0 %v1232
    %1339 = vmatpush.msra.mxu0 %v1230
    %1340 = vmatmul.f32.gmra.mxu0 %v1181
    %v1341 = vpop.f32.mrf.mxu0
    %v1342 = vadd.f32 %v1307, %v1341
    %1343 = vmatmul.f32.gmra.mxu0 %v1184
    %v1344 = vpop.f32.mrf.mxu0
    %v1345 = vadd.f32 %v1310, %v1344
    %1346 = vmatmul.f32.gmra.mxu0 %v1187
    %v1347 = vpop.f32.mrf.mxu0
    %v1348 = vadd.f32 %v1313, %v1347
    %1349 = vmatmul.f32.gmra.mxu0 %v1190
    %v1350 = vpop.f32.mrf.mxu0
    %v1351 = vadd.f32 %v1316, %v1350
    %1352 = vmatmul.f32.gmra.mxu0 %v1193
    %v1353 = vpop.f32.mrf.mxu0
    %v1354 = vadd.f32 %v1319, %v1353
    %1355 = vmatmul.f32.gmra.mxu0 %v1196
    %v1356 = vpop.f32.mrf.mxu0
    %v1357 = vadd.f32 %v1322, %v1356
    %1358 = vdwg.mxu0
    %1359 = vmatpush.msra.mxu0 0.0
    %1360 = vmatpush.msra.mxu0 0.0
    %1361 = vmatpush.msra.mxu0 0.0
    %1362 = vmatpush.msra.mxu0 0.0
    %1363 = vmatpush.msra.mxu0 0.0
    %1364 = vmatpush.msra.mxu0 0.0
    %1365 = vmatpush.msra.mxu0 0.0
    %1366 = vmatpush.msra.mxu0 0.0
    %1367 = vmatpush.msra.mxu0 0.0
    %1368 = vmatpush.msra.mxu0 0.0
    %1369 = vmatpush.msra.mxu0 0.0
    %1370 = vmatpush.msra.mxu0 0.0
    %1371 = vmatpush.msra.mxu0 %v1268
    %1372 = vmatpush.msra.mxu0 %v1266
    %1373 = vmatpush.msra.mxu0 %v1264
    %1374 = vmatpush.msra.mxu0 %v1262
    %1375 = vmatmul.f32.gmra.mxu0 %v1272
    %v1376 = vpop.f32.mrf.mxu0
    %v1377 = vadd.f32 %v1342, %v1376
    %1378 = vmatmul.f32.gmra.mxu0 %v1275
    %v1379 = vpop.f32.mrf.mxu0
    %v1380 = vadd.f32 %v1345, %v1379
    %1381 = vmatmul.f32.gmra.mxu0 %v1278
    %v1382 = vpop.f32.mrf.mxu0
    %v1383 = vadd.f32 %v1348, %v1382
    %1384 = vmatmul.f32.gmra.mxu0 %v1281
    %v1385 = vpop.f32.mrf.mxu0
    %v1386 = vadd.f32 %v1351, %v1385
    %1387 = vmatmul.f32.gmra.mxu0 %v1284
    %v1388 = vpop.f32.mrf.mxu0
    %v1389 = vadd.f32 %v1354, %v1388
    %1390 = vmatmul.f32.gmra.mxu0 %v1287
    %v1391 = vpop.f32.mrf.mxu0
    %v1392 = vadd.f32 %v1357, %v1391
    %1393 = vdwg.mxu0
    %1394 = vmatpush.msra.mxu0 %v1229
    %1395 = vmatpush.msra.mxu0 %v1227
    %1396 = vmatpush.msra.mxu0 %v1225
    %1397 = vmatpush.msra.mxu0 %v1223
    %1398 = vmatpush.msra.mxu0 %v1221
    %1399 = vmatpush.msra.mxu0 %v1219
    %1400 = vmatpush.msra.mxu0 %v1217
    %1401 = vmatpush.msra.mxu0 %v1215
    %1402 = vmatpush.msra.mxu0 %v1213
    %1403 = vmatpush.msra.mxu0 %v1211
    %1404 = vmatpush.msra.mxu0 %v1209
    %1405 = vmatpush.msra.mxu0 %v1207
    %1406 = vmatpush.msra.mxu0 %v1205
    %1407 = vmatpush.msra.mxu0 %v1203
    %1408 = vmatpush.msra.mxu0 %v1201
    %1409 = vmatpush.msra.mxu0 %v1199
    %1410 = vmatmul.f32.gmra.mxu0 %v1180
    %v1411 = vpop.f32.mrf.mxu0
    %v1412 = vadd.f32 0.0, %v1411
    %1413 = vmatmul.f32.gmra.mxu0 %v1183
    %v1414 = vpop.f32.mrf.mxu0
    %v1415 = vadd.f32 0.0, %v1414
    %1416 = vmatmul.f32.gmra.mxu0 %v1186
    %v1417 = vpop.f32.mrf.mxu0
    %v1418 = vadd.f32 0.0, %v1417
    %1419 = vmatmul.f32.gmra.mxu0 %v1189
    %v1420 = vpop.f32.mrf.mxu0
    %v1421 = vadd.f32 0.0, %v1420
    %1422 = vmatmul.f32.gmra.mxu0 %v1192
    %v1423 = vpop.f32.mrf.mxu0
    %v1424 = vadd.f32 0.0, %v1423
    %1425 = vmatmul.f32.gmra.mxu0 %v1195
    %v1426 = vpop.f32.mrf.mxu0
    %v1427 = vadd.f32 0.0, %v1426
    %1428 = vdwg.mxu0
    %1429 = vmatpush.msra.mxu0 %v1261
    %1430 = vmatpush.msra.mxu0 %v1259
    %1431 = vmatpush.msra.mxu0 %v1257
    %1432 = vmatpush.msra.mxu0 %v1255
    %1433 = vmatpush.msra.mxu0 %v1253
    %1434 = vmatpush.msra.mxu0 %v1251
    %1435 = vmatpush.msra.mxu0 %v1249
    %1436 = vmatpush.msra.mxu0 %v1247
    %1437 = vmatpush.msra.mxu0 %v1245
    %1438 = vmatpush.msra.mxu0 %v1243
    %1439 = vmatpush.msra.mxu0 %v1241
    %1440 = vmatpush.msra.mxu0 %v1239
    %1441 = vmatpush.msra.mxu0 %v1237
    %1442 = vmatpush.msra.mxu0 %v1235
    %1443 = vmatpush.msra.mxu0 %v1233
    %1444 = vmatpush.msra.mxu0 %v1231
    %1445 = vmatmul.f32.gmra.mxu0 %v1181
    %v1446 = vpop.f32.mrf.mxu0
    %v1447 = vadd.f32 %v1412, %v1446
    %1448 = vmatmul.f32.gmra.mxu0 %v1184
    %v1449 = vpop.f32.mrf.mxu0
    %v1450 = vadd.f32 %v1415, %v1449
    %1451 = vmatmul.f32.gmra.mxu0 %v1187
    %v1452 = vpop.f32.mrf.mxu0
    %v1453 = vadd.f32 %v1418, %v1452
    %1454 = vmatmul.f32.gmra.mxu0 %v1190
    %v1455 = vpop.f32.mrf.mxu0
    %v1456 = vadd.f32 %v1421, %v1455
    %1457 = vmatmul.f32.gmra.mxu0 %v1193
    %v1458 = vpop.f32.mrf.mxu0
    %v1459 = vadd.f32 %v1424, %v1458
    %1460 = vmatmul.f32.gmra.mxu0 %v1196
    %v1461 = vpop.f32.mrf.mxu0
    %v1462 = vadd.f32 %v1427, %v1461
    %1463 = vdwg.mxu0
    %1464 = vmatpush.msra.mxu0 0.0
    %1465 = vmatpush.msra.mxu0 0.0
    %1466 = vmatpush.msra.mxu0 0.0
    %1467 = vmatpush.msra.mxu0 0.0
    %1468 = vmatpush.msra.mxu0 0.0
    %1469 = vmatpush.msra.mxu0 0.0
    %1470 = vmatpush.msra.mxu0 0.0
    %1471 = vmatpush.msra.mxu0 0.0
    %1472 = vmatpush.msra.mxu0 0.0
    %1473 = vmatpush.msra.mxu0 0.0
    %1474 = vmatpush.msra.mxu0 0.0
    %1475 = vmatpush.msra.mxu0 0.0
    %1476 = vmatpush.msra.mxu0 %v1269
    %1477 = vmatpush.msra.mxu0 %v1267
    %1478 = vmatpush.msra.mxu0 %v1265
    %1479 = vmatpush.msra.mxu0 %v1263
    %1480 = vmatmul.f32.gmra.mxu0 %v1272
    %v1481 = vpop.f32.mrf.mxu0
    %v1482 = vadd.f32 %v1447, %v1481
    %1483 = vmatmul.f32.gmra.mxu0 %v1275
    %v1484 = vpop.f32.mrf.mxu0
    %v1485 = vadd.f32 %v1450, %v1484
    %1486 = vmatmul.f32.gmra.mxu0 %v1278
    %v1487 = vpop.f32.mrf.mxu0
    %v1488 = vadd.f32 %v1453, %v1487
    %1489 = vmatmul.f32.gmra.mxu0 %v1281
    %v1490 = vpop.f32.mrf.mxu0
    %v1491 = vadd.f32 %v1456, %v1490
    %1492 = vmatmul.f32.gmra.mxu0 %v1284
    %v1493 = vpop.f32.mrf.mxu0
    %v1494 = vadd.f32 %v1459, %v1493
    %1495 = vmatmul.f32.gmra.mxu0 %v1287
    %v1496 = vpop.f32.mrf.mxu0
    %v1497 = vadd.f32 %v1462, %v1496
    %1498 = vdwg.mxu0
    %s1499 = scalar_lea.vmem %s4, 576
    %v1500 = vld [vmem:[%s1499] sm:$0xff]
    %v1501 = vld [vmem:[%s1499 + $0x8] sm:$0xff]
    %v1502 = vld [vmem:[%s1499 + $0x10] sm:$0xff]
    %v1503 = vld [vmem:[%s1499 + $0x18] sm:$0xff]
    %v1504 = vld [vmem:[%s1499 + $0x20] sm:$0xff]
    %v1505 = vld [vmem:[%s1499 + $0x28] sm:$0xff]
    %v1506 = vld [vmem:[%s1499 + $0x30] sm:$0xff]
    %v1507 = vld [vmem:[%s1499 + $0x38] sm:$0xff]
    %v1508 = vld [vmem:[%s1499 + $0x40] sm:$0xff]
    %v1509 = vld [vmem:[%s1499 + $0x48] sm:$0xff]
    %v1510 = vld [vmem:[%s1499 + $0x50] sm:$0xff]
    %v1511 = vld [vmem:[%s1499 + $0x58] sm:$0xff]
    %v1512 = vld [vmem:[%s1499 + $0x60] sm:$0xff]
    %v1513 = vld [vmem:[%s1499 + $0x68] sm:$0xff]
    %v1514 = vld [vmem:[%s1499 + $0x70] sm:$0xff]
    %v1515 = vld [vmem:[%s1499 + $0x78] sm:$0xff]
    %v1516 = vld [vmem:[%s1499 + $0x80] sm:$0xff]
    %v1517 = vld [vmem:[%s1499 + $0x88] sm:$0xff]
    %v1518 = vld [vmem:[%s1499 + $0x90] sm:$0xff]
    %v1519 = vld [vmem:[%s1499 + $0x98] sm:$0xff]
    %v1520 = vld [vmem:[%s1499 + $0xa0] sm:$0xff]
    %v1521 = vld [vmem:[%s1499 + $0xa8] sm:$0xff]
    %v1522 = vld [vmem:[%s1499 + $0xb0] sm:$0xff]
    %v1523 = vld [vmem:[%s1499 + $0xb8] sm:$0xff]
    %v1524 = vld [vmem:[%s1499 + $0xc0] sm:$0xff]
    %v1525 = vld [vmem:[%s1499 + $0xc8] sm:$0xff]
    %v1526 = vld [vmem:[%s1499 + $0xd0] sm:$0xff]
    %v1527 = vld [vmem:[%s1499 + $0xd8] sm:$0xff]
    %v1528 = vld [vmem:[%s1499 + $0xe0] sm:$0xff]
    %v1529 = vld [vmem:[%s1499 + $0xe8] sm:$0xff]
    %v1530 = vld [vmem:[%s1499 + $0xf0] sm:$0xff]
    %v1531 = vld [vmem:[%s1499 + $0xf8] sm:$0xff]
    %v1532 = vld [vmem:[%s1499 + $0x100] sm:$0xff]
    %v1533 = vld [vmem:[%s1499 + $0x108] sm:$0xff]
    %v1534 = vld [vmem:[%s1499 + $0x110] sm:$0xff]
    %v1535 = vld [vmem:[%s1499 + $0x118] sm:$0xff]
    %v1536 = vld [vmem:[%s1499 + $0x120] sm:$0xff]
    %v1537 = vld [vmem:[%s1499 + $0x128] sm:$0xff]
    %v1538 = vld [vmem:[%s1499 + $0x130] sm:$0xff]
    %v1539 = vld [vmem:[%s1499 + $0x138] sm:$0xff]
    %v1540 = vld [vmem:[%s1499 + $0x140] sm:$0xff]
    %v1541 = vld [vmem:[%s1499 + $0x148] sm:$0xff]
    %v1542 = vld [vmem:[%s1499 + $0x150] sm:$0xff]
    %v1543 = vld [vmem:[%s1499 + $0x158] sm:$0xff]
    %v1544 = vld [vmem:[%s1499 + $0x160] sm:$0xff]
    %v1545 = vld [vmem:[%s1499 + $0x168] sm:$0xff]
    %v1546 = vld [vmem:[%s1499 + $0x170] sm:$0xff]
    %v1547 = vld [vmem:[%s1499 + $0x178] sm:$0xff]
    %v1548 = vld [vmem:[%s1499 + $0x180] sm:$0xff]
    %v1549 = vld [vmem:[%s1499 + $0x188] sm:$0xff]
    %v1550 = vld [vmem:[%s1499 + $0x190] sm:$0xff]
    %v1551 = vld [vmem:[%s1499 + $0x198] sm:$0xff]
    %v1552 = vld [vmem:[%s1499 + $0x1a0] sm:$0xff]
    %v1553 = vld [vmem:[%s1499 + $0x1a8] sm:$0xff]
    %v1554 = vld [vmem:[%s1499 + $0x1b0] sm:$0xff]
    %v1555 = vld [vmem:[%s1499 + $0x1b8] sm:$0xff]
    %v1556 = vld [vmem:[%s1499 + $0x1c0] sm:$0xff]
    %v1557 = vld [vmem:[%s1499 + $0x1c8] sm:$0xff]
    %v1558 = vld [vmem:[%s1499 + $0x1d0] sm:$0xff]
    %v1559 = vld [vmem:[%s1499 + $0x1d8] sm:$0xff]
    %v1560 = vld [vmem:[%s1499 + $0x1e0] sm:$0xff]
    %v1561 = vld [vmem:[%s1499 + $0x1e8] sm:$0xff]
    %v1562 = vld [vmem:[%s1499 + $0x1f0] sm:$0xff]
    %v1563 = vld [vmem:[%s1499 + $0x1f8] sm:$0xff]
    %v1564 = vld [vmem:[%s1499 + $0x200] sm:$0xff]
    %v1565 = vld [vmem:[%s1499 + $0x208] sm:$0xff]
    %v1566 = vld [vmem:[%s1499 + $0x210] sm:$0xff]
    %v1567 = vld [vmem:[%s1499 + $0x218] sm:$0xff]
    %v1568 = vld [vmem:[%s1499 + $0x220] sm:$0xff]
    %v1569 = vld [vmem:[%s1499 + $0x228] sm:$0xff]
    %v1570 = vld [vmem:[%s1499 + $0x230] sm:$0xff]
    %v1571 = vld [vmem:[%s1499 + $0x238] sm:$0xff]
    %1572 = vmatpush.msra.mxu0 %v1530
    %1573 = vmatpush.msra.mxu0 %v1528
    %1574 = vmatpush.msra.mxu0 %v1526
    %1575 = vmatpush.msra.mxu0 %v1524
    %1576 = vmatpush.msra.mxu0 %v1522
    %1577 = vmatpush.msra.mxu0 %v1520
    %1578 = vmatpush.msra.mxu0 %v1518
    %1579 = vmatpush.msra.mxu0 %v1516
    %1580 = vmatpush.msra.mxu0 %v1514
    %1581 = vmatpush.msra.mxu0 %v1512
    %1582 = vmatpush.msra.mxu0 %v1510
    %1583 = vmatpush.msra.mxu0 %v1508
    %1584 = vmatpush.msra.mxu0 %v1506
    %1585 = vmatpush.msra.mxu0 %v1504
    %1586 = vmatpush.msra.mxu0 %v1502
    %1587 = vmatpush.msra.mxu0 %v1500
    %1588 = vmatmul.f32.gmra.mxu0 %v1180
    %v1589 = vpop.f32.mrf.mxu0
    %v1590 = vadd.f32 0.0, %v1589
    %1591 = vmatmul.f32.gmra.mxu0 %v1183
    %v1592 = vpop.f32.mrf.mxu0
    %v1593 = vadd.f32 0.0, %v1592
    %1594 = vmatmul.f32.gmra.mxu0 %v1186
    %v1595 = vpop.f32.mrf.mxu0
    %v1596 = vadd.f32 0.0, %v1595
    %1597 = vmatmul.f32.gmra.mxu0 %v1189
    %v1598 = vpop.f32.mrf.mxu0
    %v1599 = vadd.f32 0.0, %v1598
    %1600 = vmatmul.f32.gmra.mxu0 %v1192
    %v1601 = vpop.f32.mrf.mxu0
    %v1602 = vadd.f32 0.0, %v1601
    %1603 = vmatmul.f32.gmra.mxu0 %v1195
    %v1604 = vpop.f32.mrf.mxu0
    %v1605 = vadd.f32 0.0, %v1604
    %1606 = vdwg.mxu0
    %1607 = vmatpush.msra.mxu0 %v1562
    %1608 = vmatpush.msra.mxu0 %v1560
    %1609 = vmatpush.msra.mxu0 %v1558
    %1610 = vmatpush.msra.mxu0 %v1556
    %1611 = vmatpush.msra.mxu0 %v1554
    %1612 = vmatpush.msra.mxu0 %v1552
    %1613 = vmatpush.msra.mxu0 %v1550
    %1614 = vmatpush.msra.mxu0 %v1548
    %1615 = vmatpush.msra.mxu0 %v1546
    %1616 = vmatpush.msra.mxu0 %v1544
    %1617 = vmatpush.msra.mxu0 %v1542
    %1618 = vmatpush.msra.mxu0 %v1540
    %1619 = vmatpush.msra.mxu0 %v1538
    %1620 = vmatpush.msra.mxu0 %v1536
    %1621 = vmatpush.msra.mxu0 %v1534
    %1622 = vmatpush.msra.mxu0 %v1532
    %1623 = vmatmul.f32.gmra.mxu0 %v1181
    %v1624 = vpop.f32.mrf.mxu0
    %v1625 = vadd.f32 %v1590, %v1624
    %1626 = vmatmul.f32.gmra.mxu0 %v1184
    %v1627 = vpop.f32.mrf.mxu0
    %v1628 = vadd.f32 %v1593, %v1627
    %1629 = vmatmul.f32.gmra.mxu0 %v1187
    %v1630 = vpop.f32.mrf.mxu0
    %v1631 = vadd.f32 %v1596, %v1630
    %1632 = vmatmul.f32.gmra.mxu0 %v1190
    %v1633 = vpop.f32.mrf.mxu0
    %v1634 = vadd.f32 %v1599, %v1633
    %1635 = vmatmul.f32.gmra.mxu0 %v1193
    %v1636 = vpop.f32.mrf.mxu0
    %v1637 = vadd.f32 %v1602, %v1636
    %1638 = vmatmul.f32.gmra.mxu0 %v1196
    %v1639 = vpop.f32.mrf.mxu0
    %v1640 = vadd.f32 %v1605, %v1639
    %1641 = vdwg.mxu0
    %1642 = vmatpush.msra.mxu0 0.0
    %1643 = vmatpush.msra.mxu0 0.0
    %1644 = vmatpush.msra.mxu0 0.0
    %1645 = vmatpush.msra.mxu0 0.0
    %1646 = vmatpush.msra.mxu0 0.0
    %1647 = vmatpush.msra.mxu0 0.0
    %1648 = vmatpush.msra.mxu0 0.0
    %1649 = vmatpush.msra.mxu0 0.0
    %1650 = vmatpush.msra.mxu0 0.0
    %1651 = vmatpush.msra.mxu0 0.0
    %1652 = vmatpush.msra.mxu0 0.0
    %1653 = vmatpush.msra.mxu0 0.0
    %1654 = vmatpush.msra.mxu0 %v1570
    %1655 = vmatpush.msra.mxu0 %v1568
    %1656 = vmatpush.msra.mxu0 %v1566
    %1657 = vmatpush.msra.mxu0 %v1564
    %1658 = vmatmul.f32.gmra.mxu0 %v1272
    %v1659 = vpop.f32.mrf.mxu0
    %v1660 = vadd.f32 %v1625, %v1659
    %1661 = vmatmul.f32.gmra.mxu0 %v1275
    %v1662 = vpop.f32.mrf.mxu0
    %v1663 = vadd.f32 %v1628, %v1662
    %1664 = vmatmul.f32.gmra.mxu0 %v1278
    %v1665 = vpop.f32.mrf.mxu0
    %v1666 = vadd.f32 %v1631, %v1665
    %1667 = vmatmul.f32.gmra.mxu0 %v1281
    %v1668 = vpop.f32.mrf.mxu0
    %v1669 = vadd.f32 %v1634, %v1668
    %1670 = vmatmul.f32.gmra.mxu0 %v1284
    %v1671 = vpop.f32.mrf.mxu0
    %v1672 = vadd.f32 %v1637, %v1671
    %1673 = vmatmul.f32.gmra.mxu0 %v1287
    %v1674 = vpop.f32.mrf.mxu0
    %v1675 = vadd.f32 %v1640, %v1674
    %1676 = vdwg.mxu0
    %1677 = vmatpush.msra.mxu0 %v1531
    %1678 = vmatpush.msra.mxu0 %v1529
    %1679 = vmatpush.msra.mxu0 %v1527
    %1680 = vmatpush.msra.mxu0 %v1525
    %1681 = vmatpush.msra.mxu0 %v1523
    %1682 = vmatpush.msra.mxu0 %v1521
    %1683 = vmatpush.msra.mxu0 %v1519
    %1684 = vmatpush.msra.mxu0 %v1517
    %1685 = vmatpush.msra.mxu0 %v1515
    %1686 = vmatpush.msra.mxu0 %v1513
    %1687 = vmatpush.msra.mxu0 %v1511
    %1688 = vmatpush.msra.mxu0 %v1509
    %1689 = vmatpush.msra.mxu0 %v1507
    %1690 = vmatpush.msra.mxu0 %v1505
    %1691 = vmatpush.msra.mxu0 %v1503
    %1692 = vmatpush.msra.mxu0 %v1501
    %1693 = vmatmul.f32.gmra.mxu0 %v1180
    %v1694 = vpop.f32.mrf.mxu0
    %v1695 = vadd.f32 0.0, %v1694
    %1696 = vmatmul.f32.gmra.mxu0 %v1183
    %v1697 = vpop.f32.mrf.mxu0
    %v1698 = vadd.f32 0.0, %v1697
    %1699 = vmatmul.f32.gmra.mxu0 %v1186
    %v1700 = vpop.f32.mrf.mxu0
    %v1701 = vadd.f32 0.0, %v1700
    %1702 = vmatmul.f32.gmra.mxu0 %v1189
    %v1703 = vpop.f32.mrf.mxu0
    %v1704 = vadd.f32 0.0, %v1703
    %1705 = vmatmul.f32.gmra.mxu0 %v1192
    %v1706 = vpop.f32.mrf.mxu0
    %v1707 = vadd.f32 0.0, %v1706
    %1708 = vmatmul.f32.gmra.mxu0 %v1195
    %v1709 = vpop.f32.mrf.mxu0
    %v1710 = vadd.f32 0.0, %v1709
    %1711 = vdwg.mxu0
    %1712 = vmatpush.msra.mxu0 %v1563
    %1713 = vmatpush.msra.mxu0 %v1561
    %1714 = vmatpush.msra.mxu0 %v1559
    %1715 = vmatpush.msra.mxu0 %v1557
    %1716 = vmatpush.msra.mxu0 %v1555
    %1717 = vmatpush.msra.mxu0 %v1553
    %1718 = vmatpush.msra.mxu0 %v1551
    %1719 = vmatpush.msra.mxu0 %v1549
    %1720 = vmatpush.msra.mxu0 %v1547
    %1721 = vmatpush.msra.mxu0 %v1545
    %1722 = vmatpush.msra.mxu0 %v1543
    %1723 = vmatpush.msra.mxu0 %v1541
    %1724 = vmatpush.msra.mxu0 %v1539
    %1725 = vmatpush.msra.mxu0 %v1537
    %1726 = vmatpush.msra.mxu0 %v1535
    %1727 = vmatpush.msra.mxu0 %v1533
    %1728 = vmatmul.f32.gmra.mxu0 %v1181
    %v1729 = vpop.f32.mrf.mxu0
    %v1730 = vadd.f32 %v1695, %v1729
    %1731 = vmatmul.f32.gmra.mxu0 %v1184
    %v1732 = vpop.f32.mrf.mxu0
    %v1733 = vadd.f32 %v1698, %v1732
    %1734 = vmatmul.f32.gmra.mxu0 %v1187
    %v1735 = vpop.f32.mrf.mxu0
    %v1736 = vadd.f32 %v1701, %v1735
    %1737 = vmatmul.f32.gmra.mxu0 %v1190
    %v1738 = vpop.f32.mrf.mxu0
    %v1739 = vadd.f32 %v1704, %v1738
    %1740 = vmatmul.f32.gmra.mxu0 %v1193
    %v1741 = vpop.f32.mrf.mxu0
    %v1742 = vadd.f32 %v1707, %v1741
    %1743 = vmatmul.f32.gmra.mxu0 %v1196
    %v1744 = vpop.f32.mrf.mxu0
    %v1745 = vadd.f32 %v1710, %v1744
    %1746 = vdwg.mxu0
    %1747 = vmatpush.msra.mxu0 0.0
    %1748 = vmatpush.msra.mxu0 0.0
    %1749 = vmatpush.msra.mxu0 0.0
    %1750 = vmatpush.msra.mxu0 0.0
    %1751 = vmatpush.msra.mxu0 0.0
    %1752 = vmatpush.msra.mxu0 0.0
    %1753 = vmatpush.msra.mxu0 0.0
    %1754 = vmatpush.msra.mxu0 0.0
    %1755 = vmatpush.msra.mxu0 0.0
    %1756 = vmatpush.msra.mxu0 0.0
    %1757 = vmatpush.msra.mxu0 0.0
    %1758 = vmatpush.msra.mxu0 0.0
    %1759 = vmatpush.msra.mxu0 %v1571
    %1760 = vmatpush.msra.mxu0 %v1569
    %1761 = vmatpush.msra.mxu0 %v1567
    %1762 = vmatpush.msra.mxu0 %v1565
    %1763 = vmatmul.f32.gmra.mxu0 %v1272
    %v1764 = vpop.f32.mrf.mxu0
    %v1765 = vadd.f32 %v1730, %v1764
    %1766 = vmatmul.f32.gmra.mxu0 %v1275
    %v1767 = vpop.f32.mrf.mxu0
    %v1768 = vadd.f32 %v1733, %v1767
    %1769 = vmatmul.f32.gmra.mxu0 %v1278
    %v1770 = vpop.f32.mrf.mxu0
    %v1771 = vadd.f32 %v1736, %v1770
    %1772 = vmatmul.f32.gmra.mxu0 %v1281
    %v1773 = vpop.f32.mrf.mxu0
    %v1774 = vadd.f32 %v1739, %v1773
    %1775 = vmatmul.f32.gmra.mxu0 %v1284
    %v1776 = vpop.f32.mrf.mxu0
    %v1777 = vadd.f32 %v1742, %v1776
    %1778 = vmatmul.f32.gmra.mxu0 %v1287
    %v1779 = vpop.f32.mrf.mxu0
    %v1780 = vadd.f32 %v1745, %v1779
    %1781 = vdwg.mxu0
    %v1782 = vmax.f32 %v1377, %v1660
    %v1783 = vmax.f32 %v1482, %v1765
    %v1784 = vmax.f32 %v1380, %v1663
    %v1785 = vmax.f32 %v1485, %v1768
    %v1786 = vmax.f32 %v1383, %v1666
    %v1787 = vmax.f32 %v1488, %v1771
    %v1788 = vmax.f32 %v1386, %v1669
    %v1789 = vmax.f32 %v1491, %v1774
    %v1790 = vmax.f32 %v1389, %v1672
    %v1791 = vmax.f32 %v1494, %v1777
    %v1792 = vmax.f32 %v1392, %v1675
    %v1793 = vmax.f32 %v1497, %v1780
    %v1794 = vld [vmem:[#allocation5] sm:$0xff]
    %v1795 = vld [vmem:[#allocation5 + $0x8] sm:$0xff]
    %v1796 = vld [vmem:[#allocation5 + $0x10] sm:$0xff]
    %v1797 = vld [vmem:[#allocation5 + $0x18] sm:$0xff]
    %v1798 = vld [vmem:[#allocation5 + $0x20] sm:$0xff]
    %v1799 = vld [vmem:[#allocation5 + $0x28] sm:$0xf]
    %vm1800 = vcmask 392192
    %v1802 = vsel %vm1800, %v1794, 0
    %v1805 = vsel %vm1800, %v1795, 0
    %v1808 = vsel %vm1800, %v1796, 0
    %v1811 = vsel %vm1800, %v1797, 0
    %v1814 = vsel %vm1800, %v1798, 0
    %v1817 = vsel %vm1800, %v1799, 0
    %1819 = vmatpush.msra.mxu0 0.0
    %1820 = vmatpush.msra.mxu0 0.0
    %1821 = vmatpush.msra.mxu0 0.0
    %1822 = vmatpush.msra.mxu0 0.0
    %1823 = vmatpush.msra.mxu0 0.0
    %1824 = vmatpush.msra.mxu0 0.0
    %1825 = vmatpush.msra.mxu0 0.0
    %1826 = vmatpush.msra.mxu0 0.0
    %1827 = vmatpush.msra.mxu0 0.0
    %1828 = vmatpush.msra.mxu0 0.0
    %1829 = vmatpush.msra.mxu0 %v1792
    %1830 = vmatpush.msra.mxu0 %v1790
    %1831 = vmatpush.msra.mxu0 %v1788
    %1832 = vmatpush.msra.mxu0 %v1786
    %1833 = vmatpush.msra.mxu0 %v1784
    %1834 = vmatpush.msra.mxu0 %v1782
    %1835 = vmatmul.f32.gmra.mxu0 %v1802
    %v1836 = vpop.f32.mrf.mxu0
    %v1837 = vadd.f32 0.0, %v1836
    %1838 = vmatmul.f32.gmra.mxu0 %v1805
    %v1839 = vpop.f32.mrf.mxu0
    %v1840 = vadd.f32 0.0, %v1839
    %1841 = vmatmul.f32.gmra.mxu0 %v1808
    %v1842 = vpop.f32.mrf.mxu0
    %v1843 = vadd.f32 0.0, %v1842
    %1844 = vmatmul.f32.gmra.mxu0 %v1811
    %v1845 = vpop.f32.mrf.mxu0
    %v1846 = vadd.f32 0.0, %v1845
    %1847 = vmatmul.f32.gmra.mxu0 %v1814
    %v1848 = vpop.f32.mrf.mxu0
    %v1849 = vadd.f32 0.0, %v1848
    %1850 = vmatmul.f32.gmra.mxu0 %v1817
    %v1851 = vpop.f32.mrf.mxu0
    %v1852 = vadd.f32 0.0, %v1851
    %1853 = vdwg.mxu0
    %1854 = vmatpush.msra.mxu0 0.0
    %1855 = vmatpush.msra.mxu0 0.0
    %1856 = vmatpush.msra.mxu0 0.0
    %1857 = vmatpush.msra.mxu0 0.0
    %1858 = vmatpush.msra.mxu0 0.0
    %1859 = vmatpush.msra.mxu0 0.0
    %1860 = vmatpush.msra.mxu0 0.0
    %1861 = vmatpush.msra.mxu0 0.0
    %1862 = vmatpush.msra.mxu0 0.0
    %1863 = vmatpush.msra.mxu0 0.0
    %1864 = vmatpush.msra.mxu0 %v1793
    %1865 = vmatpush.msra.mxu0 %v1791
    %1866 = vmatpush.msra.mxu0 %v1789
    %1867 = vmatpush.msra.mxu0 %v1787
    %1868 = vmatpush.msra.mxu0 %v1785
    %1869 = vmatpush.msra.mxu0 %v1783
    %1870 = vmatmul.f32.gmra.mxu0 %v1802
    %v1871 = vpop.f32.mrf.mxu0
    %v1872 = vadd.f32 0.0, %v1871
    %1873 = vmatmul.f32.gmra.mxu0 %v1805
    %v1874 = vpop.f32.mrf.mxu0
    %v1875 = vadd.f32 0.0, %v1874
    %1876 = vmatmul.f32.gmra.mxu0 %v1808
    %v1877 = vpop.f32.mrf.mxu0
    %v1878 = vadd.f32 0.0, %v1877
    %1879 = vmatmul.f32.gmra.mxu0 %v1811
    %v1880 = vpop.f32.mrf.mxu0
    %v1881 = vadd.f32 0.0, %v1880
    %1882 = vmatmul.f32.gmra.mxu0 %v1814
    %v1883 = vpop.f32.mrf.mxu0
    %v1884 = vadd.f32 0.0, %v1883
    %1885 = vmatmul.f32.gmra.mxu0 %v1817
    %v1886 = vpop.f32.mrf.mxu0
    %v1887 = vadd.f32 0.0, %v1886
    %1888 = vdwg.mxu0
    %v1889 = vld [vmem:[%s6] sm:$0xff]
    %v1890 = vld [vmem:[%s6 + $0x8] sm:$0xff]
    %v1891 = vld [vmem:[%s6 + $0x10] sm:$0xff]
    %v1892 = vld [vmem:[%s6 + $0x18] sm:$0xff]
    %v1893 = vld [vmem:[%s6 + $0x20] sm:$0xff]
    %v1894 = vld [vmem:[%s6 + $0x28] sm:$0xff]
    %v1895 = vld [vmem:[%s6 + $0x30] sm:$0xff]
    %v1896 = vld [vmem:[%s6 + $0x38] sm:$0xff]
    %v1897 = vld [vmem:[%s6 + $0x40] sm:$0xff]
    %v1898 = vld [vmem:[%s6 + $0x48] sm:$0xff]
    %v1899 = vld [vmem:[%s6 + $0x50] sm:$0xff]
    %v1900 = vld [vmem:[%s6 + $0x58] sm:$0xff]
    %v1901 = vld [vmem:[%s6 + $0x60] sm:$0xff]
    %v1902 = vld [vmem:[%s6 + $0x68] sm:$0xff]
    %v1903 = vld [vmem:[%s6 + $0x70] sm:$0xff]
    %v1904 = vld [vmem:[%s6 + $0x78] sm:$0xff]
    %v1905 = vld [vmem:[%s6 + $0x80] sm:$0xff]
    %v1906 = vld [vmem:[%s6 + $0x88] sm:$0xff]
    %v1907 = vld [vmem:[%s6 + $0x90] sm:$0xff]
    %v1908 = vld [vmem:[%s6 + $0x98] sm:$0xff]
    %v1909 = vld [vmem:[%s6 + $0xa0] sm:$0xff]
    %v1910 = vld [vmem:[%s6 + $0xa8] sm:$0xff]
    %v1911 = vld [vmem:[%s6 + $0xb0] sm:$0xff]
    %v1912 = vld [vmem:[%s6 + $0xb8] sm:$0xff]
    %v1913 = vld [vmem:[%s6 + $0xc0] sm:$0xff]
    %v1914 = vld [vmem:[%s6 + $0xc8] sm:$0xff]
    %v1915 = vld [vmem:[%s6 + $0xd0] sm:$0xff]
    %v1916 = vld [vmem:[%s6 + $0xd8] sm:$0xff]
    %v1917 = vld [vmem:[%s6 + $0xe0] sm:$0xff]
    %v1918 = vld [vmem:[%s6 + $0xe8] sm:$0xff]
    %v1919 = vld [vmem:[%s6 + $0xf0] sm:$0xff]
    %v1920 = vld [vmem:[%s6 + $0xf8] sm:$0xff]
    %v1921 = vld [vmem:[%s6 + $0x100] sm:$0xff]
    %v1922 = vld [vmem:[%s6 + $0x108] sm:$0xff]
    %v1923 = vld [vmem:[%s6 + $0x110] sm:$0xff]
    %v1924 = vld [vmem:[%s6 + $0x118] sm:$0xff]
    %v1925 = vld [vmem:[%s6 + $0x120] sm:$0xff]
    %v1926 = vld [vmem:[%s6 + $0x128] sm:$0xff]
    %v1927 = vld [vmem:[%s6 + $0x130] sm:$0xff]
    %v1928 = vld [vmem:[%s6 + $0x138] sm:$0xff]
    %v1929 = vld [vmem:[%s6 + $0x140] sm:$0xff]
    %v1930 = vld [vmem:[%s6 + $0x148] sm:$0xff]
    %v1931 = vld [vmem:[%s6 + $0x150] sm:$0xff]
    %v1932 = vld [vmem:[%s6 + $0x158] sm:$0xff]
    %v1933 = vld [vmem:[%s6 + $0x160] sm:$0xff]
    %v1934 = vld [vmem:[%s6 + $0x168] sm:$0xff]
    %v1935 = vld [vmem:[%s6 + $0x170] sm:$0xff]
    %v1936 = vld [vmem:[%s6 + $0x178] sm:$0xff]
    %v1937 = vld [vmem:[%s6 + $0x180] sm:$0xff]
    %v1938 = vld [vmem:[%s6 + $0x188] sm:$0xff]
    %v1939 = vld [vmem:[%s6 + $0x190] sm:$0xff]
    %v1940 = vld [vmem:[%s6 + $0x198] sm:$0xff]
    %v1941 = vld [vmem:[%s6 + $0x1a0] sm:$0xff]
    %v1942 = vld [vmem:[%s6 + $0x1a8] sm:$0xff]
    %s1943 = scalar_lea.vmem [#allocation5], 48
    %v1944 = vld [vmem:[%s1943] sm:$0xff]
    %v1945 = vld [vmem:[%s1943 + $0x8] sm:$0xff]
    %v1946 = vld [vmem:[%s1943 + $0x10] sm:$0xff]
    %v1947 = vld [vmem:[%s1943 + $0x18] sm:$0xff]
    %v1948 = vld [vmem:[%s1943 + $0x20] sm:$0xff]
    %v1949 = vld [vmem:[%s1943 + $0x28] sm:$0xf]
    %v1951 = vsel %vm1800, %v1944, 0
    %v1954 = vsel %vm1800, %v1945, 0
    %v1957 = vsel %vm1800, %v1946, 0
    %v1960 = vsel %vm1800, %v1947, 0
    %v1963 = vsel %vm1800, %v1948, 0
    %v1966 = vsel %vm1800, %v1949, 0
    %1968 = vmatpush.msra.mxu0 0.0
    %1969 = vmatpush.msra.mxu0 0.0
    %1970 = vmatpush.msra.mxu0 0.0
    %1971 = vmatpush.msra.mxu0 0.0
    %1972 = vmatpush.msra.mxu0 0.0
    %1973 = vmatpush.msra.mxu0 0.0
    %1974 = vmatpush.msra.mxu0 0.0
    %1975 = vmatpush.msra.mxu0 0.0
    %1976 = vmatpush.msra.mxu0 0.0
    %1977 = vmatpush.msra.mxu0 0.0
    %1978 = vmatpush.msra.mxu0 %v1792
    %1979 = vmatpush.msra.mxu0 %v1790
    %1980 = vmatpush.msra.mxu0 %v1788
    %1981 = vmatpush.msra.mxu0 %v1786
    %1982 = vmatpush.msra.mxu0 %v1784
    %1983 = vmatpush.msra.mxu0 %v1782
    %1984 = vmatmul.f32.gmra.mxu0 %v1951
    %v1985 = vpop.f32.mrf.mxu0
    %v1986 = vadd.f32 0.0, %v1985
    %1987 = vmatmul.f32.gmra.mxu0 %v1954
    %v1988 = vpop.f32.mrf.mxu0
    %v1989 = vadd.f32 0.0, %v1988
    %1990 = vmatmul.f32.gmra.mxu0 %v1957
    %v1991 = vpop.f32.mrf.mxu0
    %v1992 = vadd.f32 0.0, %v1991
    %1993 = vmatmul.f32.gmra.mxu0 %v1960
    %v1994 = vpop.f32.mrf.mxu0
    %v1995 = vadd.f32 0.0, %v1994
    %1996 = vmatmul.f32.gmra.mxu0 %v1963
    %v1997 = vpop.f32.mrf.mxu0
    %v1998 = vadd.f32 0.0, %v1997
    %1999 = vmatmul.f32.gmra.mxu0 %v1966
    %v2000 = vpop.f32.mrf.mxu0
    %v2001 = vadd.f32 0.0, %v2000
    %2002 = vdwg.mxu0
    %2003 = vmatpush.msra.mxu0 0.0
    %2004 = vmatpush.msra.mxu0 0.0
    %2005 = vmatpush.msra.mxu0 0.0
    %2006 = vmatpush.msra.mxu0 0.0
    %2007 = vmatpush.msra.mxu0 0.0
    %2008 = vmatpush.msra.mxu0 0.0
    %2009 = vmatpush.msra.mxu0 0.0
    %2010 = vmatpush.msra.mxu0 0.0
    %2011 = vmatpush.msra.mxu0 0.0
    %2012 = vmatpush.msra.mxu0 0.0
    %2013 = vmatpush.msra.mxu0 %v1793
    %2014 = vmatpush.msra.mxu0 %v1791
    %2015 = vmatpush.msra.mxu0 %v1789
    %2016 = vmatpush.msra.mxu0 %v1787
    %2017 = vmatpush.msra.mxu0 %v1785
    %2018 = vmatpush.msra.mxu0 %v1783
    %2019 = vmatmul.f32.gmra.mxu0 %v1951
    %v2020 = vpop.f32.mrf.mxu0
    %v2021 = vadd.f32 0.0, %v2020
    %2022 = vmatmul.f32.gmra.mxu0 %v1954
    %v2023 = vpop.f32.mrf.mxu0
    %v2024 = vadd.f32 0.0, %v2023
    %2025 = vmatmul.f32.gmra.mxu0 %v1957
    %v2026 = vpop.f32.mrf.mxu0
    %v2027 = vadd.f32 0.0, %v2026
    %2028 = vmatmul.f32.gmra.mxu0 %v1960
    %v2029 = vpop.f32.mrf.mxu0
    %v2030 = vadd.f32 0.0, %v2029
    %2031 = vmatmul.f32.gmra.mxu0 %v1963
    %v2032 = vpop.f32.mrf.mxu0
    %v2033 = vadd.f32 0.0, %v2032
    %2034 = vmatmul.f32.gmra.mxu0 %v1966
    %v2035 = vpop.f32.mrf.mxu0
    %v2036 = vadd.f32 0.0, %v2035
    %2037 = vdwg.mxu0
    %s2038 = scalar_lea.vmem %s6, 432
    %v2039 = vld [vmem:[%s2038] sm:$0xff]
    %v2040 = vld [vmem:[%s2038 + $0x8] sm:$0xff]
    %v2041 = vld [vmem:[%s2038 + $0x10] sm:$0xff]
    %v2042 = vld [vmem:[%s2038 + $0x18] sm:$0xff]
    %v2043 = vld [vmem:[%s2038 + $0x20] sm:$0xff]
    %v2044 = vld [vmem:[%s2038 + $0x28] sm:$0xff]
    %v2045 = vld [vmem:[%s2038 + $0x30] sm:$0xff]
    %v2046 = vld [vmem:[%s2038 + $0x38] sm:$0xff]
    %v2047 = vld [vmem:[%s2038 + $0x40] sm:$0xff]
    %v2048 = vld [vmem:[%s2038 + $0x48] sm:$0xff]
    %v2049 = vld [vmem:[%s2038 + $0x50] sm:$0xff]
    %v2050 = vld [vmem:[%s2038 + $0x58] sm:$0xff]
    %v2051 = vld [vmem:[%s2038 + $0x60] sm:$0xff]
    %v2052 = vld [vmem:[%s2038 + $0x68] sm:$0xff]
    %v2053 = vld [vmem:[%s2038 + $0x70] sm:$0xff]
    %v2054 = vld [vmem:[%s2038 + $0x78] sm:$0xff]
    %v2055 = vld [vmem:[%s2038 + $0x80] sm:$0xff]
    %v2056 = vld [vmem:[%s2038 + $0x88] sm:$0xff]
    %v2057 = vld [vmem:[%s2038 + $0x90] sm:$0xff]
    %v2058 = vld [vmem:[%s2038 + $0x98] sm:$0xff]
    %v2059 = vld [vmem:[%s2038 + $0xa0] sm:$0xff]
    %v2060 = vld [vmem:[%s2038 + $0xa8] sm:$0xff]
    %v2061 = vld [vmem:[%s2038 + $0xb0] sm:$0xff]
    %v2062 = vld [vmem:[%s2038 + $0xb8] sm:$0xff]
    %v2063 = vld [vmem:[%s2038 + $0xc0] sm:$0xff]
    %v2064 = vld [vmem:[%s2038 + $0xc8] sm:$0xff]
    %v2065 = vld [vmem:[%s2038 + $0xd0] sm:$0xff]
    %v2066 = vld [vmem:[%s2038 + $0xd8] sm:$0xff]
    %v2067 = vld [vmem:[%s2038 + $0xe0] sm:$0xff]
    %v2068 = vld [vmem:[%s2038 + $0xe8] sm:$0xff]
    %v2069 = vld [vmem:[%s2038 + $0xf0] sm:$0xff]
    %v2070 = vld [vmem:[%s2038 + $0xf8] sm:$0xff]
    %v2071 = vld [vmem:[%s2038 + $0x100] sm:$0xff]
    %v2072 = vld [vmem:[%s2038 + $0x108] sm:$0xff]
    %v2073 = vld [vmem:[%s2038 + $0x110] sm:$0xff]
    %v2074 = vld [vmem:[%s2038 + $0x118] sm:$0xff]
    %v2075 = vld [vmem:[%s2038 + $0x120] sm:$0xff]
    %v2076 = vld [vmem:[%s2038 + $0x128] sm:$0xff]
    %v2077 = vld [vmem:[%s2038 + $0x130] sm:$0xff]
    %v2078 = vld [vmem:[%s2038 + $0x138] sm:$0xff]
    %v2079 = vld [vmem:[%s2038 + $0x140] sm:$0xff]
    %v2080 = vld [vmem:[%s2038 + $0x148] sm:$0xff]
    %v2081 = vld [vmem:[%s2038 + $0x150] sm:$0xff]
    %v2082 = vld [vmem:[%s2038 + $0x158] sm:$0xff]
    %v2083 = vld [vmem:[%s2038 + $0x160] sm:$0xff]
    %v2084 = vld [vmem:[%s2038 + $0x168] sm:$0xff]
    %v2085 = vld [vmem:[%s2038 + $0x170] sm:$0xff]
    %v2086 = vld [vmem:[%s2038 + $0x178] sm:$0xff]
    %v2087 = vld [vmem:[%s2038 + $0x180] sm:$0xff]
    %v2088 = vld [vmem:[%s2038 + $0x188] sm:$0xff]
    %v2089 = vld [vmem:[%s2038 + $0x190] sm:$0xff]
    %v2090 = vld [vmem:[%s2038 + $0x198] sm:$0xff]
    %v2091 = vld [vmem:[%s2038 + $0x1a0] sm:$0xff]
    %v2092 = vld [vmem:[%s2038 + $0x1a8] sm:$0xff]
    %vm2093 = vcmask 130048
    %v2095 = vsel %vm2093, %v2021, 0
    %v2098 = vsel %vm2093, %v2024, 0
    %v2101 = vsel %vm2093, %v2027, 0
    %v2104 = vsel %vm2093, %v2030, 0
    %v2107 = vsel %vm2093, %v2033, 0
    %v2110 = vsel %vm2093, %v2036, 0
    %2112 = vmatpush.msra.mxu0 %v2084
    %2113 = vmatpush.msra.mxu0 %v2081
    %2114 = vmatpush.msra.mxu0 %v2078
    %2115 = vmatpush.msra.mxu0 %v2075
    %2116 = vmatpush.msra.mxu0 %v2072
    %2117 = vmatpush.msra.mxu0 %v2069
    %2118 = vmatpush.msra.mxu0 %v2066
    %2119 = vmatpush.msra.mxu0 %v2063
    %2120 = vmatpush.msra.mxu0 %v2060
    %2121 = vmatpush.msra.mxu0 %v2057
    %2122 = vmatpush.msra.mxu0 %v2054
    %2123 = vmatpush.msra.mxu0 %v2051
    %2124 = vmatpush.msra.mxu0 %v2048
    %2125 = vmatpush.msra.mxu0 %v2045
    %2126 = vmatpush.msra.mxu0 %v2042
    %2127 = vmatpush.msra.mxu0 %v2039
    %2128 = vmatmul.f32.gmra.mxu0 %v1986
    %v2129 = vpop.f32.mrf.mxu0
    %v2130 = vadd.f32 0.0, %v2129
    %2131 = vmatmul.f32.gmra.mxu0 %v1989
    %v2132 = vpop.f32.mrf.mxu0
    %v2133 = vadd.f32 0.0, %v2132
    %2134 = vmatmul.f32.gmra.mxu0 %v1992
    %v2135 = vpop.f32.mrf.mxu0
    %v2136 = vadd.f32 0.0, %v2135
    %2137 = vmatmul.f32.gmra.mxu0 %v1995
    %v2138 = vpop.f32.mrf.mxu0
    %v2139 = vadd.f32 0.0, %v2138
    %2140 = vmatmul.f32.gmra.mxu0 %v1998
    %v2141 = vpop.f32.mrf.mxu0
    %v2142 = vadd.f32 0.0, %v2141
    %2143 = vmatmul.f32.gmra.mxu0 %v2001
    %v2144 = vpop.f32.mrf.mxu0
    %v2145 = vadd.f32 0.0, %v2144
    %2146 = vdwg.mxu0
    %2147 = vmatpush.msra.mxu0 0.0
    %2148 = vmatpush.msra.mxu0 0.0
    %2149 = vmatpush.msra.mxu0 0.0
    %2150 = vmatpush.msra.mxu0 0.0
    %2151 = vmatpush.msra.mxu0 0.0
    %2152 = vmatpush.msra.mxu0 0.0
    %2153 = vmatpush.msra.mxu0 0.0
    %2154 = vmatpush.msra.mxu0 0.0
    %2155 = vmatpush.msra.mxu0 0.0
    %2156 = vmatpush.msra.mxu0 0.0
    %2157 = vmatpush.msra.mxu0 0.0
    %2158 = vmatpush.msra.mxu0 0.0
    %2159 = vmatpush.msra.mxu0 0.0
    %2160 = vmatpush.msra.mxu0 0.0
    %2161 = vmatpush.msra.mxu0 %v2090
    %2162 = vmatpush.msra.mxu0 %v2087
    %2163 = vmatmul.f32.gmra.mxu0 %v2095
    %v2164 = vpop.f32.mrf.mxu0
    %v2165 = vadd.f32 %v2130, %v2164
    %2166 = vmatmul.f32.gmra.mxu0 %v2098
    %v2167 = vpop.f32.mrf.mxu0
    %v2168 = vadd.f32 %v2133, %v2167
    %2169 = vmatmul.f32.gmra.mxu0 %v2101
    %v2170 = vpop.f32.mrf.mxu0
    %v2171 = vadd.f32 %v2136, %v2170
    %2172 = vmatmul.f32.gmra.mxu0 %v2104
    %v2173 = vpop.f32.mrf.mxu0
    %v2174 = vadd.f32 %v2139, %v2173
    %2175 = vmatmul.f32.gmra.mxu0 %v2107
    %v2176 = vpop.f32.mrf.mxu0
    %v2177 = vadd.f32 %v2142, %v2176
    %2178 = vmatmul.f32.gmra.mxu0 %v2110
    %v2179 = vpop.f32.mrf.mxu0
    %v2180 = vadd.f32 %v2145, %v2179
    %2181 = vdwg.mxu0
    %2182 = vmatpush.msra.mxu0 %v2085
    %2183 = vmatpush.msra.mxu0 %v2082
    %2184 = vmatpush.msra.mxu0 %v2079
    %2185 = vmatpush.msra.mxu0 %v2076
    %2186 = vmatpush.msra.mxu0 %v2073
    %2187 = vmatpush.msra.mxu0 %v2070
    %2188 = vmatpush.msra.mxu0 %v2067
    %2189 = vmatpush.msra.mxu0 %v2064
    %2190 = vmatpush.msra.mxu0 %v2061
    %2191 = vmatpush.msra.mxu0 %v2058
    %2192 = vmatpush.msra.mxu0 %v2055
    %2193 = vmatpush.msra.mxu0 %v2052
    %2194 = vmatpush.msra.mxu0 %v2049
    %2195 = vmatpush.msra.mxu0 %v2046
    %2196 = vmatpush.msra.mxu0 %v2043
    %2197 = vmatpush.msra.mxu0 %v2040
    %2198 = vmatmul.f32.gmra.mxu0 %v1986
    %v2199 = vpop.f32.mrf.mxu0
    %v2200 = vadd.f32 0.0, %v2199
    %2201 = vmatmul.f32.gmra.mxu0 %v1989
    %v2202 = vpop.f32.mrf.mxu0
    %v2203 = vadd.f32 0.0, %v2202
    %2204 = vmatmul.f32.gmra.mxu0 %v1992
    %v2205 = vpop.f32.mrf.mxu0
    %v2206 = vadd.f32 0.0, %v2205
    %2207 = vmatmul.f32.gmra.mxu0 %v1995
    %v2208 = vpop.f32.mrf.mxu0
    %v2209 = vadd.f32 0.0, %v2208
    %2210 = vmatmul.f32.gmra.mxu0 %v1998
    %v2211 = vpop.f32.mrf.mxu0
    %v2212 = vadd.f32 0.0, %v2211
    %2213 = vmatmul.f32.gmra.mxu0 %v2001
    %v2214 = vpop.f32.mrf.mxu0
    %v2215 = vadd.f32 0.0, %v2214
    %2216 = vdwg.mxu0
    %2217 = vmatpush.msra.mxu0 0.0
    %2218 = vmatpush.msra.mxu0 0.0
    %2219 = vmatpush.msra.mxu0 0.0
    %2220 = vmatpush.msra.mxu0 0.0
    %2221 = vmatpush.msra.mxu0 0.0
    %2222 = vmatpush.msra.mxu0 0.0
    %2223 = vmatpush.msra.mxu0 0.0
    %2224 = vmatpush.msra.mxu0 0.0
    %2225 = vmatpush.msra.mxu0 0.0
    %2226 = vmatpush.msra.mxu0 0.0
    %2227 = vmatpush.msra.mxu0 0.0
    %2228 = vmatpush.msra.mxu0 0.0
    %2229 = vmatpush.msra.mxu0 0.0
    %2230 = vmatpush.msra.mxu0 0.0
    %2231 = vmatpush.msra.mxu0 %v2091
    %2232 = vmatpush.msra.mxu0 %v2088
    %2233 = vmatmul.f32.gmra.mxu0 %v2095
    %v2234 = vpop.f32.mrf.mxu0
    %v2235 = vadd.f32 %v2200, %v2234
    %2236 = vmatmul.f32.gmra.mxu0 %v2098
    %v2237 = vpop.f32.mrf.mxu0
    %v2238 = vadd.f32 %v2203, %v2237
    %2239 = vmatmul.f32.gmra.mxu0 %v2101
    %v2240 = vpop.f32.mrf.mxu0
    %v2241 = vadd.f32 %v2206, %v2240
    %2242 = vmatmul.f32.gmra.mxu0 %v2104
    %v2243 = vpop.f32.mrf.mxu0
    %v2244 = vadd.f32 %v2209, %v2243
    %2245 = vmatmul.f32.gmra.mxu0 %v2107
    %v2246 = vpop.f32.mrf.mxu0
    %v2247 = vadd.f32 %v2212, %v2246
    %2248 = vmatmul.f32.gmra.mxu0 %v2110
    %v2249 = vpop.f32.mrf.mxu0
    %v2250 = vadd.f32 %v2215, %v2249
    %2251 = vdwg.mxu0
    %2252 = vmatpush.msra.mxu0 %v2086
    %2253 = vmatpush.msra.mxu0 %v2083
    %2254 = vmatpush.msra.mxu0 %v2080
    %2255 = vmatpush.msra.mxu0 %v2077
    %2256 = vmatpush.msra.mxu0 %v2074
    %2257 = vmatpush.msra.mxu0 %v2071
    %2258 = vmatpush.msra.mxu0 %v2068
    %2259 = vmatpush.msra.mxu0 %v2065
    %2260 = vmatpush.msra.mxu0 %v2062
    %2261 = vmatpush.msra.mxu0 %v2059
    %2262 = vmatpush.msra.mxu0 %v2056
    %2263 = vmatpush.msra.mxu0 %v2053
    %2264 = vmatpush.msra.mxu0 %v2050
    %2265 = vmatpush.msra.mxu0 %v2047
    %2266 = vmatpush.msra.mxu0 %v2044
    %2267 = vmatpush.msra.mxu0 %v2041
    %2268 = vmatmul.f32.gmra.mxu0 %v1986
    %v2269 = vpop.f32.mrf.mxu0
    %v2270 = vadd.f32 0.0, %v2269
    %2271 = vmatmul.f32.gmra.mxu0 %v1989
    %v2272 = vpop.f32.mrf.mxu0
    %v2273 = vadd.f32 0.0, %v2272
    %2274 = vmatmul.f32.gmra.mxu0 %v1992
    %v2275 = vpop.f32.mrf.mxu0
    %v2276 = vadd.f32 0.0, %v2275
    %2277 = vmatmul.f32.gmra.mxu0 %v1995
    %v2278 = vpop.f32.mrf.mxu0
    %v2279 = vadd.f32 0.0, %v2278
    %2280 = vmatmul.f32.gmra.mxu0 %v1998
    %v2281 = vpop.f32.mrf.mxu0
    %v2282 = vadd.f32 0.0, %v2281
    %2283 = vmatmul.f32.gmra.mxu0 %v2001
    %v2284 = vpop.f32.mrf.mxu0
    %v2285 = vadd.f32 0.0, %v2284
    %2286 = vdwg.mxu0
    %2287 = vmatpush.msra.mxu0 0.0
    %2288 = vmatpush.msra.mxu0 0.0
    %2289 = vmatpush.msra.mxu0 0.0
    %2290 = vmatpush.msra.mxu0 0.0
    %2291 = vmatpush.msra.mxu0 0.0
    %2292 = vmatpush.msra.mxu0 0.0
    %2293 = vmatpush.msra.mxu0 0.0
    %2294 = vmatpush.msra.mxu0 0.0
    %2295 = vmatpush.msra.mxu0 0.0
    %2296 = vmatpush.msra.mxu0 0.0
    %2297 = vmatpush.msra.mxu0 0.0
    %2298 = vmatpush.msra.mxu0 0.0
    %2299 = vmatpush.msra.mxu0 0.0
    %2300 = vmatpush.msra.mxu0 0.0
    %2301 = vmatpush.msra.mxu0 %v2092
    %2302 = vmatpush.msra.mxu0 %v2089
    %2303 = vmatmul.f32.gmra.mxu0 %v2095
    %v2304 = vpop.f32.mrf.mxu0
    %v2305 = vadd.f32 %v2270, %v2304
    %2306 = vmatmul.f32.gmra.mxu0 %v2098
    %v2307 = vpop.f32.mrf.mxu0
    %v2308 = vadd.f32 %v2273, %v2307
    %2309 = vmatmul.f32.gmra.mxu0 %v2101
    %v2310 = vpop.f32.mrf.mxu0
    %v2311 = vadd.f32 %v2276, %v2310
    %2312 = vmatmul.f32.gmra.mxu0 %v2104
    %v2313 = vpop.f32.mrf.mxu0
    %v2314 = vadd.f32 %v2279, %v2313
    %2315 = vmatmul.f32.gmra.mxu0 %v2107
    %v2316 = vpop.f32.mrf.mxu0
    %v2317 = vadd.f32 %v2282, %v2316
    %2318 = vmatmul.f32.gmra.mxu0 %v2110
    %v2319 = vpop.f32.mrf.mxu0
    %v2320 = vadd.f32 %v2285, %v2319
    %2321 = vdwg.mxu0
    %v2323 = vsel %vm2093, %v1872, 0
    %v2326 = vsel %vm2093, %v1875, 0
    %v2329 = vsel %vm2093, %v1878, 0
    %v2332 = vsel %vm2093, %v1881, 0
    %v2335 = vsel %vm2093, %v1884, 0
    %v2338 = vsel %vm2093, %v1887, 0
    %2340 = vmatpush.msra.mxu0 %v1934
    %2341 = vmatpush.msra.mxu0 %v1931
    %2342 = vmatpush.msra.mxu0 %v1928
    %2343 = vmatpush.msra.mxu0 %v1925
    %2344 = vmatpush.msra.mxu0 %v1922
    %2345 = vmatpush.msra.mxu0 %v1919
    %2346 = vmatpush.msra.mxu0 %v1916
    %2347 = vmatpush.msra.mxu0 %v1913
    %2348 = vmatpush.msra.mxu0 %v1910
    %2349 = vmatpush.msra.mxu0 %v1907
    %2350 = vmatpush.msra.mxu0 %v1904
    %2351 = vmatpush.msra.mxu0 %v1901
    %2352 = vmatpush.msra.mxu0 %v1898
    %2353 = vmatpush.msra.mxu0 %v1895
    %2354 = vmatpush.msra.mxu0 %v1892
    %2355 = vmatpush.msra.mxu0 %v1889
    %2356 = vmatmul.f32.gmra.mxu0 %v1837
    %v2357 = vpop.f32.mrf.mxu0
    %v2358 = vadd.f32 %v2165, %v2357
    %2359 = vmatmul.f32.gmra.mxu0 %v1840
    %v2360 = vpop.f32.mrf.mxu0
    %v2361 = vadd.f32 %v2168, %v2360
    %2362 = vmatmul.f32.gmra.mxu0 %v1843
    %v2363 = vpop.f32.mrf.mxu0
    %v2364 = vadd.f32 %v2171, %v2363
    %2365 = vmatmul.f32.gmra.mxu0 %v1846
    %v2366 = vpop.f32.mrf.mxu0
    %v2367 = vadd.f32 %v2174, %v2366
    %2368 = vmatmul.f32.gmra.mxu0 %v1849
    %v2369 = vpop.f32.mrf.mxu0
    %v2370 = vadd.f32 %v2177, %v2369
    %2371 = vmatmul.f32.gmra.mxu0 %v1852
    %v2372 = vpop.f32.mrf.mxu0
    %v2373 = vadd.f32 %v2180, %v2372
    %2374 = vdwg.mxu0
    %2375 = vmatpush.msra.mxu0 0.0
    %2376 = vmatpush.msra.mxu0 0.0
    %2377 = vmatpush.msra.mxu0 0.0
    %2378 = vmatpush.msra.mxu0 0.0
    %2379 = vmatpush.msra.mxu0 0.0
    %2380 = vmatpush.msra.mxu0 0.0
    %2381 = vmatpush.msra.mxu0 0.0
    %2382 = vmatpush.msra.mxu0 0.0
    %2383 = vmatpush.msra.mxu0 0.0
    %2384 = vmatpush.msra.mxu0 0.0
    %2385 = vmatpush.msra.mxu0 0.0
    %2386 = vmatpush.msra.mxu0 0.0
    %2387 = vmatpush.msra.mxu0 0.0
    %2388 = vmatpush.msra.mxu0 0.0
    %2389 = vmatpush.msra.mxu0 %v1940
    %2390 = vmatpush.msra.mxu0 %v1937
    %2391 = vmatmul.f32.gmra.mxu0 %v2323
    %v2392 = vpop.f32.mrf.mxu0
    %v2393 = vadd.f32 %v2358, %v2392
    %2394 = vmatmul.f32.gmra.mxu0 %v2326
    %v2395 = vpop.f32.mrf.mxu0
    %v2396 = vadd.f32 %v2361, %v2395
    %2397 = vmatmul.f32.gmra.mxu0 %v2329
    %v2398 = vpop.f32.mrf.mxu0
    %v2399 = vadd.f32 %v2364, %v2398
    %2400 = vmatmul.f32.gmra.mxu0 %v2332
    %v2401 = vpop.f32.mrf.mxu0
    %v2402 = vadd.f32 %v2367, %v2401
    %2403 = vmatmul.f32.gmra.mxu0 %v2335
    %v2404 = vpop.f32.mrf.mxu0
    %v2405 = vadd.f32 %v2370, %v2404
    %2406 = vmatmul.f32.gmra.mxu0 %v2338
    %v2407 = vpop.f32.mrf.mxu0
    %v2408 = vadd.f32 %v2373, %v2407
    %2409 = vdwg.mxu0
    %2410 = vmatpush.msra.mxu0 %v1935
    %2411 = vmatpush.msra.mxu0 %v1932
    %2412 = vmatpush.msra.mxu0 %v1929
    %2413 = vmatpush.msra.mxu0 %v1926
    %2414 = vmatpush.msra.mxu0 %v1923
    %2415 = vmatpush.msra.mxu0 %v1920
    %2416 = vmatpush.msra.mxu0 %v1917
    %2417 = vmatpush.msra.mxu0 %v1914
    %2418 = vmatpush.msra.mxu0 %v1911
    %2419 = vmatpush.msra.mxu0 %v1908
    %2420 = vmatpush.msra.mxu0 %v1905
    %2421 = vmatpush.msra.mxu0 %v1902
    %2422 = vmatpush.msra.mxu0 %v1899
    %2423 = vmatpush.msra.mxu0 %v1896
    %2424 = vmatpush.msra.mxu0 %v1893
    %2425 = vmatpush.msra.mxu0 %v1890
    %2426 = vmatmul.f32.gmra.mxu0 %v1837
    %v2427 = vpop.f32.mrf.mxu0
    %v2428 = vadd.f32 %v2235, %v2427
    %2429 = vmatmul.f32.gmra.mxu0 %v1840
    %v2430 = vpop.f32.mrf.mxu0
    %v2431 = vadd.f32 %v2238, %v2430
    %2432 = vmatmul.f32.gmra.mxu0 %v1843
    %v2433 = vpop.f32.mrf.mxu0
    %v2434 = vadd.f32 %v2241, %v2433
    %2435 = vmatmul.f32.gmra.mxu0 %v1846
    %v2436 = vpop.f32.mrf.mxu0
    %v2437 = vadd.f32 %v2244, %v2436
    %2438 = vmatmul.f32.gmra.mxu0 %v1849
    %v2439 = vpop.f32.mrf.mxu0
    %v2440 = vadd.f32 %v2247, %v2439
    %2441 = vmatmul.f32.gmra.mxu0 %v1852
    %v2442 = vpop.f32.mrf.mxu0
    %v2443 = vadd.f32 %v2250, %v2442
    %2444 = vdwg.mxu0
    %2445 = vmatpush.msra.mxu0 0.0
    %2446 = vmatpush.msra.mxu0 0.0
    %2447 = vmatpush.msra.mxu0 0.0
    %2448 = vmatpush.msra.mxu0 0.0
    %2449 = vmatpush.msra.mxu0 0.0
    %2450 = vmatpush.msra.mxu0 0.0
    %2451 = vmatpush.msra.mxu0 0.0
    %2452 = vmatpush.msra.mxu0 0.0
    %2453 = vmatpush.msra.mxu0 0.0
    %2454 = vmatpush.msra.mxu0 0.0
    %2455 = vmatpush.msra.mxu0 0.0
    %2456 = vmatpush.msra.mxu0 0.0
    %2457 = vmatpush.msra.mxu0 0.0
    %2458 = vmatpush.msra.mxu0 0.0
    %2459 = vmatpush.msra.mxu0 %v1941
    %2460 = vmatpush.msra.mxu0 %v1938
    %2461 = vmatmul.f32.gmra.mxu0 %v2323
    %v2462 = vpop.f32.mrf.mxu0
    %v2463 = vadd.f32 %v2428, %v2462
    %2464 = vmatmul.f32.gmra.mxu0 %v2326
    %v2465 = vpop.f32.mrf.mxu0
    %v2466 = vadd.f32 %v2431, %v2465
    %2467 = vmatmul.f32.gmra.mxu0 %v2329
    %v2468 = vpop.f32.mrf.mxu0
    %v2469 = vadd.f32 %v2434, %v2468
    %2470 = vmatmul.f32.gmra.mxu0 %v2332
    %v2471 = vpop.f32.mrf.mxu0
    %v2472 = vadd.f32 %v2437, %v2471
    %2473 = vmatmul.f32.gmra.mxu0 %v2335
    %v2474 = vpop.f32.mrf.mxu0
    %v2475 = vadd.f32 %v2440, %v2474
    %2476 = vmatmul.f32.gmra.mxu0 %v2338
    %v2477 = vpop.f32.mrf.mxu0
    %v2478 = vadd.f32 %v2443, %v2477
    %2479 = vdwg.mxu0
    %2480 = vmatpush.msra.mxu0 %v1936
    %2481 = vmatpush.msra.mxu0 %v1933
    %2482 = vmatpush.msra.mxu0 %v1930
    %2483 = vmatpush.msra.mxu0 %v1927
    %2484 = vmatpush.msra.mxu0 %v1924
    %2485 = vmatpush.msra.mxu0 %v1921
    %2486 = vmatpush.msra.mxu0 %v1918
    %2487 = vmatpush.msra.mxu0 %v1915
    %2488 = vmatpush.msra.mxu0 %v1912
    %2489 = vmatpush.msra.mxu0 %v1909
    %2490 = vmatpush.msra.mxu0 %v1906
    %2491 = vmatpush.msra.mxu0 %v1903
    %2492 = vmatpush.msra.mxu0 %v1900
    %2493 = vmatpush.msra.mxu0 %v1897
    %2494 = vmatpush.msra.mxu0 %v1894
    %2495 = vmatpush.msra.mxu0 %v1891
    %2496 = vmatmul.f32.gmra.mxu0 %v1837
    %v2497 = vpop.f32.mrf.mxu0
    %v2498 = vadd.f32 %v2305, %v2497
    %2499 = vmatmul.f32.gmra.mxu0 %v1840
    %v2500 = vpop.f32.mrf.mxu0
    %v2501 = vadd.f32 %v2308, %v2500
    %2502 = vmatmul.f32.gmra.mxu0 %v1843
    %v2503 = vpop.f32.mrf.mxu0
    %v2504 = vadd.f32 %v2311, %v2503
    %2505 = vmatmul.f32.gmra.mxu0 %v1846
    %v2506 = vpop.f32.mrf.mxu0
    %v2507 = vadd.f32 %v2314, %v2506
    %2508 = vmatmul.f32.gmra.mxu0 %v1849
    %v2509 = vpop.f32.mrf.mxu0
    %v2510 = vadd.f32 %v2317, %v2509
    %2511 = vmatmul.f32.gmra.mxu0 %v1852
    %v2512 = vpop.f32.mrf.mxu0
    %v2513 = vadd.f32 %v2320, %v2512
    %2514 = vdwg.mxu0
    %2515 = vmatpush.msra.mxu0 0.0
    %2516 = vmatpush.msra.mxu0 0.0
    %2517 = vmatpush.msra.mxu0 0.0
    %2518 = vmatpush.msra.mxu0 0.0
    %2519 = vmatpush.msra.mxu0 0.0
    %2520 = vmatpush.msra.mxu0 0.0
    %2521 = vmatpush.msra.mxu0 0.0
    %2522 = vmatpush.msra.mxu0 0.0
    %2523 = vmatpush.msra.mxu0 0.0
    %2524 = vmatpush.msra.mxu0 0.0
    %2525 = vmatpush.msra.mxu0 0.0
    %2526 = vmatpush.msra.mxu0 0.0
    %2527 = vmatpush.msra.mxu0 0.0
    %2528 = vmatpush.msra.mxu0 0.0
    %2529 = vmatpush.msra.mxu0 %v1942
    %2530 = vmatpush.msra.mxu0 %v1939
    %2531 = vmatmul.f32.gmra.mxu0 %v2323
    %v2532 = vpop.f32.mrf.mxu0
    %v2533 = vadd.f32 %v2498, %v2532
    %2534 = vmatmul.f32.gmra.mxu0 %v2326
    %v2535 = vpop.f32.mrf.mxu0
    %v2536 = vadd.f32 %v2501, %v2535
    %2537 = vmatmul.f32.gmra.mxu0 %v2329
    %v2538 = vpop.f32.mrf.mxu0
    %v2539 = vadd.f32 %v2504, %v2538
    %2540 = vmatmul.f32.gmra.mxu0 %v2332
    %v2541 = vpop.f32.mrf.mxu0
    %v2542 = vadd.f32 %v2507, %v2541
    %2543 = vmatmul.f32.gmra.mxu0 %v2335
    %v2544 = vpop.f32.mrf.mxu0
    %v2545 = vadd.f32 %v2510, %v2544
    %2546 = vmatmul.f32.gmra.mxu0 %v2338
    %v2547 = vpop.f32.mrf.mxu0
    %v2548 = vadd.f32 %v2513, %v2547
    %2549 = vdwg.mxu0
    %s2550 = scalar_lea.vmem [#allocation5], 96
    %v2551 = vld [vmem:[%s2550] sm:$0xff]
    %v2552 = vld [vmem:[%s2550 + $0x8] sm:$0xff]
    %v2553 = vld [vmem:[%s2550 + $0x10] sm:$0xff]
    %v2554 = vld [vmem:[%s2550 + $0x18] sm:$0xff]
    %v2555 = vld [vmem:[%s2550 + $0x20] sm:$0xff]
    %v2556 = vld [vmem:[%s2550 + $0x28] sm:$0xf]
    %v2558 = vsel %vm1800, %v2551, 0
    %v2561 = vsel %vm1800, %v2552, 0
    %v2564 = vsel %vm1800, %v2553, 0
    %v2567 = vsel %vm1800, %v2554, 0
    %v2570 = vsel %vm1800, %v2555, 0
    %v2573 = vsel %vm1800, %v2556, 0
    %2575 = vmatpush.msra.mxu0 0.0
    %2576 = vmatpush.msra.mxu0 0.0
    %2577 = vmatpush.msra.mxu0 0.0
    %2578 = vmatpush.msra.mxu0 0.0
    %2579 = vmatpush.msra.mxu0 0.0
    %2580 = vmatpush.msra.mxu0 0.0
    %2581 = vmatpush.msra.mxu0 0.0
    %2582 = vmatpush.msra.mxu0 0.0
    %2583 = vmatpush.msra.mxu0 0.0
    %2584 = vmatpush.msra.mxu0 0.0
    %2585 = vmatpush.msra.mxu0 %v1792
    %2586 = vmatpush.msra.mxu0 %v1790
    %2587 = vmatpush.msra.mxu0 %v1788
    %2588 = vmatpush.msra.mxu0 %v1786
    %2589 = vmatpush.msra.mxu0 %v1784
    %2590 = vmatpush.msra.mxu0 %v1782
    %2591 = vmatmul.f32.gmra.mxu0 %v2558
    %v2592 = vpop.f32.mrf.mxu0
    %v2593 = vadd.f32 0.0, %v2592
    %2594 = vmatmul.f32.gmra.mxu0 %v2561
    %v2595 = vpop.f32.mrf.mxu0
    %v2596 = vadd.f32 0.0, %v2595
    %2597 = vmatmul.f32.gmra.mxu0 %v2564
    %v2598 = vpop.f32.mrf.mxu0
    %v2599 = vadd.f32 0.0, %v2598
    %2600 = vmatmul.f32.gmra.mxu0 %v2567
    %v2601 = vpop.f32.mrf.mxu0
    %v2602 = vadd.f32 0.0, %v2601
    %2603 = vmatmul.f32.gmra.mxu0 %v2570
    %v2604 = vpop.f32.mrf.mxu0
    %v2605 = vadd.f32 0.0, %v2604
    %2606 = vmatmul.f32.gmra.mxu0 %v2573
    %v2607 = vpop.f32.mrf.mxu0
    %v2608 = vadd.f32 0.0, %v2607
    %2609 = vdwg.mxu0
    %2610 = vmatpush.msra.mxu0 0.0
    %2611 = vmatpush.msra.mxu0 0.0
    %2612 = vmatpush.msra.mxu0 0.0
    %2613 = vmatpush.msra.mxu0 0.0
    %2614 = vmatpush.msra.mxu0 0.0
    %2615 = vmatpush.msra.mxu0 0.0
    %2616 = vmatpush.msra.mxu0 0.0
    %2617 = vmatpush.msra.mxu0 0.0
    %2618 = vmatpush.msra.mxu0 0.0
    %2619 = vmatpush.msra.mxu0 0.0
    %2620 = vmatpush.msra.mxu0 %v1793
    %2621 = vmatpush.msra.mxu0 %v1791
    %2622 = vmatpush.msra.mxu0 %v1789
    %2623 = vmatpush.msra.mxu0 %v1787
    %2624 = vmatpush.msra.mxu0 %v1785
    %2625 = vmatpush.msra.mxu0 %v1783
    %2626 = vmatmul.f32.gmra.mxu0 %v2558
    %v2627 = vpop.f32.mrf.mxu0
    %v2628 = vadd.f32 0.0, %v2627
    %2629 = vmatmul.f32.gmra.mxu0 %v2561
    %v2630 = vpop.f32.mrf.mxu0
    %v2631 = vadd.f32 0.0, %v2630
    %2632 = vmatmul.f32.gmra.mxu0 %v2564
    %v2633 = vpop.f32.mrf.mxu0
    %v2634 = vadd.f32 0.0, %v2633
    %2635 = vmatmul.f32.gmra.mxu0 %v2567
    %v2636 = vpop.f32.mrf.mxu0
    %v2637 = vadd.f32 0.0, %v2636
    %2638 = vmatmul.f32.gmra.mxu0 %v2570
    %v2639 = vpop.f32.mrf.mxu0
    %v2640 = vadd.f32 0.0, %v2639
    %2641 = vmatmul.f32.gmra.mxu0 %v2573
    %v2642 = vpop.f32.mrf.mxu0
    %v2643 = vadd.f32 0.0, %v2642
    %2644 = vdwg.mxu0
    %s2645 = scalar_lea.vmem %s6, 864
    %v2646 = vld [vmem:[%s2645] sm:$0xff]
    %v2647 = vld [vmem:[%s2645 + $0x8] sm:$0xff]
    %v2648 = vld [vmem:[%s2645 + $0x10] sm:$0xff]
    %v2649 = vld [vmem:[%s2645 + $0x18] sm:$0xff]
    %v2650 = vld [vmem:[%s2645 + $0x20] sm:$0xff]
    %v2651 = vld [vmem:[%s2645 + $0x28] sm:$0xff]
    %v2652 = vld [vmem:[%s2645 + $0x30] sm:$0xff]
    %v2653 = vld [vmem:[%s2645 + $0x38] sm:$0xff]
    %v2654 = vld [vmem:[%s2645 + $0x40] sm:$0xff]
    %v2655 = vld [vmem:[%s2645 + $0x48] sm:$0xff]
    %v2656 = vld [vmem:[%s2645 + $0x50] sm:$0xff]
    %v2657 = vld [vmem:[%s2645 + $0x58] sm:$0xff]
    %v2658 = vld [vmem:[%s2645 + $0x60] sm:$0xff]
    %v2659 = vld [vmem:[%s2645 + $0x68] sm:$0xff]
    %v2660 = vld [vmem:[%s2645 + $0x70] sm:$0xff]
    %v2661 = vld [vmem:[%s2645 + $0x78] sm:$0xff]
    %v2662 = vld [vmem:[%s2645 + $0x80] sm:$0xff]
    %v2663 = vld [vmem:[%s2645 + $0x88] sm:$0xff]
    %v2664 = vld [vmem:[%s2645 + $0x90] sm:$0xff]
    %v2665 = vld [vmem:[%s2645 + $0x98] sm:$0xff]
    %v2666 = vld [vmem:[%s2645 + $0xa0] sm:$0xff]
    %v2667 = vld [vmem:[%s2645 + $0xa8] sm:$0xff]
    %v2668 = vld [vmem:[%s2645 + $0xb0] sm:$0xff]
    %v2669 = vld [vmem:[%s2645 + $0xb8] sm:$0xff]
    %v2670 = vld [vmem:[%s2645 + $0xc0] sm:$0xff]
    %v2671 = vld [vmem:[%s2645 + $0xc8] sm:$0xff]
    %v2672 = vld [vmem:[%s2645 + $0xd0] sm:$0xff]
    %v2673 = vld [vmem:[%s2645 + $0xd8] sm:$0xff]
    %v2674 = vld [vmem:[%s2645 + $0xe0] sm:$0xff]
    %v2675 = vld [vmem:[%s2645 + $0xe8] sm:$0xff]
    %v2676 = vld [vmem:[%s2645 + $0xf0] sm:$0xff]
    %v2677 = vld [vmem:[%s2645 + $0xf8] sm:$0xff]
    %v2678 = vld [vmem:[%s2645 + $0x100] sm:$0xff]
    %v2679 = vld [vmem:[%s2645 + $0x108] sm:$0xff]
    %v2680 = vld [vmem:[%s2645 + $0x110] sm:$0xff]
    %v2681 = vld [vmem:[%s2645 + $0x118] sm:$0xff]
    %v2682 = vld [vmem:[%s2645 + $0x120] sm:$0xff]
    %v2683 = vld [vmem:[%s2645 + $0x128] sm:$0xff]
    %v2684 = vld [vmem:[%s2645 + $0x130] sm:$0xff]
    %v2685 = vld [vmem:[%s2645 + $0x138] sm:$0xff]
    %v2686 = vld [vmem:[%s2645 + $0x140] sm:$0xff]
    %v2687 = vld [vmem:[%s2645 + $0x148] sm:$0xff]
    %v2688 = vld [vmem:[%s2645 + $0x150] sm:$0xff]
    %v2689 = vld [vmem:[%s2645 + $0x158] sm:$0xff]
    %v2690 = vld [vmem:[%s2645 + $0x160] sm:$0xff]
    %v2691 = vld [vmem:[%s2645 + $0x168] sm:$0xff]
    %v2692 = vld [vmem:[%s2645 + $0x170] sm:$0xff]
    %v2693 = vld [vmem:[%s2645 + $0x178] sm:$0xff]
    %v2694 = vld [vmem:[%s2645 + $0x180] sm:$0xff]
    %v2695 = vld [vmem:[%s2645 + $0x188] sm:$0xff]
    %v2696 = vld [vmem:[%s2645 + $0x190] sm:$0xff]
    %v2697 = vld [vmem:[%s2645 + $0x198] sm:$0xff]
    %v2698 = vld [vmem:[%s2645 + $0x1a0] sm:$0xff]
    %v2699 = vld [vmem:[%s2645 + $0x1a8] sm:$0xff]
    %v2701 = vsel %vm2093, %v2628, 0
    %v2704 = vsel %vm2093, %v2631, 0
    %v2707 = vsel %vm2093, %v2634, 0
    %v2710 = vsel %vm2093, %v2637, 0
    %v2713 = vsel %vm2093, %v2640, 0
    %v2716 = vsel %vm2093, %v2643, 0
    %2718 = vmatpush.msra.mxu0 %v2691
    %2719 = vmatpush.msra.mxu0 %v2688
    %2720 = vmatpush.msra.mxu0 %v2685
    %2721 = vmatpush.msra.mxu0 %v2682
    %2722 = vmatpush.msra.mxu0 %v2679
    %2723 = vmatpush.msra.mxu0 %v2676
    %2724 = vmatpush.msra.mxu0 %v2673
    %2725 = vmatpush.msra.mxu0 %v2670
    %2726 = vmatpush.msra.mxu0 %v2667
    %2727 = vmatpush.msra.mxu0 %v2664
    %2728 = vmatpush.msra.mxu0 %v2661
    %2729 = vmatpush.msra.mxu0 %v2658
    %2730 = vmatpush.msra.mxu0 %v2655
    %2731 = vmatpush.msra.mxu0 %v2652
    %2732 = vmatpush.msra.mxu0 %v2649
    %2733 = vmatpush.msra.mxu0 %v2646
    %2734 = vmatmul.f32.gmra.mxu0 %v2593
    %v2735 = vpop.f32.mrf.mxu0
    %v2736 = vadd.f32 0.0, %v2735
    %2737 = vmatmul.f32.gmra.mxu0 %v2596
    %v2738 = vpop.f32.mrf.mxu0
    %v2739 = vadd.f32 0.0, %v2738
    %2740 = vmatmul.f32.gmra.mxu0 %v2599
    %v2741 = vpop.f32.mrf.mxu0
    %v2742 = vadd.f32 0.0, %v2741
    %2743 = vmatmul.f32.gmra.mxu0 %v2602
    %v2744 = vpop.f32.mrf.mxu0
    %v2745 = vadd.f32 0.0, %v2744
    %2746 = vmatmul.f32.gmra.mxu0 %v2605
    %v2747 = vpop.f32.mrf.mxu0
    %v2748 = vadd.f32 0.0, %v2747
    %2749 = vmatmul.f32.gmra.mxu0 %v2608
    %v2750 = vpop.f32.mrf.mxu0
    %v2751 = vadd.f32 0.0, %v2750
    %2752 = vdwg.mxu0
    %2753 = vmatpush.msra.mxu0 0.0
    %2754 = vmatpush.msra.mxu0 0.0
    %2755 = vmatpush.msra.mxu0 0.0
    %2756 = vmatpush.msra.mxu0 0.0
    %2757 = vmatpush.msra.mxu0 0.0
    %2758 = vmatpush.msra.mxu0 0.0
    %2759 = vmatpush.msra.mxu0 0.0
    %2760 = vmatpush.msra.mxu0 0.0
    %2761 = vmatpush.msra.mxu0 0.0
    %2762 = vmatpush.msra.mxu0 0.0
    %2763 = vmatpush.msra.mxu0 0.0
    %2764 = vmatpush.msra.mxu0 0.0
    %2765 = vmatpush.msra.mxu0 0.0
    %2766 = vmatpush.msra.mxu0 0.0
    %2767 = vmatpush.msra.mxu0 %v2697
    %2768 = vmatpush.msra.mxu0 %v2694
    %2769 = vmatmul.f32.gmra.mxu0 %v2701
    %v2770 = vpop.f32.mrf.mxu0
    %v2771 = vadd.f32 %v2736, %v2770
    %2772 = vmatmul.f32.gmra.mxu0 %v2704
    %v2773 = vpop.f32.mrf.mxu0
    %v2774 = vadd.f32 %v2739, %v2773
    %2775 = vmatmul.f32.gmra.mxu0 %v2707
    %v2776 = vpop.f32.mrf.mxu0
    %v2777 = vadd.f32 %v2742, %v2776
    %2778 = vmatmul.f32.gmra.mxu0 %v2710
    %v2779 = vpop.f32.mrf.mxu0
    %v2780 = vadd.f32 %v2745, %v2779
    %2781 = vmatmul.f32.gmra.mxu0 %v2713
    %v2782 = vpop.f32.mrf.mxu0
    %v2783 = vadd.f32 %v2748, %v2782
    %2784 = vmatmul.f32.gmra.mxu0 %v2716
    %v2785 = vpop.f32.mrf.mxu0
    %v2786 = vadd.f32 %v2751, %v2785
    %2787 = vdwg.mxu0
    %2788 = vmatpush.msra.mxu0 %v2692
    %2789 = vmatpush.msra.mxu0 %v2689
    %2790 = vmatpush.msra.mxu0 %v2686
    %2791 = vmatpush.msra.mxu0 %v2683
    %2792 = vmatpush.msra.mxu0 %v2680
    %2793 = vmatpush.msra.mxu0 %v2677
    %2794 = vmatpush.msra.mxu0 %v2674
    %2795 = vmatpush.msra.mxu0 %v2671
    %2796 = vmatpush.msra.mxu0 %v2668
    %2797 = vmatpush.msra.mxu0 %v2665
    %2798 = vmatpush.msra.mxu0 %v2662
    %2799 = vmatpush.msra.mxu0 %v2659
    %2800 = vmatpush.msra.mxu0 %v2656
    %2801 = vmatpush.msra.mxu0 %v2653
    %2802 = vmatpush.msra.mxu0 %v2650
    %2803 = vmatpush.msra.mxu0 %v2647
    %2804 = vmatmul.f32.gmra.mxu0 %v2593
    %v2805 = vpop.f32.mrf.mxu0
    %v2806 = vadd.f32 0.0, %v2805
    %2807 = vmatmul.f32.gmra.mxu0 %v2596
    %v2808 = vpop.f32.mrf.mxu0
    %v2809 = vadd.f32 0.0, %v2808
    %2810 = vmatmul.f32.gmra.mxu0 %v2599
    %v2811 = vpop.f32.mrf.mxu0
    %v2812 = vadd.f32 0.0, %v2811
    %2813 = vmatmul.f32.gmra.mxu0 %v2602
    %v2814 = vpop.f32.mrf.mxu0
    %v2815 = vadd.f32 0.0, %v2814
    %2816 = vmatmul.f32.gmra.mxu0 %v2605
    %v2817 = vpop.f32.mrf.mxu0
    %v2818 = vadd.f32 0.0, %v2817
    %2819 = vmatmul.f32.gmra.mxu0 %v2608
    %v2820 = vpop.f32.mrf.mxu0
    %v2821 = vadd.f32 0.0, %v2820
    %2822 = vdwg.mxu0
    %2823 = vmatpush.msra.mxu0 0.0
    %2824 = vmatpush.msra.mxu0 0.0
    %2825 = vmatpush.msra.mxu0 0.0
    %2826 = vmatpush.msra.mxu0 0.0
    %2827 = vmatpush.msra.mxu0 0.0
    %2828 = vmatpush.msra.mxu0 0.0
    %2829 = vmatpush.msra.mxu0 0.0
    %2830 = vmatpush.msra.mxu0 0.0
    %2831 = vmatpush.msra.mxu0 0.0
    %2832 = vmatpush.msra.mxu0 0.0
    %2833 = vmatpush.msra.mxu0 0.0
    %2834 = vmatpush.msra.mxu0 0.0
    %2835 = vmatpush.msra.mxu0 0.0
    %2836 = vmatpush.msra.mxu0 0.0
    %2837 = vmatpush.msra.mxu0 %v2698
    %2838 = vmatpush.msra.mxu0 %v2695
    %2839 = vmatmul.f32.gmra.mxu0 %v2701
    %v2840 = vpop.f32.mrf.mxu0
    %v2841 = vadd.f32 %v2806, %v2840
    %2842 = vmatmul.f32.gmra.mxu0 %v2704
    %v2843 = vpop.f32.mrf.mxu0
    %v2844 = vadd.f32 %v2809, %v2843
    %2845 = vmatmul.f32.gmra.mxu0 %v2707
    %v2846 = vpop.f32.mrf.mxu0
    %v2847 = vadd.f32 %v2812, %v2846
    %2848 = vmatmul.f32.gmra.mxu0 %v2710
    %v2849 = vpop.f32.mrf.mxu0
    %v2850 = vadd.f32 %v2815, %v2849
    %2851 = vmatmul.f32.gmra.mxu0 %v2713
    %v2852 = vpop.f32.mrf.mxu0
    %v2853 = vadd.f32 %v2818, %v2852
    %2854 = vmatmul.f32.gmra.mxu0 %v2716
    %v2855 = vpop.f32.mrf.mxu0
    %v2856 = vadd.f32 %v2821, %v2855
    %2857 = vdwg.mxu0
    %2858 = vmatpush.msra.mxu0 %v2693
    %2859 = vmatpush.msra.mxu0 %v2690
    %2860 = vmatpush.msra.mxu0 %v2687
    %2861 = vmatpush.msra.mxu0 %v2684
    %2862 = vmatpush.msra.mxu0 %v2681
    %2863 = vmatpush.msra.mxu0 %v2678
    %2864 = vmatpush.msra.mxu0 %v2675
    %2865 = vmatpush.msra.mxu0 %v2672
    %2866 = vmatpush.msra.mxu0 %v2669
    %2867 = vmatpush.msra.mxu0 %v2666
    %2868 = vmatpush.msra.mxu0 %v2663
    %2869 = vmatpush.msra.mxu0 %v2660
    %2870 = vmatpush.msra.mxu0 %v2657
    %2871 = vmatpush.msra.mxu0 %v2654
    %2872 = vmatpush.msra.mxu0 %v2651
    %2873 = vmatpush.msra.mxu0 %v2648
    %2874 = vmatmul.f32.gmra.mxu0 %v2593
    %v2875 = vpop.f32.mrf.mxu0
    %v2876 = vadd.f32 0.0, %v2875
    %2877 = vmatmul.f32.gmra.mxu0 %v2596
    %v2878 = vpop.f32.mrf.mxu0
    %v2879 = vadd.f32 0.0, %v2878
    %2880 = vmatmul.f32.gmra.mxu0 %v2599
    %v2881 = vpop.f32.mrf.mxu0
    %v2882 = vadd.f32 0.0, %v2881
    %2883 = vmatmul.f32.gmra.mxu0 %v2602
    %v2884 = vpop.f32.mrf.mxu0
    %v2885 = vadd.f32 0.0, %v2884
    %2886 = vmatmul.f32.gmra.mxu0 %v2605
    %v2887 = vpop.f32.mrf.mxu0
    %v2888 = vadd.f32 0.0, %v2887
    %2889 = vmatmul.f32.gmra.mxu0 %v2608
    %v2890 = vpop.f32.mrf.mxu0
    %v2891 = vadd.f32 0.0, %v2890
    %2892 = vdwg.mxu0
    %2893 = vmatpush.msra.mxu0 0.0
    %2894 = vmatpush.msra.mxu0 0.0
    %2895 = vmatpush.msra.mxu0 0.0
    %2896 = vmatpush.msra.mxu0 0.0
    %2897 = vmatpush.msra.mxu0 0.0
    %2898 = vmatpush.msra.mxu0 0.0
    %2899 = vmatpush.msra.mxu0 0.0
    %2900 = vmatpush.msra.mxu0 0.0
    %2901 = vmatpush.msra.mxu0 0.0
    %2902 = vmatpush.msra.mxu0 0.0
    %2903 = vmatpush.msra.mxu0 0.0
    %2904 = vmatpush.msra.mxu0 0.0
    %2905 = vmatpush.msra.mxu0 0.0
    %2906 = vmatpush.msra.mxu0 0.0
    %2907 = vmatpush.msra.mxu0 %v2699
    %2908 = vmatpush.msra.mxu0 %v2696
    %2909 = vmatmul.f32.gmra.mxu0 %v2701
    %v2910 = vpop.f32.mrf.mxu0
    %v2911 = vadd.f32 %v2876, %v2910
    %2912 = vmatmul.f32.gmra.mxu0 %v2704
    %v2913 = vpop.f32.mrf.mxu0
    %v2914 = vadd.f32 %v2879, %v2913
    %2915 = vmatmul.f32.gmra.mxu0 %v2707
    %v2916 = vpop.f32.mrf.mxu0
    %v2917 = vadd.f32 %v2882, %v2916
    %2918 = vmatmul.f32.gmra.mxu0 %v2710
    %v2919 = vpop.f32.mrf.mxu0
    %v2920 = vadd.f32 %v2885, %v2919
    %2921 = vmatmul.f32.gmra.mxu0 %v2713
    %v2922 = vpop.f32.mrf.mxu0
    %v2923 = vadd.f32 %v2888, %v2922
    %2924 = vmatmul.f32.gmra.mxu0 %v2716
    %v2925 = vpop.f32.mrf.mxu0
    %v2926 = vadd.f32 %v2891, %v2925
    %2927 = vdwg.mxu0
    %v2928 = vadd.f32 %v2393, %v2771
    %v2929 = vadd.f32 %v2463, %v2841
    %v2930 = vadd.f32 %v2533, %v2911
    %v2931 = vadd.f32 %v2396, %v2774
    %v2932 = vadd.f32 %v2466, %v2844
    %v2933 = vadd.f32 %v2536, %v2914
    %v2934 = vadd.f32 %v2399, %v2777
    %v2935 = vadd.f32 %v2469, %v2847
    %v2936 = vadd.f32 %v2539, %v2917
    %v2937 = vadd.f32 %v2402, %v2780
    %v2938 = vadd.f32 %v2472, %v2850
    %v2939 = vadd.f32 %v2542, %v2920
    %v2940 = vadd.f32 %v2405, %v2783
    %v2941 = vadd.f32 %v2475, %v2853
    %v2942 = vadd.f32 %v2545, %v2923
    %v2943 = vadd.f32 %v2408, %v2786
    %v2944 = vadd.f32 %v2478, %v2856
    %v2945 = vadd.f32 %v2548, %v2926
    %v2946 = vld [vmem:[%s7] sm:$0x7]
    %v2948 = vperm.slane %v2946, 0
    %v2949 = vperm.slane %v2946, 1
    %v2950 = vperm.slane %v2946, 2
    %v2954 = vadd.f32 %v2928, %v2948
    %v2955 = vadd.f32 %v2929, %v2949
    %v2956 = vadd.f32 %v2930, %v2950
    %v2957 = vadd.f32 %v2931, %v2948
    %v2958 = vadd.f32 %v2932, %v2949
    %v2959 = vadd.f32 %v2933, %v2950
    %v2960 = vadd.f32 %v2934, %v2948
    %v2961 = vadd.f32 %v2935, %v2949
    %v2962 = vadd.f32 %v2936, %v2950
    %v2963 = vadd.f32 %v2937, %v2948
    %v2964 = vadd.f32 %v2938, %v2949
    %v2965 = vadd.f32 %v2939, %v2950
    %v2966 = vadd.f32 %v2940, %v2948
    %v2967 = vadd.f32 %v2941, %v2949
    %v2968 = vadd.f32 %v2942, %v2950
    %v2969 = vadd.f32 %v2943, %v2948
    %v2970 = vadd.f32 %v2944, %v2949
    %v2971 = vadd.f32 %v2945, %v2950
    %v2972 = vmax.f32 %v2954, 0.0
    %v2973 = vmax.f32 %v2955, 0.0
    %v2974 = vmax.f32 %v2956, 0.0
    %v2975 = vmax.f32 %v2957, 0.0
    %v2976 = vmax.f32 %v2958, 0.0
    %v2977 = vmax.f32 %v2959, 0.0
    %v2978 = vmax.f32 %v2960, 0.0
    %v2979 = vmax.f32 %v2961, 0.0
    %v2980 = vmax.f32 %v2962, 0.0
    %v2981 = vmax.f32 %v2963, 0.0
    %v2982 = vmax.f32 %v2964, 0.0
    %v2983 = vmax.f32 %v2965, 0.0
    %v2984 = vmax.f32 %v2966, 0.0
    %v2985 = vmax.f32 %v2967, 0.0
    %v2986 = vmax.f32 %v2968, 0.0
    %v2987 = vmax.f32 %v2969, 0.0
    %v2988 = vmax.f32 %v2970, 0.0
    %v2989 = vmax.f32 %v2971, 0.0
    %v2990 = vld [vmem:[%s8] sm:$0xff]
    %v2991 = vld [vmem:[%s8 + $0x8] sm:$0xff]
    %v2992 = vld [vmem:[%s8 + $0x10] sm:$0x3f]
    %vm2993 = vcmask 359424
    %v2995 = vsel %vm2993, %v2990, 0
    %v2998 = vsel %vm2993, %v2991, 0
    %v3001 = vsel %vm2993, %v2992, 0
    %vm3003 = vcmask 1043456
    %v3005 = vsel %vm3003, %v2987, 0
    %v3008 = vsel %vm3003, %v2988, 0
    %v3011 = vsel %vm3003, %v2989, 0
    %3013 = vmatpush.msra.mxu0 0.0
    %3014 = vmatpush.msra.mxu0 0.0
    %3015 = vmatpush.msra.mxu0 0.0
    %3016 = vmatpush.msra.mxu0 0.0
    %3017 = vmatpush.msra.mxu0 0.0
    %3018 = vmatpush.msra.mxu0 0.0
    %3019 = vmatpush.msra.mxu0 0.0
    %3020 = vmatpush.msra.mxu0 0.0
    %3021 = vmatpush.msra.mxu0 0.0
    %3022 = vmatpush.msra.mxu0 0.0
    %3023 = vmatpush.msra.mxu0 %v3005
    %3024 = vmatpush.msra.mxu0 %v2984
    %3025 = vmatpush.msra.mxu0 %v2981
    %3026 = vmatpush.msra.mxu0 %v2978
    %3027 = vmatpush.msra.mxu0 %v2975
    %3028 = vmatpush.msra.mxu0 %v2972
    %3029 = vmatmul.f32.gmra.mxu0 %v2995
    %v3030 = vpop.f32.mrf.mxu0
    %v3031 = vadd.f32 0.0, %v3030
    %3032 = vmatmul.f32.gmra.mxu0 %v2998
    %v3033 = vpop.f32.mrf.mxu0
    %v3034 = vadd.f32 0.0, %v3033
    %3035 = vmatmul.f32.gmra.mxu0 %v3001
    %v3036 = vpop.f32.mrf.mxu0
    %v3037 = vadd.f32 0.0, %v3036
    %3038 = vdwg.mxu0
    %3039 = vmatpush.msra.mxu0 0.0
    %3040 = vmatpush.msra.mxu0 0.0
    %3041 = vmatpush.msra.mxu0 0.0
    %3042 = vmatpush.msra.mxu0 0.0
    %3043 = vmatpush.msra.mxu0 0.0
    %3044 = vmatpush.msra.mxu0 0.0
    %3045 = vmatpush.msra.mxu0 0.0
    %3046 = vmatpush.msra.mxu0 0.0
    %3047 = vmatpush.msra.mxu0 0.0
    %3048 = vmatpush.msra.mxu0 0.0
    %3049 = vmatpush.msra.mxu0 %v3008
    %3050 = vmatpush.msra.mxu0 %v2985
    %3051 = vmatpush.msra.mxu0 %v2982
    %3052 = vmatpush.msra.mxu0 %v2979
    %3053 = vmatpush.msra.mxu0 %v2976
    %3054 = vmatpush.msra.mxu0 %v2973
    %3055 = vmatmul.f32.gmra.mxu0 %v2995
    %v3056 = vpop.f32.mrf.mxu0
    %v3057 = vadd.f32 0.0, %v3056
    %3058 = vmatmul.f32.gmra.mxu0 %v2998
    %v3059 = vpop.f32.mrf.mxu0
    %v3060 = vadd.f32 0.0, %v3059
    %3061 = vmatmul.f32.gmra.mxu0 %v3001
    %v3062 = vpop.f32.mrf.mxu0
    %v3063 = vadd.f32 0.0, %v3062
    %3064 = vdwg.mxu0
    %3065 = vmatpush.msra.mxu0 0.0
    %3066 = vmatpush.msra.mxu0 0.0
    %3067 = vmatpush.msra.mxu0 0.0
    %3068 = vmatpush.msra.mxu0 0.0
    %3069 = vmatpush.msra.mxu0 0.0
    %3070 = vmatpush.msra.mxu0 0.0
    %3071 = vmatpush.msra.mxu0 0.0
    %3072 = vmatpush.msra.mxu0 0.0
    %3073 = vmatpush.msra.mxu0 0.0
    %3074 = vmatpush.msra.mxu0 0.0
    %3075 = vmatpush.msra.mxu0 %v3011
    %3076 = vmatpush.msra.mxu0 %v2986
    %3077 = vmatpush.msra.mxu0 %v2983
    %3078 = vmatpush.msra.mxu0 %v2980
    %3079 = vmatpush.msra.mxu0 %v2977
    %3080 = vmatpush.msra.mxu0 %v2974
    %3081 = vmatmul.f32.gmra.mxu0 %v2995
    %v3082 = vpop.f32.mrf.mxu0
    %v3083 = vadd.f32 0.0, %v3082
    %3084 = vmatmul.f32.gmra.mxu0 %v2998
    %v3085 = vpop.f32.mrf.mxu0
    %v3086 = vadd.f32 0.0, %v3085
    %3087 = vmatmul.f32.gmra.mxu0 %v3001
    %v3088 = vpop.f32.mrf.mxu0
    %v3089 = vadd.f32 0.0, %v3088
    %3090 = vdwg.mxu0
    %s3091 = scalar_lea.vmem %s8, 24
    %v3092 = vld [vmem:[%s3091] sm:$0xff]
    %v3093 = vld [vmem:[%s3091 + $0x8] sm:$0xff]
    %v3094 = vld [vmem:[%s3091 + $0x10] sm:$0x3f]
    %v3096 = vsel %vm2993, %v3092, 0
    %v3099 = vsel %vm2993, %v3093, 0
    %v3102 = vsel %vm2993, %v3094, 0
    %3104 = vmatpush.msra.mxu0 0.0
    %3105 = vmatpush.msra.mxu0 0.0
    %3106 = vmatpush.msra.mxu0 0.0
    %3107 = vmatpush.msra.mxu0 0.0
    %3108 = vmatpush.msra.mxu0 0.0
    %3109 = vmatpush.msra.mxu0 0.0
    %3110 = vmatpush.msra.mxu0 0.0
    %3111 = vmatpush.msra.mxu0 0.0
    %3112 = vmatpush.msra.mxu0 0.0
    %3113 = vmatpush.msra.mxu0 0.0
    %3114 = vmatpush.msra.mxu0 %v3005
    %3115 = vmatpush.msra.mxu0 %v2984
    %3116 = vmatpush.msra.mxu0 %v2981
    %3117 = vmatpush.msra.mxu0 %v2978
    %3118 = vmatpush.msra.mxu0 %v2975
    %3119 = vmatpush.msra.mxu0 %v2972
    %3120 = vmatmul.f32.gmra.mxu0 %v3096
    %v3121 = vpop.f32.mrf.mxu0
    %v3122 = vadd.f32 0.0, %v3121
    %3123 = vmatmul.f32.gmra.mxu0 %v3099
    %v3124 = vpop.f32.mrf.mxu0
    %v3125 = vadd.f32 0.0, %v3124
    %3126 = vmatmul.f32.gmra.mxu0 %v3102
    %v3127 = vpop.f32.mrf.mxu0
    %v3128 = vadd.f32 0.0, %v3127
    %3129 = vdwg.mxu0
    %3130 = vmatpush.msra.mxu0 0.0
    %3131 = vmatpush.msra.mxu0 0.0
    %3132 = vmatpush.msra.mxu0 0.0
    %3133 = vmatpush.msra.mxu0 0.0
    %3134 = vmatpush.msra.mxu0 0.0
    %3135 = vmatpush.msra.mxu0 0.0
    %3136 = vmatpush.msra.mxu0 0.0
    %3137 = vmatpush.msra.mxu0 0.0
    %3138 = vmatpush.msra.mxu0 0.0
    %3139 = vmatpush.msra.mxu0 0.0
    %3140 = vmatpush.msra.mxu0 %v3008
    %3141 = vmatpush.msra.mxu0 %v2985
    %3142 = vmatpush.msra.mxu0 %v2982
    %3143 = vmatpush.msra.mxu0 %v2979
    %3144 = vmatpush.msra.mxu0 %v2976
    %3145 = vmatpush.msra.mxu0 %v2973
    %3146 = vmatmul.f32.gmra.mxu0 %v3096
    %v3147 = vpop.f32.mrf.mxu0
    %v3148 = vadd.f32 0.0, %v3147
    %3149 = vmatmul.f32.gmra.mxu0 %v3099
    %v3150 = vpop.f32.mrf.mxu0
    %v3151 = vadd.f32 0.0, %v3150
    %3152 = vmatmul.f32.gmra.mxu0 %v3102
    %v3153 = vpop.f32.mrf.mxu0
    %v3154 = vadd.f32 0.0, %v3153
    %3155 = vdwg.mxu0
    %3156 = vmatpush.msra.mxu0 0.0
    %3157 = vmatpush.msra.mxu0 0.0
    %3158 = vmatpush.msra.mxu0 0.0
    %3159 = vmatpush.msra.mxu0 0.0
    %3160 = vmatpush.msra.mxu0 0.0
    %3161 = vmatpush.msra.mxu0 0.0
    %3162 = vmatpush.msra.mxu0 0.0
    %3163 = vmatpush.msra.mxu0 0.0
    %3164 = vmatpush.msra.mxu0 0.0
    %3165 = vmatpush.msra.mxu0 0.0
    %3166 = vmatpush.msra.mxu0 %v3011
    %3167 = vmatpush.msra.mxu0 %v2986
    %3168 = vmatpush.msra.mxu0 %v2983
    %3169 = vmatpush.msra.mxu0 %v2980
    %3170 = vmatpush.msra.mxu0 %v2977
    %3171 = vmatpush.msra.mxu0 %v2974
    %3172 = vmatmul.f32.gmra.mxu0 %v3096
    %v3173 = vpop.f32.mrf.mxu0
    %v3174 = vadd.f32 0.0, %v3173
    %3175 = vmatmul.f32.gmra.mxu0 %v3099
    %v3176 = vpop.f32.mrf.mxu0
    %v3177 = vadd.f32 0.0, %v3176
    %3178 = vmatmul.f32.gmra.mxu0 %v3102
    %v3179 = vpop.f32.mrf.mxu0
    %v3180 = vadd.f32 0.0, %v3179
    %3181 = vdwg.mxu0
    %v3182 = vmax.f32 %v3031, %v3122
    %v3183 = vmax.f32 %v3057, %v3148
    %v3184 = vmax.f32 %v3083, %v3174
    %v3185 = vmax.f32 %v3034, %v3125
    %v3186 = vmax.f32 %v3060, %v3151
    %v3187 = vmax.f32 %v3086, %v3177
    %v3188 = vmax.f32 %v3037, %v3128
    %v3189 = vmax.f32 %v3063, %v3154
    %v3190 = vmax.f32 %v3089, %v3180
    %v3191 = vld [vmem:[%s9] sm:$0xff]
    %v3192 = vld [vmem:[%s9 + $0x8] sm:$0xff]
    %v3193 = vld [vmem:[%s9 + $0x10] sm:$0xff]
    %v3194 = vld [vmem:[%s9 + $0x18] sm:$0xff]
    %v3195 = vld [vmem:[%s9 + $0x20] sm:$0xff]
    %v3196 = vld [vmem:[%s9 + $0x28] sm:$0xff]
    %v3197 = vld [vmem:[%s9 + $0x30] sm:$0xff]
    %v3198 = vld [vmem:[%s9 + $0x38] sm:$0xff]
    %v3199 = vld [vmem:[%s9 + $0x40] sm:$0xff]
    %v3200 = vld [vmem:[%s9 + $0x48] sm:$0xff]
    %v3201 = vld [vmem:[%s9 + $0x50] sm:$0xff]
    %v3202 = vld [vmem:[%s9 + $0x58] sm:$0xff]
    %v3203 = vld [vmem:[%s9 + $0x60] sm:$0xff]
    %v3204 = vld [vmem:[%s9 + $0x68] sm:$0xff]
    %v3205 = vld [vmem:[%s9 + $0x70] sm:$0xff]
    %v3206 = vld [vmem:[%s9 + $0x78] sm:$0xff]
    %v3207 = vld [vmem:[%s9 + $0x80] sm:$0xff]
    %v3208 = vld [vmem:[%s9 + $0x88] sm:$0xff]
    %v3209 = vld [vmem:[%s9 + $0x90] sm:$0xff]
    %v3210 = vld [vmem:[%s9 + $0x98] sm:$0xff]
    %v3211 = vld [vmem:[%s9 + $0xa0] sm:$0xff]
    %v3212 = vld [vmem:[%s9 + $0xa8] sm:$0xff]
    %v3213 = vld [vmem:[%s9 + $0xb0] sm:$0xff]
    %v3214 = vld [vmem:[%s9 + $0xb8] sm:$0xff]
    %v3215 = vld [vmem:[%s9 + $0xc0] sm:$0xff]
    %v3216 = vld [vmem:[%s9 + $0xc8] sm:$0xff]
    %v3217 = vld [vmem:[%s9 + $0xd0] sm:$0xff]
    %v3218 = vld [vmem:[%s9 + $0xd8] sm:$0xff]
    %v3219 = vld [vmem:[%s9 + $0xe0] sm:$0xff]
    %v3220 = vld [vmem:[%s9 + $0xe8] sm:$0xff]
    %v3221 = vld [vmem:[%s9 + $0xf0] sm:$0xff]
    %v3222 = vld [vmem:[%s9 + $0xf8] sm:$0xff]
    %v3223 = vld [vmem:[%s9 + $0x100] sm:$0xff]
    %v3224 = vld [vmem:[%s9 + $0x108] sm:$0xff]
    %v3225 = vld [vmem:[%s9 + $0x110] sm:$0xff]
    %v3226 = vld [vmem:[%s9 + $0x118] sm:$0xff]
    %v3227 = vld [vmem:[%s9 + $0x120] sm:$0xff]
    %v3228 = vld [vmem:[%s9 + $0x128] sm:$0xff]
    %v3229 = vld [vmem:[%s9 + $0x130] sm:$0xff]
    %v3230 = vld [vmem:[%s9 + $0x138] sm:$0xff]
    %v3231 = vld [vmem:[%s9 + $0x140] sm:$0xff]
    %v3232 = vld [vmem:[%s9 + $0x148] sm:$0xff]
    %v3233 = vld [vmem:[%s9 + $0x150] sm:$0xff]
    %v3234 = vld [vmem:[%s9 + $0x158] sm:$0xff]
    %v3235 = vld [vmem:[%s9 + $0x160] sm:$0xff]
    %v3236 = vld [vmem:[%s9 + $0x168] sm:$0xff]
    %v3237 = vld [vmem:[%s9 + $0x170] sm:$0xff]
    %v3238 = vld [vmem:[%s9 + $0x178] sm:$0xff]
    %v3239 = vld [vmem:[%s9 + $0x180] sm:$0xff]
    %v3240 = vld [vmem:[%s9 + $0x188] sm:$0xff]
    %v3241 = vld [vmem:[%s9 + $0x190] sm:$0xff]
    %v3242 = vld [vmem:[%s9 + $0x198] sm:$0xff]
    %v3243 = vld [vmem:[%s9 + $0x1a0] sm:$0xff]
    %v3244 = vld [vmem:[%s9 + $0x1a8] sm:$0xff]
    %v3245 = vld [vmem:[%s9 + $0x1b0] sm:$0xff]
    %v3246 = vld [vmem:[%s9 + $0x1b8] sm:$0xff]
    %v3247 = vld [vmem:[%s9 + $0x1c0] sm:$0xff]
    %v3248 = vld [vmem:[%s9 + $0x1c8] sm:$0xff]
    %v3249 = vld [vmem:[%s9 + $0x1d0] sm:$0xff]
    %v3250 = vld [vmem:[%s9 + $0x1d8] sm:$0xff]
    %v3251 = vld [vmem:[%s9 + $0x1e0] sm:$0xff]
    %v3252 = vld [vmem:[%s9 + $0x1e8] sm:$0xff]
    %v3253 = vld [vmem:[%s9 + $0x1f0] sm:$0xff]
    %v3254 = vld [vmem:[%s9 + $0x1f8] sm:$0xff]
    %v3255 = vld [vmem:[%s9 + $0x200] sm:$0xff]
    %v3256 = vld [vmem:[%s9 + $0x208] sm:$0xff]
    %v3257 = vld [vmem:[%s9 + $0x210] sm:$0xff]
    %v3258 = vld [vmem:[%s9 + $0x218] sm:$0xff]
    %v3259 = vld [vmem:[%s9 + $0x220] sm:$0xff]
    %v3260 = vld [vmem:[%s9 + $0x228] sm:$0xff]
    %v3261 = vld [vmem:[%s9 + $0x230] sm:$0xff]
    %v3262 = vld [vmem:[%s9 + $0x238] sm:$0xff]
    %v3263 = vld [vmem:[%s9 + $0x240] sm:$0xff]
    %v3264 = vld [vmem:[%s9 + $0x248] sm:$0xff]
    %v3265 = vld [vmem:[%s9 + $0x250] sm:$0xff]
    %v3266 = vld [vmem:[%s9 + $0x258] sm:$0xff]
    %v3267 = vld [vmem:[%s9 + $0x260] sm:$0xff]
    %v3268 = vld [vmem:[%s9 + $0x268] sm:$0xff]
    %v3269 = vld [vmem:[%s9 + $0x270] sm:$0xff]
    %v3270 = vld [vmem:[%s9 + $0x278] sm:$0xff]
    %v3271 = vld [vmem:[%s9 + $0x280] sm:$0xff]
    %v3272 = vld [vmem:[%s9 + $0x288] sm:$0xff]
    %v3273 = vld [vmem:[%s9 + $0x290] sm:$0xff]
    %v3274 = vld [vmem:[%s9 + $0x298] sm:$0xff]
    %v3275 = vld [vmem:[%s9 + $0x2a0] sm:$0xff]
    %v3276 = vld [vmem:[%s9 + $0x2a8] sm:$0xff]
    %v3277 = vld [vmem:[%s9 + $0x2b0] sm:$0xff]
    %v3278 = vld [vmem:[%s9 + $0x2b8] sm:$0xff]
    %v3280 = vsel %vm926, %v3184, 0
    %v3283 = vsel %vm926, %v3187, 0
    %v3286 = vsel %vm926, %v3190, 0
    %3288 = vmatpush.msra.mxu0 %v3221
    %3289 = vmatpush.msra.mxu0 %v3219
    %3290 = vmatpush.msra.mxu0 %v3217
    %3291 = vmatpush.msra.mxu0 %v3215
    %3292 = vmatpush.msra.mxu0 %v3213
    %3293 = vmatpush.msra.mxu0 %v3211
    %3294 = vmatpush.msra.mxu0 %v3209
    %3295 = vmatpush.msra.mxu0 %v3207
    %3296 = vmatpush.msra.mxu0 %v3205
    %3297 = vmatpush.msra.mxu0 %v3203
    %3298 = vmatpush.msra.mxu0 %v3201
    %3299 = vmatpush.msra.mxu0 %v3199
    %3300 = vmatpush.msra.mxu0 %v3197
    %3301 = vmatpush.msra.mxu0 %v3195
    %3302 = vmatpush.msra.mxu0 %v3193
    %3303 = vmatpush.msra.mxu0 %v3191
    %3304 = vmatmul.f32.gmra.mxu0 %v3182
    %v3305 = vpop.f32.mrf.mxu0
    %v3306 = vadd.f32 0.0, %v3305
    %3307 = vmatmul.f32.gmra.mxu0 %v3185
    %v3308 = vpop.f32.mrf.mxu0
    %v3309 = vadd.f32 0.0, %v3308
    %3310 = vmatmul.f32.gmra.mxu0 %v3188
    %v3311 = vpop.f32.mrf.mxu0
    %v3312 = vadd.f32 0.0, %v3311
    %3313 = vdwg.mxu0
    %3314 = vmatpush.msra.mxu0 %v3253
    %3315 = vmatpush.msra.mxu0 %v3251
    %3316 = vmatpush.msra.mxu0 %v3249
    %3317 = vmatpush.msra.mxu0 %v3247
    %3318 = vmatpush.msra.mxu0 %v3245
    %3319 = vmatpush.msra.mxu0 %v3243
    %3320 = vmatpush.msra.mxu0 %v3241
    %3321 = vmatpush.msra.mxu0 %v3239
    %3322 = vmatpush.msra.mxu0 %v3237
    %3323 = vmatpush.msra.mxu0 %v3235
    %3324 = vmatpush.msra.mxu0 %v3233
    %3325 = vmatpush.msra.mxu0 %v3231
    %3326 = vmatpush.msra.mxu0 %v3229
    %3327 = vmatpush.msra.mxu0 %v3227
    %3328 = vmatpush.msra.mxu0 %v3225
    %3329 = vmatpush.msra.mxu0 %v3223
    %3330 = vmatmul.f32.gmra.mxu0 %v3183
    %v3331 = vpop.f32.mrf.mxu0
    %v3332 = vadd.f32 %v3306, %v3331
    %3333 = vmatmul.f32.gmra.mxu0 %v3186
    %v3334 = vpop.f32.mrf.mxu0
    %v3335 = vadd.f32 %v3309, %v3334
    %3336 = vmatmul.f32.gmra.mxu0 %v3189
    %v3337 = vpop.f32.mrf.mxu0
    %v3338 = vadd.f32 %v3312, %v3337
    %3339 = vdwg.mxu0
    %3340 = vmatpush.msra.mxu0 0.0
    %3341 = vmatpush.msra.mxu0 0.0
    %3342 = vmatpush.msra.mxu0 0.0
    %3343 = vmatpush.msra.mxu0 0.0
    %3344 = vmatpush.msra.mxu0 %v3277
    %3345 = vmatpush.msra.mxu0 %v3275
    %3346 = vmatpush.msra.mxu0 %v3273
    %3347 = vmatpush.msra.mxu0 %v3271
    %3348 = vmatpush.msra.mxu0 %v3269
    %3349 = vmatpush.msra.mxu0 %v3267
    %3350 = vmatpush.msra.mxu0 %v3265
    %3351 = vmatpush.msra.mxu0 %v3263
    %3352 = vmatpush.msra.mxu0 %v3261
    %3353 = vmatpush.msra.mxu0 %v3259
    %3354 = vmatpush.msra.mxu0 %v3257
    %3355 = vmatpush.msra.mxu0 %v3255
    %3356 = vmatmul.f32.gmra.mxu0 %v3280
    %v3357 = vpop.f32.mrf.mxu0
    %v3358 = vadd.f32 %v3332, %v3357
    %3359 = vmatmul.f32.gmra.mxu0 %v3283
    %v3360 = vpop.f32.mrf.mxu0
    %v3361 = vadd.f32 %v3335, %v3360
    %3362 = vmatmul.f32.gmra.mxu0 %v3286
    %v3363 = vpop.f32.mrf.mxu0
    %v3364 = vadd.f32 %v3338, %v3363
    %3365 = vdwg.mxu0
    %3366 = vmatpush.msra.mxu0 %v3222
    %3367 = vmatpush.msra.mxu0 %v3220
    %3368 = vmatpush.msra.mxu0 %v3218
    %3369 = vmatpush.msra.mxu0 %v3216
    %3370 = vmatpush.msra.mxu0 %v3214
    %3371 = vmatpush.msra.mxu0 %v3212
    %3372 = vmatpush.msra.mxu0 %v3210
    %3373 = vmatpush.msra.mxu0 %v3208
    %3374 = vmatpush.msra.mxu0 %v3206
    %3375 = vmatpush.msra.mxu0 %v3204
    %3376 = vmatpush.msra.mxu0 %v3202
    %3377 = vmatpush.msra.mxu0 %v3200
    %3378 = vmatpush.msra.mxu0 %v3198
    %3379 = vmatpush.msra.mxu0 %v3196
    %3380 = vmatpush.msra.mxu0 %v3194
    %3381 = vmatpush.msra.mxu0 %v3192
    %3382 = vmatmul.f32.gmra.mxu0 %v3182
    %v3383 = vpop.f32.mrf.mxu0
    %v3384 = vadd.f32 0.0, %v3383
    %3385 = vmatmul.f32.gmra.mxu0 %v3185
    %v3386 = vpop.f32.mrf.mxu0
    %v3387 = vadd.f32 0.0, %v3386
    %3388 = vmatmul.f32.gmra.mxu0 %v3188
    %v3389 = vpop.f32.mrf.mxu0
    %v3390 = vadd.f32 0.0, %v3389
    %3391 = vdwg.mxu0
    %3392 = vmatpush.msra.mxu0 %v3254
    %3393 = vmatpush.msra.mxu0 %v3252
    %3394 = vmatpush.msra.mxu0 %v3250
    %3395 = vmatpush.msra.mxu0 %v3248
    %3396 = vmatpush.msra.mxu0 %v3246
    %3397 = vmatpush.msra.mxu0 %v3244
    %3398 = vmatpush.msra.mxu0 %v3242
    %3399 = vmatpush.msra.mxu0 %v3240
    %3400 = vmatpush.msra.mxu0 %v3238
    %3401 = vmatpush.msra.mxu0 %v3236
    %3402 = vmatpush.msra.mxu0 %v3234
    %3403 = vmatpush.msra.mxu0 %v3232
    %3404 = vmatpush.msra.mxu0 %v3230
    %3405 = vmatpush.msra.mxu0 %v3228
    %3406 = vmatpush.msra.mxu0 %v3226
    %3407 = vmatpush.msra.mxu0 %v3224
    %3408 = vmatmul.f32.gmra.mxu0 %v3183
    %v3409 = vpop.f32.mrf.mxu0
    %v3410 = vadd.f32 %v3384, %v3409
    %3411 = vmatmul.f32.gmra.mxu0 %v3186
    %v3412 = vpop.f32.mrf.mxu0
    %v3413 = vadd.f32 %v3387, %v3412
    %3414 = vmatmul.f32.gmra.mxu0 %v3189
    %v3415 = vpop.f32.mrf.mxu0
    %v3416 = vadd.f32 %v3390, %v3415
    %3417 = vdwg.mxu0
    %3418 = vmatpush.msra.mxu0 0.0
    %3419 = vmatpush.msra.mxu0 0.0
    %3420 = vmatpush.msra.mxu0 0.0
    %3421 = vmatpush.msra.mxu0 0.0
    %3422 = vmatpush.msra.mxu0 %v3278
    %3423 = vmatpush.msra.mxu0 %v3276
    %3424 = vmatpush.msra.mxu0 %v3274
    %3425 = vmatpush.msra.mxu0 %v3272
    %3426 = vmatpush.msra.mxu0 %v3270
    %3427 = vmatpush.msra.mxu0 %v3268
    %3428 = vmatpush.msra.mxu0 %v3266
    %3429 = vmatpush.msra.mxu0 %v3264
    %3430 = vmatpush.msra.mxu0 %v3262
    %3431 = vmatpush.msra.mxu0 %v3260
    %3432 = vmatpush.msra.mxu0 %v3258
    %3433 = vmatpush.msra.mxu0 %v3256
    %3434 = vmatmul.f32.gmra.mxu0 %v3280
    %v3435 = vpop.f32.mrf.mxu0
    %v3436 = vadd.f32 %v3410, %v3435
    %3437 = vmatmul.f32.gmra.mxu0 %v3283
    %v3438 = vpop.f32.mrf.mxu0
    %v3439 = vadd.f32 %v3413, %v3438
    %3440 = vmatmul.f32.gmra.mxu0 %v3286
    %v3441 = vpop.f32.mrf.mxu0
    %v3442 = vadd.f32 %v3416, %v3441
    %3443 = vdwg.mxu0
    %s3444 = scalar_lea.vmem %s9, 704
    %v3445 = vld [vmem:[%s3444] sm:$0xff]
    %v3446 = vld [vmem:[%s3444 + $0x8] sm:$0xff]
    %v3447 = vld [vmem:[%s3444 + $0x10] sm:$0xff]
    %v3448 = vld [vmem:[%s3444 + $0x18] sm:$0xff]
    %v3449 = vld [vmem:[%s3444 + $0x20] sm:$0xff]
    %v3450 = vld [vmem:[%s3444 + $0x28] sm:$0xff]
    %v3451 = vld [vmem:[%s3444 + $0x30] sm:$0xff]
    %v3452 = vld [vmem:[%s3444 + $0x38] sm:$0xff]
    %v3453 = vld [vmem:[%s3444 + $0x40] sm:$0xff]
    %v3454 = vld [vmem:[%s3444 + $0x48] sm:$0xff]
    %v3455 = vld [vmem:[%s3444 + $0x50] sm:$0xff]
    %v3456 = vld [vmem:[%s3444 + $0x58] sm:$0xff]
    %v3457 = vld [vmem:[%s3444 + $0x60] sm:$0xff]
    %v3458 = vld [vmem:[%s3444 + $0x68] sm:$0xff]
    %v3459 = vld [vmem:[%s3444 + $0x70] sm:$0xff]
    %v3460 = vld [vmem:[%s3444 + $0x78] sm:$0xff]
    %v3461 = vld [vmem:[%s3444 + $0x80] sm:$0xff]
    %v3462 = vld [vmem:[%s3444 + $0x88] sm:$0xff]
    %v3463 = vld [vmem:[%s3444 + $0x90] sm:$0xff]
    %v3464 = vld [vmem:[%s3444 + $0x98] sm:$0xff]
    %v3465 = vld [vmem:[%s3444 + $0xa0] sm:$0xff]
    %v3466 = vld [vmem:[%s3444 + $0xa8] sm:$0xff]
    %v3467 = vld [vmem:[%s3444 + $0xb0] sm:$0xff]
    %v3468 = vld [vmem:[%s3444 + $0xb8] sm:$0xff]
    %v3469 = vld [vmem:[%s3444 + $0xc0] sm:$0xff]
    %v3470 = vld [vmem:[%s3444 + $0xc8] sm:$0xff]
    %v3471 = vld [vmem:[%s3444 + $0xd0] sm:$0xff]
    %v3472 = vld [vmem:[%s3444 + $0xd8] sm:$0xff]
    %v3473 = vld [vmem:[%s3444 + $0xe0] sm:$0xff]
    %v3474 = vld [vmem:[%s3444 + $0xe8] sm:$0xff]
    %v3475 = vld [vmem:[%s3444 + $0xf0] sm:$0xff]
    %v3476 = vld [vmem:[%s3444 + $0xf8] sm:$0xff]
    %v3477 = vld [vmem:[%s3444 + $0x100] sm:$0xff]
    %v3478 = vld [vmem:[%s3444 + $0x108] sm:$0xff]
    %v3479 = vld [vmem:[%s3444 + $0x110] sm:$0xff]
    %v3480 = vld [vmem:[%s3444 + $0x118] sm:$0xff]
    %v3481 = vld [vmem:[%s3444 + $0x120] sm:$0xff]
    %v3482 = vld [vmem:[%s3444 + $0x128] sm:$0xff]
    %v3483 = vld [vmem:[%s3444 + $0x130] sm:$0xff]
    %v3484 = vld [vmem:[%s3444 + $0x138] sm:$0xff]
    %v3485 = vld [vmem:[%s3444 + $0x140] sm:$0xff]
    %v3486 = vld [vmem:[%s3444 + $0x148] sm:$0xff]
    %v3487 = vld [vmem:[%s3444 + $0x150] sm:$0xff]
    %v3488 = vld [vmem:[%s3444 + $0x158] sm:$0xff]
    %v3489 = vld [vmem:[%s3444 + $0x160] sm:$0xff]
    %v3490 = vld [vmem:[%s3444 + $0x168] sm:$0xff]
    %v3491 = vld [vmem:[%s3444 + $0x170] sm:$0xff]
    %v3492 = vld [vmem:[%s3444 + $0x178] sm:$0xff]
    %v3493 = vld [vmem:[%s3444 + $0x180] sm:$0xff]
    %v3494 = vld [vmem:[%s3444 + $0x188] sm:$0xff]
    %v3495 = vld [vmem:[%s3444 + $0x190] sm:$0xff]
    %v3496 = vld [vmem:[%s3444 + $0x198] sm:$0xff]
    %v3497 = vld [vmem:[%s3444 + $0x1a0] sm:$0xff]
    %v3498 = vld [vmem:[%s3444 + $0x1a8] sm:$0xff]
    %v3499 = vld [vmem:[%s3444 + $0x1b0] sm:$0xff]
    %v3500 = vld [vmem:[%s3444 + $0x1b8] sm:$0xff]
    %v3501 = vld [vmem:[%s3444 + $0x1c0] sm:$0xff]
    %v3502 = vld [vmem:[%s3444 + $0x1c8] sm:$0xff]
    %v3503 = vld [vmem:[%s3444 + $0x1d0] sm:$0xff]
    %v3504 = vld [vmem:[%s3444 + $0x1d8] sm:$0xff]
    %v3505 = vld [vmem:[%s3444 + $0x1e0] sm:$0xff]
    %v3506 = vld [vmem:[%s3444 + $0x1e8] sm:$0xff]
    %v3507 = vld [vmem:[%s3444 + $0x1f0] sm:$0xff]
    %v3508 = vld [vmem:[%s3444 + $0x1f8] sm:$0xff]
    %v3509 = vld [vmem:[%s3444 + $0x200] sm:$0xff]
    %v3510 = vld [vmem:[%s3444 + $0x208] sm:$0xff]
    %v3511 = vld [vmem:[%s3444 + $0x210] sm:$0xff]
    %v3512 = vld [vmem:[%s3444 + $0x218] sm:$0xff]
    %v3513 = vld [vmem:[%s3444 + $0x220] sm:$0xff]
    %v3514 = vld [vmem:[%s3444 + $0x228] sm:$0xff]
    %v3515 = vld [vmem:[%s3444 + $0x230] sm:$0xff]
    %v3516 = vld [vmem:[%s3444 + $0x238] sm:$0xff]
    %v3517 = vld [vmem:[%s3444 + $0x240] sm:$0xff]
    %v3518 = vld [vmem:[%s3444 + $0x248] sm:$0xff]
    %v3519 = vld [vmem:[%s3444 + $0x250] sm:$0xff]
    %v3520 = vld [vmem:[%s3444 + $0x258] sm:$0xff]
    %v3521 = vld [vmem:[%s3444 + $0x260] sm:$0xff]
    %v3522 = vld [vmem:[%s3444 + $0x268] sm:$0xff]
    %v3523 = vld [vmem:[%s3444 + $0x270] sm:$0xff]
    %v3524 = vld [vmem:[%s3444 + $0x278] sm:$0xff]
    %v3525 = vld [vmem:[%s3444 + $0x280] sm:$0xff]
    %v3526 = vld [vmem:[%s3444 + $0x288] sm:$0xff]
    %v3527 = vld [vmem:[%s3444 + $0x290] sm:$0xff]
    %v3528 = vld [vmem:[%s3444 + $0x298] sm:$0xff]
    %v3529 = vld [vmem:[%s3444 + $0x2a0] sm:$0xff]
    %v3530 = vld [vmem:[%s3444 + $0x2a8] sm:$0xff]
    %v3531 = vld [vmem:[%s3444 + $0x2b0] sm:$0xff]
    %v3532 = vld [vmem:[%s3444 + $0x2b8] sm:$0xff]
    %3533 = vmatpush.msra.mxu0 %v3475
    %3534 = vmatpush.msra.mxu0 %v3473
    %3535 = vmatpush.msra.mxu0 %v3471
    %3536 = vmatpush.msra.mxu0 %v3469
    %3537 = vmatpush.msra.mxu0 %v3467
    %3538 = vmatpush.msra.mxu0 %v3465
    %3539 = vmatpush.msra.mxu0 %v3463
    %3540 = vmatpush.msra.mxu0 %v3461
    %3541 = vmatpush.msra.mxu0 %v3459
    %3542 = vmatpush.msra.mxu0 %v3457
    %3543 = vmatpush.msra.mxu0 %v3455
    %3544 = vmatpush.msra.mxu0 %v3453
    %3545 = vmatpush.msra.mxu0 %v3451
    %3546 = vmatpush.msra.mxu0 %v3449
    %3547 = vmatpush.msra.mxu0 %v3447
    %3548 = vmatpush.msra.mxu0 %v3445
    %3549 = vmatmul.f32.gmra.mxu0 %v3182
    %v3550 = vpop.f32.mrf.mxu0
    %v3551 = vadd.f32 0.0, %v3550
    %3552 = vmatmul.f32.gmra.mxu0 %v3185
    %v3553 = vpop.f32.mrf.mxu0
    %v3554 = vadd.f32 0.0, %v3553
    %3555 = vmatmul.f32.gmra.mxu0 %v3188
    %v3556 = vpop.f32.mrf.mxu0
    %v3557 = vadd.f32 0.0, %v3556
    %3558 = vdwg.mxu0
    %3559 = vmatpush.msra.mxu0 %v3507
    %3560 = vmatpush.msra.mxu0 %v3505
    %3561 = vmatpush.msra.mxu0 %v3503
    %3562 = vmatpush.msra.mxu0 %v3501
    %3563 = vmatpush.msra.mxu0 %v3499
    %3564 = vmatpush.msra.mxu0 %v3497
    %3565 = vmatpush.msra.mxu0 %v3495
    %3566 = vmatpush.msra.mxu0 %v3493
    %3567 = vmatpush.msra.mxu0 %v3491
    %3568 = vmatpush.msra.mxu0 %v3489
    %3569 = vmatpush.msra.mxu0 %v3487
    %3570 = vmatpush.msra.mxu0 %v3485
    %3571 = vmatpush.msra.mxu0 %v3483
    %3572 = vmatpush.msra.mxu0 %v3481
    %3573 = vmatpush.msra.mxu0 %v3479
    %3574 = vmatpush.msra.mxu0 %v3477
    %3575 = vmatmul.f32.gmra.mxu0 %v3183
    %v3576 = vpop.f32.mrf.mxu0
    %v3577 = vadd.f32 %v3551, %v3576
    %3578 = vmatmul.f32.gmra.mxu0 %v3186
    %v3579 = vpop.f32.mrf.mxu0
    %v3580 = vadd.f32 %v3554, %v3579
    %3581 = vmatmul.f32.gmra.mxu0 %v3189
    %v3582 = vpop.f32.mrf.mxu0
    %v3583 = vadd.f32 %v3557, %v3582
    %3584 = vdwg.mxu0
    %3585 = vmatpush.msra.mxu0 0.0
    %3586 = vmatpush.msra.mxu0 0.0
    %3587 = vmatpush.msra.mxu0 0.0
    %3588 = vmatpush.msra.mxu0 0.0
    %3589 = vmatpush.msra.mxu0 %v3531
    %3590 = vmatpush.msra.mxu0 %v3529
    %3591 = vmatpush.msra.mxu0 %v3527
    %3592 = vmatpush.msra.mxu0 %v3525
    %3593 = vmatpush.msra.mxu0 %v3523
    %3594 = vmatpush.msra.mxu0 %v3521
    %3595 = vmatpush.msra.mxu0 %v3519
    %3596 = vmatpush.msra.mxu0 %v3517
    %3597 = vmatpush.msra.mxu0 %v3515
    %3598 = vmatpush.msra.mxu0 %v3513
    %3599 = vmatpush.msra.mxu0 %v3511
    %3600 = vmatpush.msra.mxu0 %v3509
    %3601 = vmatmul.f32.gmra.mxu0 %v3280
    %v3602 = vpop.f32.mrf.mxu0
    %v3603 = vadd.f32 %v3577, %v3602
    %3604 = vmatmul.f32.gmra.mxu0 %v3283
    %v3605 = vpop.f32.mrf.mxu0
    %v3606 = vadd.f32 %v3580, %v3605
    %3607 = vmatmul.f32.gmra.mxu0 %v3286
    %v3608 = vpop.f32.mrf.mxu0
    %v3609 = vadd.f32 %v3583, %v3608
    %3610 = vdwg.mxu0
    %3611 = vmatpush.msra.mxu0 %v3476
    %3612 = vmatpush.msra.mxu0 %v3474
    %3613 = vmatpush.msra.mxu0 %v3472
    %3614 = vmatpush.msra.mxu0 %v3470
    %3615 = vmatpush.msra.mxu0 %v3468
    %3616 = vmatpush.msra.mxu0 %v3466
    %3617 = vmatpush.msra.mxu0 %v3464
    %3618 = vmatpush.msra.mxu0 %v3462
    %3619 = vmatpush.msra.mxu0 %v3460
    %3620 = vmatpush.msra.mxu0 %v3458
    %3621 = vmatpush.msra.mxu0 %v3456
    %3622 = vmatpush.msra.mxu0 %v3454
    %3623 = vmatpush.msra.mxu0 %v3452
    %3624 = vmatpush.msra.mxu0 %v3450
    %3625 = vmatpush.msra.mxu0 %v3448
    %3626 = vmatpush.msra.mxu0 %v3446
    %3627 = vmatmul.f32.gmra.mxu0 %v3182
    %v3628 = vpop.f32.mrf.mxu0
    %v3629 = vadd.f32 0.0, %v3628
    %3630 = vmatmul.f32.gmra.mxu0 %v3185
    %v3631 = vpop.f32.mrf.mxu0
    %v3632 = vadd.f32 0.0, %v3631
    %3633 = vmatmul.f32.gmra.mxu0 %v3188
    %v3634 = vpop.f32.mrf.mxu0
    %v3635 = vadd.f32 0.0, %v3634
    %3636 = vdwg.mxu0
    %3637 = vmatpush.msra.mxu0 %v3508
    %3638 = vmatpush.msra.mxu0 %v3506
    %3639 = vmatpush.msra.mxu0 %v3504
    %3640 = vmatpush.msra.mxu0 %v3502
    %3641 = vmatpush.msra.mxu0 %v3500
    %3642 = vmatpush.msra.mxu0 %v3498
    %3643 = vmatpush.msra.mxu0 %v3496
    %3644 = vmatpush.msra.mxu0 %v3494
    %3645 = vmatpush.msra.mxu0 %v3492
    %3646 = vmatpush.msra.mxu0 %v3490
    %3647 = vmatpush.msra.mxu0 %v3488
    %3648 = vmatpush.msra.mxu0 %v3486
    %3649 = vmatpush.msra.mxu0 %v3484
    %3650 = vmatpush.msra.mxu0 %v3482
    %3651 = vmatpush.msra.mxu0 %v3480
    %3652 = vmatpush.msra.mxu0 %v3478
    %3653 = vmatmul.f32.gmra.mxu0 %v3183
    %v3654 = vpop.f32.mrf.mxu0
    %v3655 = vadd.f32 %v3629, %v3654
    %3656 = vmatmul.f32.gmra.mxu0 %v3186
    %v3657 = vpop.f32.mrf.mxu0
    %v3658 = vadd.f32 %v3632, %v3657
    %3659 = vmatmul.f32.gmra.mxu0 %v3189
    %v3660 = vpop.f32.mrf.mxu0
    %v3661 = vadd.f32 %v3635, %v3660
    %3662 = vdwg.mxu0
    %3663 = vmatpush.msra.mxu0 0.0
    %3664 = vmatpush.msra.mxu0 0.0
    %3665 = vmatpush.msra.mxu0 0.0
    %3666 = vmatpush.msra.mxu0 0.0
    %3667 = vmatpush.msra.mxu0 %v3532
    %3668 = vmatpush.msra.mxu0 %v3530
    %3669 = vmatpush.msra.mxu0 %v3528
    %3670 = vmatpush.msra.mxu0 %v3526
    %3671 = vmatpush.msra.mxu0 %v3524
    %3672 = vmatpush.msra.mxu0 %v3522
    %3673 = vmatpush.msra.mxu0 %v3520
    %3674 = vmatpush.msra.mxu0 %v3518
    %3675 = vmatpush.msra.mxu0 %v3516
    %3676 = vmatpush.msra.mxu0 %v3514
    %3677 = vmatpush.msra.mxu0 %v3512
    %3678 = vmatpush.msra.mxu0 %v3510
    %3679 = vmatmul.f32.gmra.mxu0 %v3280
    %v3680 = vpop.f32.mrf.mxu0
    %v3681 = vadd.f32 %v3655, %v3680
    %3682 = vmatmul.f32.gmra.mxu0 %v3283
    %v3683 = vpop.f32.mrf.mxu0
    %v3684 = vadd.f32 %v3658, %v3683
    %3685 = vmatmul.f32.gmra.mxu0 %v3286
    %v3686 = vpop.f32.mrf.mxu0
    %v3687 = vadd.f32 %v3661, %v3686
    %3688 = vdwg.mxu0
    %v3689 = vmax.f32 %v3358, %v3603
    %v3690 = vmax.f32 %v3436, %v3681
    %v3691 = vmax.f32 %v3361, %v3606
    %v3692 = vmax.f32 %v3439, %v3684
    %v3693 = vmax.f32 %v3364, %v3609
    %v3694 = vmax.f32 %v3442, %v3687
    %v3695 = vld [vmem:[%s10] sm:$0x3]
    %vm3696 = vcmask 179200
    %v3698 = vsel %vm3696, %v3695, 0
    %vm3700 = vcmask 1045504
    %v3702 = vsel %vm3700, %v3693, 0
    %v3705 = vsel %vm3700, %v3694, 0
    %3707 = vmatpush.msra.mxu0 0.0
    %3708 = vmatpush.msra.mxu0 0.0
    %3709 = vmatpush.msra.mxu0 0.0
    %3710 = vmatpush.msra.mxu0 0.0
    %3711 = vmatpush.msra.mxu0 0.0
    %3712 = vmatpush.msra.mxu0 0.0
    %3713 = vmatpush.msra.mxu0 0.0
    %3714 = vmatpush.msra.mxu0 0.0
    %3715 = vmatpush.msra.mxu0 0.0
    %3716 = vmatpush.msra.mxu0 0.0
    %3717 = vmatpush.msra.mxu0 0.0
    %3718 = vmatpush.msra.mxu0 0.0
    %3719 = vmatpush.msra.mxu0 0.0
    %3720 = vmatpush.msra.mxu0 %v3702
    %3721 = vmatpush.msra.mxu0 %v3691
    %3722 = vmatpush.msra.mxu0 %v3689
    %3723 = vmatmul.f32.gmra.mxu0 %v3698
    %v3724 = vpop.f32.mrf.mxu0
    %v3725 = vadd.f32 0.0, %v3724
    %3726 = vdwg.mxu0
    %3727 = vmatpush.msra.mxu0 0.0
    %3728 = vmatpush.msra.mxu0 0.0
    %3729 = vmatpush.msra.mxu0 0.0
    %3730 = vmatpush.msra.mxu0 0.0
    %3731 = vmatpush.msra.mxu0 0.0
    %3732 = vmatpush.msra.mxu0 0.0
    %3733 = vmatpush.msra.mxu0 0.0
    %3734 = vmatpush.msra.mxu0 0.0
    %3735 = vmatpush.msra.mxu0 0.0
    %3736 = vmatpush.msra.mxu0 0.0
    %3737 = vmatpush.msra.mxu0 0.0
    %3738 = vmatpush.msra.mxu0 0.0
    %3739 = vmatpush.msra.mxu0 0.0
    %3740 = vmatpush.msra.mxu0 %v3705
    %3741 = vmatpush.msra.mxu0 %v3692
    %3742 = vmatpush.msra.mxu0 %v3690
    %3743 = vmatmul.f32.gmra.mxu0 %v3698
    %v3744 = vpop.f32.mrf.mxu0
    %v3745 = vadd.f32 0.0, %v3744
    %3746 = vdwg.mxu0
    %v3747 = vld [vmem:[%s11] sm:$0xff]
    %v3748 = vld [vmem:[%s11 + $0x8] sm:$0xff]
    %v3749 = vld [vmem:[%s11 + $0x10] sm:$0xff]
    %v3750 = vld [vmem:[%s11 + $0x18] sm:$0xff]
    %v3751 = vld [vmem:[%s11 + $0x20] sm:$0xff]
    %v3752 = vld [vmem:[%s11 + $0x28] sm:$0xff]
    %v3753 = vld [vmem:[%s11 + $0x30] sm:$0xff]
    %v3754 = vld [vmem:[%s11 + $0x38] sm:$0xff]
    %v3755 = vld [vmem:[%s11 + $0x40] sm:$0xff]
    %v3756 = vld [vmem:[%s11 + $0x48] sm:$0xff]
    %v3757 = vld [vmem:[%s11 + $0x50] sm:$0xff]
    %v3758 = vld [vmem:[%s11 + $0x58] sm:$0xff]
    %v3759 = vld [vmem:[%s11 + $0x60] sm:$0xff]
    %v3760 = vld [vmem:[%s11 + $0x68] sm:$0xff]
    %v3761 = vld [vmem:[%s11 + $0x70] sm:$0xff]
    %v3762 = vld [vmem:[%s11 + $0x78] sm:$0xff]
    %v3763 = vld [vmem:[%s11 + $0x80] sm:$0xff]
    %v3764 = vld [vmem:[%s11 + $0x88] sm:$0xff]
    %v3765 = vld [vmem:[%s11 + $0x90] sm:$0xff]
    %v3766 = vld [vmem:[%s11 + $0x98] sm:$0xff]
    %v3767 = vld [vmem:[%s11 + $0xa0] sm:$0xff]
    %v3768 = vld [vmem:[%s11 + $0xa8] sm:$0xff]
    %s3769 = scalar_lea.vmem %s10, 2
    %v3770 = vld [vmem:[%s3769] sm:$0x3]
    %v3772 = vsel %vm3696, %v3770, 0
    %3774 = vmatpush.msra.mxu0 0.0
    %3775 = vmatpush.msra.mxu0 0.0
    %3776 = vmatpush.msra.mxu0 0.0
    %3777 = vmatpush.msra.mxu0 0.0
    %3778 = vmatpush.msra.mxu0 0.0
    %3779 = vmatpush.msra.mxu0 0.0
    %3780 = vmatpush.msra.mxu0 0.0
    %3781 = vmatpush.msra.mxu0 0.0
    %3782 = vmatpush.msra.mxu0 0.0
    %3783 = vmatpush.msra.mxu0 0.0
    %3784 = vmatpush.msra.mxu0 0.0
    %3785 = vmatpush.msra.mxu0 0.0
    %3786 = vmatpush.msra.mxu0 0.0
    %3787 = vmatpush.msra.mxu0 %v3702
    %3788 = vmatpush.msra.mxu0 %v3691
    %3789 = vmatpush.msra.mxu0 %v3689
    %3790 = vmatmul.f32.gmra.mxu0 %v3772
    %v3791 = vpop.f32.mrf.mxu0
    %v3792 = vadd.f32 0.0, %v3791
    %3793 = vdwg.mxu0
    %3794 = vmatpush.msra.mxu0 0.0
    %3795 = vmatpush.msra.mxu0 0.0
    %3796 = vmatpush.msra.mxu0 0.0
    %3797 = vmatpush.msra.mxu0 0.0
    %3798 = vmatpush.msra.mxu0 0.0
    %3799 = vmatpush.msra.mxu0 0.0
    %3800 = vmatpush.msra.mxu0 0.0
    %3801 = vmatpush.msra.mxu0 0.0
    %3802 = vmatpush.msra.mxu0 0.0
    %3803 = vmatpush.msra.mxu0 0.0
    %3804 = vmatpush.msra.mxu0 0.0
    %3805 = vmatpush.msra.mxu0 0.0
    %3806 = vmatpush.msra.mxu0 0.0
    %3807 = vmatpush.msra.mxu0 %v3705
    %3808 = vmatpush.msra.mxu0 %v3692
    %3809 = vmatpush.msra.mxu0 %v3690
    %3810 = vmatmul.f32.gmra.mxu0 %v3772
    %v3811 = vpop.f32.mrf.mxu0
    %v3812 = vadd.f32 0.0, %v3811
    %3813 = vdwg.mxu0
    %s3814 = scalar_lea.vmem %s11, 176
    %v3815 = vld [vmem:[%s3814] sm:$0xff]
    %v3816 = vld [vmem:[%s3814 + $0x8] sm:$0xff]
    %v3817 = vld [vmem:[%s3814 + $0x10] sm:$0xff]
    %v3818 = vld [vmem:[%s3814 + $0x18] sm:$0xff]
    %v3819 = vld [vmem:[%s3814 + $0x20] sm:$0xff]
    %v3820 = vld [vmem:[%s3814 + $0x28] sm:$0xff]
    %v3821 = vld [vmem:[%s3814 + $0x30] sm:$0xff]
    %v3822 = vld [vmem:[%s3814 + $0x38] sm:$0xff]
    %v3823 = vld [vmem:[%s3814 + $0x40] sm:$0xff]
    %v3824 = vld [vmem:[%s3814 + $0x48] sm:$0xff]
    %v3825 = vld [vmem:[%s3814 + $0x50] sm:$0xff]
    %v3826 = vld [vmem:[%s3814 + $0x58] sm:$0xff]
    %v3827 = vld [vmem:[%s3814 + $0x60] sm:$0xff]
    %v3828 = vld [vmem:[%s3814 + $0x68] sm:$0xff]
    %v3829 = vld [vmem:[%s3814 + $0x70] sm:$0xff]
    %v3830 = vld [vmem:[%s3814 + $0x78] sm:$0xff]
    %v3831 = vld [vmem:[%s3814 + $0x80] sm:$0xff]
    %v3832 = vld [vmem:[%s3814 + $0x88] sm:$0xff]
    %v3833 = vld [vmem:[%s3814 + $0x90] sm:$0xff]
    %v3834 = vld [vmem:[%s3814 + $0x98] sm:$0xff]
    %v3835 = vld [vmem:[%s3814 + $0xa0] sm:$0xff]
    %v3836 = vld [vmem:[%s3814 + $0xa8] sm:$0xff]
    %v3838 = vsel %vm1800, %v3812, 0
    %3840 = vmatpush.msra.mxu0 %v3830
    %3841 = vmatpush.msra.mxu0 %v3829
    %3842 = vmatpush.msra.mxu0 %v3828
    %3843 = vmatpush.msra.mxu0 %v3827
    %3844 = vmatpush.msra.mxu0 %v3826
    %3845 = vmatpush.msra.mxu0 %v3825
    %3846 = vmatpush.msra.mxu0 %v3824
    %3847 = vmatpush.msra.mxu0 %v3823
    %3848 = vmatpush.msra.mxu0 %v3822
    %3849 = vmatpush.msra.mxu0 %v3821
    %3850 = vmatpush.msra.mxu0 %v3820
    %3851 = vmatpush.msra.mxu0 %v3819
    %3852 = vmatpush.msra.mxu0 %v3818
    %3853 = vmatpush.msra.mxu0 %v3817
    %3854 = vmatpush.msra.mxu0 %v3816
    %3855 = vmatpush.msra.mxu0 %v3815
    %3856 = vmatmul.f32.gmra.mxu0 %v3792
    %v3857 = vpop.f32.mrf.mxu0
    %v3858 = vadd.f32 0.0, %v3857
    %3859 = vdwg.mxu0
    %3860 = vmatpush.msra.mxu0 0.0
    %3861 = vmatpush.msra.mxu0 0.0
    %3862 = vmatpush.msra.mxu0 0.0
    %3863 = vmatpush.msra.mxu0 0.0
    %3864 = vmatpush.msra.mxu0 0.0
    %3865 = vmatpush.msra.mxu0 0.0
    %3866 = vmatpush.msra.mxu0 0.0
    %3867 = vmatpush.msra.mxu0 0.0
    %3868 = vmatpush.msra.mxu0 0.0
    %3869 = vmatpush.msra.mxu0 0.0
    %3870 = vmatpush.msra.mxu0 %v3836
    %3871 = vmatpush.msra.mxu0 %v3835
    %3872 = vmatpush.msra.mxu0 %v3834
    %3873 = vmatpush.msra.mxu0 %v3833
    %3874 = vmatpush.msra.mxu0 %v3832
    %3875 = vmatpush.msra.mxu0 %v3831
    %3876 = vmatmul.f32.gmra.mxu0 %v3838
    %v3877 = vpop.f32.mrf.mxu0
    %v3878 = vadd.f32 %v3858, %v3877
    %3879 = vdwg.mxu0
    %v3881 = vsel %vm1800, %v3745, 0
    %3883 = vmatpush.msra.mxu0 %v3762
    %3884 = vmatpush.msra.mxu0 %v3761
    %3885 = vmatpush.msra.mxu0 %v3760
    %3886 = vmatpush.msra.mxu0 %v3759
    %3887 = vmatpush.msra.mxu0 %v3758
    %3888 = vmatpush.msra.mxu0 %v3757
    %3889 = vmatpush.msra.mxu0 %v3756
    %3890 = vmatpush.msra.mxu0 %v3755
    %3891 = vmatpush.msra.mxu0 %v3754
    %3892 = vmatpush.msra.mxu0 %v3753
    %3893 = vmatpush.msra.mxu0 %v3752
    %3894 = vmatpush.msra.mxu0 %v3751
    %3895 = vmatpush.msra.mxu0 %v3750
    %3896 = vmatpush.msra.mxu0 %v3749
    %3897 = vmatpush.msra.mxu0 %v3748
    %3898 = vmatpush.msra.mxu0 %v3747
    %3899 = vmatmul.f32.gmra.mxu0 %v3725
    %v3900 = vpop.f32.mrf.mxu0
    %v3901 = vadd.f32 %v3878, %v3900
    %3902 = vdwg.mxu0
    %3903 = vmatpush.msra.mxu0 0.0
    %3904 = vmatpush.msra.mxu0 0.0
    %3905 = vmatpush.msra.mxu0 0.0
    %3906 = vmatpush.msra.mxu0 0.0
    %3907 = vmatpush.msra.mxu0 0.0
    %3908 = vmatpush.msra.mxu0 0.0
    %3909 = vmatpush.msra.mxu0 0.0
    %3910 = vmatpush.msra.mxu0 0.0
    %3911 = vmatpush.msra.mxu0 0.0
    %3912 = vmatpush.msra.mxu0 0.0
    %3913 = vmatpush.msra.mxu0 %v3768
    %3914 = vmatpush.msra.mxu0 %v3767
    %3915 = vmatpush.msra.mxu0 %v3766
    %3916 = vmatpush.msra.mxu0 %v3765
    %3917 = vmatpush.msra.mxu0 %v3764
    %3918 = vmatpush.msra.mxu0 %v3763
    %3919 = vmatmul.f32.gmra.mxu0 %v3881
    %v3920 = vpop.f32.mrf.mxu0
    %v3921 = vadd.f32 %v3901, %v3920
    %3922 = vdwg.mxu0
    %s3923 = scalar_lea.vmem %s10, 4
    %v3924 = vld [vmem:[%s3923] sm:$0x3]
    %v3926 = vsel %vm3696, %v3924, 0
    %3928 = vmatpush.msra.mxu0 0.0
    %3929 = vmatpush.msra.mxu0 0.0
    %3930 = vmatpush.msra.mxu0 0.0
    %3931 = vmatpush.msra.mxu0 0.0
    %3932 = vmatpush.msra.mxu0 0.0
    %3933 = vmatpush.msra.mxu0 0.0
    %3934 = vmatpush.msra.mxu0 0.0
    %3935 = vmatpush.msra.mxu0 0.0
    %3936 = vmatpush.msra.mxu0 0.0
    %3937 = vmatpush.msra.mxu0 0.0
    %3938 = vmatpush.msra.mxu0 0.0
    %3939 = vmatpush.msra.mxu0 0.0
    %3940 = vmatpush.msra.mxu0 0.0
    %3941 = vmatpush.msra.mxu0 %v3702
    %3942 = vmatpush.msra.mxu0 %v3691
    %3943 = vmatpush.msra.mxu0 %v3689
    %3944 = vmatmul.f32.gmra.mxu0 %v3926
    %v3945 = vpop.f32.mrf.mxu0
    %v3946 = vadd.f32 0.0, %v3945
    %3947 = vdwg.mxu0
    %3948 = vmatpush.msra.mxu0 0.0
    %3949 = vmatpush.msra.mxu0 0.0
    %3950 = vmatpush.msra.mxu0 0.0
    %3951 = vmatpush.msra.mxu0 0.0
    %3952 = vmatpush.msra.mxu0 0.0
    %3953 = vmatpush.msra.mxu0 0.0
    %3954 = vmatpush.msra.mxu0 0.0
    %3955 = vmatpush.msra.mxu0 0.0
    %3956 = vmatpush.msra.mxu0 0.0
    %3957 = vmatpush.msra.mxu0 0.0
    %3958 = vmatpush.msra.mxu0 0.0
    %3959 = vmatpush.msra.mxu0 0.0
    %3960 = vmatpush.msra.mxu0 0.0
    %3961 = vmatpush.msra.mxu0 %v3705
    %3962 = vmatpush.msra.mxu0 %v3692
    %3963 = vmatpush.msra.mxu0 %v3690
    %3964 = vmatmul.f32.gmra.mxu0 %v3926
    %v3965 = vpop.f32.mrf.mxu0
    %v3966 = vadd.f32 0.0, %v3965
    %3967 = vdwg.mxu0
    %s3968 = scalar_lea.vmem %s11, 352
    %v3969 = vld [vmem:[%s3968] sm:$0xff]
    %v3970 = vld [vmem:[%s3968 + $0x8] sm:$0xff]
    %v3971 = vld [vmem:[%s3968 + $0x10] sm:$0xff]
    %v3972 = vld [vmem:[%s3968 + $0x18] sm:$0xff]
    %v3973 = vld [vmem:[%s3968 + $0x20] sm:$0xff]
    %v3974 = vld [vmem:[%s3968 + $0x28] sm:$0xff]
    %v3975 = vld [vmem:[%s3968 + $0x30] sm:$0xff]
    %v3976 = vld [vmem:[%s3968 + $0x38] sm:$0xff]
    %v3977 = vld [vmem:[%s3968 + $0x40] sm:$0xff]
    %v3978 = vld [vmem:[%s3968 + $0x48] sm:$0xff]
    %v3979 = vld [vmem:[%s3968 + $0x50] sm:$0xff]
    %v3980 = vld [vmem:[%s3968 + $0x58] sm:$0xff]
    %v3981 = vld [vmem:[%s3968 + $0x60] sm:$0xff]
    %v3982 = vld [vmem:[%s3968 + $0x68] sm:$0xff]
    %v3983 = vld [vmem:[%s3968 + $0x70] sm:$0xff]
    %v3984 = vld [vmem:[%s3968 + $0x78] sm:$0xff]
    %v3985 = vld [vmem:[%s3968 + $0x80] sm:$0xff]
    %v3986 = vld [vmem:[%s3968 + $0x88] sm:$0xff]
    %v3987 = vld [vmem:[%s3968 + $0x90] sm:$0xff]
    %v3988 = vld [vmem:[%s3968 + $0x98] sm:$0xff]
    %v3989 = vld [vmem:[%s3968 + $0xa0] sm:$0xff]
    %v3990 = vld [vmem:[%s3968 + $0xa8] sm:$0xff]
    %v3992 = vsel %vm1800, %v3966, 0
    %3994 = vmatpush.msra.mxu0 %v3984
    %3995 = vmatpush.msra.mxu0 %v3983
    %3996 = vmatpush.msra.mxu0 %v3982
    %3997 = vmatpush.msra.mxu0 %v3981
    %3998 = vmatpush.msra.mxu0 %v3980
    %3999 = vmatpush.msra.mxu0 %v3979
    %4000 = vmatpush.msra.mxu0 %v3978
    %4001 = vmatpush.msra.mxu0 %v3977
    %4002 = vmatpush.msra.mxu0 %v3976
    %4003 = vmatpush.msra.mxu0 %v3975
    %4004 = vmatpush.msra.mxu0 %v3974
    %4005 = vmatpush.msra.mxu0 %v3973
    %4006 = vmatpush.msra.mxu0 %v3972
    %4007 = vmatpush.msra.mxu0 %v3971
    %4008 = vmatpush.msra.mxu0 %v3970
    %4009 = vmatpush.msra.mxu0 %v3969
    %4010 = vmatmul.f32.gmra.mxu0 %v3946
    %v4011 = vpop.f32.mrf.mxu0
    %v4012 = vadd.f32 0.0, %v4011
    %4013 = vdwg.mxu0
    %4014 = vmatpush.msra.mxu0 0.0
    %4015 = vmatpush.msra.mxu0 0.0
    %4016 = vmatpush.msra.mxu0 0.0
    %4017 = vmatpush.msra.mxu0 0.0
    %4018 = vmatpush.msra.mxu0 0.0
    %4019 = vmatpush.msra.mxu0 0.0
    %4020 = vmatpush.msra.mxu0 0.0
    %4021 = vmatpush.msra.mxu0 0.0
    %4022 = vmatpush.msra.mxu0 0.0
    %4023 = vmatpush.msra.mxu0 0.0
    %4024 = vmatpush.msra.mxu0 %v3990
    %4025 = vmatpush.msra.mxu0 %v3989
    %4026 = vmatpush.msra.mxu0 %v3988
    %4027 = vmatpush.msra.mxu0 %v3987
    %4028 = vmatpush.msra.mxu0 %v3986
    %4029 = vmatpush.msra.mxu0 %v3985
    %4030 = vmatmul.f32.gmra.mxu0 %v3992
    %v4031 = vpop.f32.mrf.mxu0
    %v4032 = vadd.f32 %v4012, %v4031
    %4033 = vdwg.mxu0
    %v4034 = vadd.f32 %v3921, %v4032
    %s4035 = scalar_lea.vmem %s10, 6
    %v4036 = vld [vmem:[%s4035] sm:$0x3]
    %v4038 = vsel %vm3696, %v4036, 0
    %4040 = vmatpush.msra.mxu0 0.0
    %4041 = vmatpush.msra.mxu0 0.0
    %4042 = vmatpush.msra.mxu0 0.0
    %4043 = vmatpush.msra.mxu0 0.0
    %4044 = vmatpush.msra.mxu0 0.0
    %4045 = vmatpush.msra.mxu0 0.0
    %4046 = vmatpush.msra.mxu0 0.0
    %4047 = vmatpush.msra.mxu0 0.0
    %4048 = vmatpush.msra.mxu0 0.0
    %4049 = vmatpush.msra.mxu0 0.0
    %4050 = vmatpush.msra.mxu0 0.0
    %4051 = vmatpush.msra.mxu0 0.0
    %4052 = vmatpush.msra.mxu0 0.0
    %4053 = vmatpush.msra.mxu0 %v3702
    %4054 = vmatpush.msra.mxu0 %v3691
    %4055 = vmatpush.msra.mxu0 %v3689
    %4056 = vmatmul.f32.gmra.mxu0 %v4038
    %v4057 = vpop.f32.mrf.mxu0
    %v4058 = vadd.f32 0.0, %v4057
    %4059 = vdwg.mxu0
    %4060 = vmatpush.msra.mxu0 0.0
    %4061 = vmatpush.msra.mxu0 0.0
    %4062 = vmatpush.msra.mxu0 0.0
    %4063 = vmatpush.msra.mxu0 0.0
    %4064 = vmatpush.msra.mxu0 0.0
    %4065 = vmatpush.msra.mxu0 0.0
    %4066 = vmatpush.msra.mxu0 0.0
    %4067 = vmatpush.msra.mxu0 0.0
    %4068 = vmatpush.msra.mxu0 0.0
    %4069 = vmatpush.msra.mxu0 0.0
    %4070 = vmatpush.msra.mxu0 0.0
    %4071 = vmatpush.msra.mxu0 0.0
    %4072 = vmatpush.msra.mxu0 0.0
    %4073 = vmatpush.msra.mxu0 %v3705
    %4074 = vmatpush.msra.mxu0 %v3692
    %4075 = vmatpush.msra.mxu0 %v3690
    %4076 = vmatmul.f32.gmra.mxu0 %v4038
    %v4077 = vpop.f32.mrf.mxu0
    %v4078 = vadd.f32 0.0, %v4077
    %4079 = vdwg.mxu0
    %s4080 = scalar_lea.vmem %s11, 528
    %v4081 = vld [vmem:[%s4080] sm:$0xff]
    %v4082 = vld [vmem:[%s4080 + $0x8] sm:$0xff]
    %v4083 = vld [vmem:[%s4080 + $0x10] sm:$0xff]
    %v4084 = vld [vmem:[%s4080 + $0x18] sm:$0xff]
    %v4085 = vld [vmem:[%s4080 + $0x20] sm:$0xff]
    %v4086 = vld [vmem:[%s4080 + $0x28] sm:$0xff]
    %v4087 = vld [vmem:[%s4080 + $0x30] sm:$0xff]
    %v4088 = vld [vmem:[%s4080 + $0x38] sm:$0xff]
    %v4089 = vld [vmem:[%s4080 + $0x40] sm:$0xff]
    %v4090 = vld [vmem:[%s4080 + $0x48] sm:$0xff]
    %v4091 = vld [vmem:[%s4080 + $0x50] sm:$0xff]
    %v4092 = vld [vmem:[%s4080 + $0x58] sm:$0xff]
    %v4093 = vld [vmem:[%s4080 + $0x60] sm:$0xff]
    %v4094 = vld [vmem:[%s4080 + $0x68] sm:$0xff]
    %v4095 = vld [vmem:[%s4080 + $0x70] sm:$0xff]
    %v4096 = vld [vmem:[%s4080 + $0x78] sm:$0xff]
    %v4097 = vld [vmem:[%s4080 + $0x80] sm:$0xff]
    %v4098 = vld [vmem:[%s4080 + $0x88] sm:$0xff]
    %v4099 = vld [vmem:[%s4080 + $0x90] sm:$0xff]
    %v4100 = vld [vmem:[%s4080 + $0x98] sm:$0xff]
    %v4101 = vld [vmem:[%s4080 + $0xa0] sm:$0xff]
    %v4102 = vld [vmem:[%s4080 + $0xa8] sm:$0xff]
    %v4104 = vsel %vm1800, %v4078, 0
    %4106 = vmatpush.msra.mxu0 %v4096
    %4107 = vmatpush.msra.mxu0 %v4095
    %4108 = vmatpush.msra.mxu0 %v4094
    %4109 = vmatpush.msra.mxu0 %v4093
    %4110 = vmatpush.msra.mxu0 %v4092
    %4111 = vmatpush.msra.mxu0 %v4091
    %4112 = vmatpush.msra.mxu0 %v4090
    %4113 = vmatpush.msra.mxu0 %v4089
    %4114 = vmatpush.msra.mxu0 %v4088
    %4115 = vmatpush.msra.mxu0 %v4087
    %4116 = vmatpush.msra.mxu0 %v4086
    %4117 = vmatpush.msra.mxu0 %v4085
    %4118 = vmatpush.msra.mxu0 %v4084
    %4119 = vmatpush.msra.mxu0 %v4083
    %4120 = vmatpush.msra.mxu0 %v4082
    %4121 = vmatpush.msra.mxu0 %v4081
    %4122 = vmatmul.f32.gmra.mxu0 %v4058
    %v4123 = vpop.f32.mrf.mxu0
    %v4124 = vadd.f32 0.0, %v4123
    %4125 = vdwg.mxu0
    %4126 = vmatpush.msra.mxu0 0.0
    %4127 = vmatpush.msra.mxu0 0.0
    %4128 = vmatpush.msra.mxu0 0.0
    %4129 = vmatpush.msra.mxu0 0.0
    %4130 = vmatpush.msra.mxu0 0.0
    %4131 = vmatpush.msra.mxu0 0.0
    %4132 = vmatpush.msra.mxu0 0.0
    %4133 = vmatpush.msra.mxu0 0.0
    %4134 = vmatpush.msra.mxu0 0.0
    %4135 = vmatpush.msra.mxu0 0.0
    %4136 = vmatpush.msra.mxu0 %v4102
    %4137 = vmatpush.msra.mxu0 %v4101
    %4138 = vmatpush.msra.mxu0 %v4100
    %4139 = vmatpush.msra.mxu0 %v4099
    %4140 = vmatpush.msra.mxu0 %v4098
    %4141 = vmatpush.msra.mxu0 %v4097
    %4142 = vmatmul.f32.gmra.mxu0 %v4104
    %v4143 = vpop.f32.mrf.mxu0
    %v4144 = vadd.f32 %v4124, %v4143
    %4145 = vdwg.mxu0
    %v4146 = vadd.f32 %v4034, %v4144
    %s4147 = scalar_lea.vmem %s10, 8
    %v4148 = vld [vmem:[%s4147] sm:$0x3]
    %v4150 = vsel %vm3696, %v4148, 0
    %4152 = vmatpush.msra.mxu0 0.0
    %4153 = vmatpush.msra.mxu0 0.0
    %4154 = vmatpush.msra.mxu0 0.0
    %4155 = vmatpush.msra.mxu0 0.0
    %4156 = vmatpush.msra.mxu0 0.0
    %4157 = vmatpush.msra.mxu0 0.0
    %4158 = vmatpush.msra.mxu0 0.0
    %4159 = vmatpush.msra.mxu0 0.0
    %4160 = vmatpush.msra.mxu0 0.0
    %4161 = vmatpush.msra.mxu0 0.0
    %4162 = vmatpush.msra.mxu0 0.0
    %4163 = vmatpush.msra.mxu0 0.0
    %4164 = vmatpush.msra.mxu0 0.0
    %4165 = vmatpush.msra.mxu0 %v3702
    %4166 = vmatpush.msra.mxu0 %v3691
    %4167 = vmatpush.msra.mxu0 %v3689
    %4168 = vmatmul.f32.gmra.mxu0 %v4150
    %v4169 = vpop.f32.mrf.mxu0
    %v4170 = vadd.f32 0.0, %v4169
    %4171 = vdwg.mxu0
    %4172 = vmatpush.msra.mxu0 0.0
    %4173 = vmatpush.msra.mxu0 0.0
    %4174 = vmatpush.msra.mxu0 0.0
    %4175 = vmatpush.msra.mxu0 0.0
    %4176 = vmatpush.msra.mxu0 0.0
    %4177 = vmatpush.msra.mxu0 0.0
    %4178 = vmatpush.msra.mxu0 0.0
    %4179 = vmatpush.msra.mxu0 0.0
    %4180 = vmatpush.msra.mxu0 0.0
    %4181 = vmatpush.msra.mxu0 0.0
    %4182 = vmatpush.msra.mxu0 0.0
    %4183 = vmatpush.msra.mxu0 0.0
    %4184 = vmatpush.msra.mxu0 0.0
    %4185 = vmatpush.msra.mxu0 %v3705
    %4186 = vmatpush.msra.mxu0 %v3692
    %4187 = vmatpush.msra.mxu0 %v3690
    %4188 = vmatmul.f32.gmra.mxu0 %v4150
    %v4189 = vpop.f32.mrf.mxu0
    %v4190 = vadd.f32 0.0, %v4189
    %4191 = vdwg.mxu0
    %s4192 = scalar_lea.vmem %s11, 704
    %v4193 = vld [vmem:[%s4192] sm:$0xff]
    %v4194 = vld [vmem:[%s4192 + $0x8] sm:$0xff]
    %v4195 = vld [vmem:[%s4192 + $0x10] sm:$0xff]
    %v4196 = vld [vmem:[%s4192 + $0x18] sm:$0xff]
    %v4197 = vld [vmem:[%s4192 + $0x20] sm:$0xff]
    %v4198 = vld [vmem:[%s4192 + $0x28] sm:$0xff]
    %v4199 = vld [vmem:[%s4192 + $0x30] sm:$0xff]
    %v4200 = vld [vmem:[%s4192 + $0x38] sm:$0xff]
    %v4201 = vld [vmem:[%s4192 + $0x40] sm:$0xff]
    %v4202 = vld [vmem:[%s4192 + $0x48] sm:$0xff]
    %v4203 = vld [vmem:[%s4192 + $0x50] sm:$0xff]
    %v4204 = vld [vmem:[%s4192 + $0x58] sm:$0xff]
    %v4205 = vld [vmem:[%s4192 + $0x60] sm:$0xff]
    %v4206 = vld [vmem:[%s4192 + $0x68] sm:$0xff]
    %v4207 = vld [vmem:[%s4192 + $0x70] sm:$0xff]
    %v4208 = vld [vmem:[%s4192 + $0x78] sm:$0xff]
    %v4209 = vld [vmem:[%s4192 + $0x80] sm:$0xff]
    %v4210 = vld [vmem:[%s4192 + $0x88] sm:$0xff]
    %v4211 = vld [vmem:[%s4192 + $0x90] sm:$0xff]
    %v4212 = vld [vmem:[%s4192 + $0x98] sm:$0xff]
    %v4213 = vld [vmem:[%s4192 + $0xa0] sm:$0xff]
    %v4214 = vld [vmem:[%s4192 + $0xa8] sm:$0xff]
    %v4216 = vsel %vm1800, %v4190, 0
    %4218 = vmatpush.msra.mxu0 %v4208
    %4219 = vmatpush.msra.mxu0 %v4207
    %4220 = vmatpush.msra.mxu0 %v4206
    %4221 = vmatpush.msra.mxu0 %v4205
    %4222 = vmatpush.msra.mxu0 %v4204
    %4223 = vmatpush.msra.mxu0 %v4203
    %4224 = vmatpush.msra.mxu0 %v4202
    %4225 = vmatpush.msra.mxu0 %v4201
    %4226 = vmatpush.msra.mxu0 %v4200
    %4227 = vmatpush.msra.mxu0 %v4199
    %4228 = vmatpush.msra.mxu0 %v4198
    %4229 = vmatpush.msra.mxu0 %v4197
    %4230 = vmatpush.msra.mxu0 %v4196
    %4231 = vmatpush.msra.mxu0 %v4195
    %4232 = vmatpush.msra.mxu0 %v4194
    %4233 = vmatpush.msra.mxu0 %v4193
    %4234 = vmatmul.f32.gmra.mxu0 %v4170
    %v4235 = vpop.f32.mrf.mxu0
    %v4236 = vadd.f32 0.0, %v4235
    %4237 = vdwg.mxu0
    %4238 = vmatpush.msra.mxu0 0.0
    %4239 = vmatpush.msra.mxu0 0.0
    %4240 = vmatpush.msra.mxu0 0.0
    %4241 = vmatpush.msra.mxu0 0.0
    %4242 = vmatpush.msra.mxu0 0.0
    %4243 = vmatpush.msra.mxu0 0.0
    %4244 = vmatpush.msra.mxu0 0.0
    %4245 = vmatpush.msra.mxu0 0.0
    %4246 = vmatpush.msra.mxu0 0.0
    %4247 = vmatpush.msra.mxu0 0.0
    %4248 = vmatpush.msra.mxu0 %v4214
    %4249 = vmatpush.msra.mxu0 %v4213
    %4250 = vmatpush.msra.mxu0 %v4212
    %4251 = vmatpush.msra.mxu0 %v4211
    %4252 = vmatpush.msra.mxu0 %v4210
    %4253 = vmatpush.msra.mxu0 %v4209
    %4254 = vmatmul.f32.gmra.mxu0 %v4216
    %v4255 = vpop.f32.mrf.mxu0
    %v4256 = vadd.f32 %v4236, %v4255
    %4257 = vdwg.mxu0
    %v4258 = vadd.f32 %v4146, %v4256
    %s4259 = scalar_lea.vmem %s10, 10
    %v4260 = vld [vmem:[%s4259] sm:$0x3]
    %v4262 = vsel %vm3696, %v4260, 0
    %4264 = vmatpush.msra.mxu0 0.0
    %4265 = vmatpush.msra.mxu0 0.0
    %4266 = vmatpush.msra.mxu0 0.0
    %4267 = vmatpush.msra.mxu0 0.0
    %4268 = vmatpush.msra.mxu0 0.0
    %4269 = vmatpush.msra.mxu0 0.0
    %4270 = vmatpush.msra.mxu0 0.0
    %4271 = vmatpush.msra.mxu0 0.0
    %4272 = vmatpush.msra.mxu0 0.0
    %4273 = vmatpush.msra.mxu0 0.0
    %4274 = vmatpush.msra.mxu0 0.0
    %4275 = vmatpush.msra.mxu0 0.0
    %4276 = vmatpush.msra.mxu0 0.0
    %4277 = vmatpush.msra.mxu0 %v3702
    %4278 = vmatpush.msra.mxu0 %v3691
    %4279 = vmatpush.msra.mxu0 %v3689
    %4280 = vmatmul.f32.gmra.mxu0 %v4262
    %v4281 = vpop.f32.mrf.mxu0
    %v4282 = vadd.f32 0.0, %v4281
    %4283 = vdwg.mxu0
    %4284 = vmatpush.msra.mxu0 0.0
    %4285 = vmatpush.msra.mxu0 0.0
    %4286 = vmatpush.msra.mxu0 0.0
    %4287 = vmatpush.msra.mxu0 0.0
    %4288 = vmatpush.msra.mxu0 0.0
    %4289 = vmatpush.msra.mxu0 0.0
    %4290 = vmatpush.msra.mxu0 0.0
    %4291 = vmatpush.msra.mxu0 0.0
    %4292 = vmatpush.msra.mxu0 0.0
    %4293 = vmatpush.msra.mxu0 0.0
    %4294 = vmatpush.msra.mxu0 0.0
    %4295 = vmatpush.msra.mxu0 0.0
    %4296 = vmatpush.msra.mxu0 0.0
    %4297 = vmatpush.msra.mxu0 %v3705
    %4298 = vmatpush.msra.mxu0 %v3692
    %4299 = vmatpush.msra.mxu0 %v3690
    %4300 = vmatmul.f32.gmra.mxu0 %v4262
    %v4301 = vpop.f32.mrf.mxu0
    %v4302 = vadd.f32 0.0, %v4301
    %4303 = vdwg.mxu0
    %s4304 = scalar_lea.vmem %s11, 880
    %v4305 = vld [vmem:[%s4304] sm:$0xff]
    %v4306 = vld [vmem:[%s4304 + $0x8] sm:$0xff]
    %v4307 = vld [vmem:[%s4304 + $0x10] sm:$0xff]
    %v4308 = vld [vmem:[%s4304 + $0x18] sm:$0xff]
    %v4309 = vld [vmem:[%s4304 + $0x20] sm:$0xff]
    %v4310 = vld [vmem:[%s4304 + $0x28] sm:$0xff]
    %v4311 = vld [vmem:[%s4304 + $0x30] sm:$0xff]
    %v4312 = vld [vmem:[%s4304 + $0x38] sm:$0xff]
    %v4313 = vld [vmem:[%s4304 + $0x40] sm:$0xff]
    %v4314 = vld [vmem:[%s4304 + $0x48] sm:$0xff]
    %v4315 = vld [vmem:[%s4304 + $0x50] sm:$0xff]
    %v4316 = vld [vmem:[%s4304 + $0x58] sm:$0xff]
    %v4317 = vld [vmem:[%s4304 + $0x60] sm:$0xff]
    %v4318 = vld [vmem:[%s4304 + $0x68] sm:$0xff]
    %v4319 = vld [vmem:[%s4304 + $0x70] sm:$0xff]
    %v4320 = vld [vmem:[%s4304 + $0x78] sm:$0xff]
    %v4321 = vld [vmem:[%s4304 + $0x80] sm:$0xff]
    %v4322 = vld [vmem:[%s4304 + $0x88] sm:$0xff]
    %v4323 = vld [vmem:[%s4304 + $0x90] sm:$0xff]
    %v4324 = vld [vmem:[%s4304 + $0x98] sm:$0xff]
    %v4325 = vld [vmem:[%s4304 + $0xa0] sm:$0xff]
    %v4326 = vld [vmem:[%s4304 + $0xa8] sm:$0xff]
    %v4328 = vsel %vm1800, %v4302, 0
    %4330 = vmatpush.msra.mxu0 %v4320
    %4331 = vmatpush.msra.mxu0 %v4319
    %4332 = vmatpush.msra.mxu0 %v4318
    %4333 = vmatpush.msra.mxu0 %v4317
    %4334 = vmatpush.msra.mxu0 %v4316
    %4335 = vmatpush.msra.mxu0 %v4315
    %4336 = vmatpush.msra.mxu0 %v4314
    %4337 = vmatpush.msra.mxu0 %v4313
    %4338 = vmatpush.msra.mxu0 %v4312
    %4339 = vmatpush.msra.mxu0 %v4311
    %4340 = vmatpush.msra.mxu0 %v4310
    %4341 = vmatpush.msra.mxu0 %v4309
    %4342 = vmatpush.msra.mxu0 %v4308
    %4343 = vmatpush.msra.mxu0 %v4307
    %4344 = vmatpush.msra.mxu0 %v4306
    %4345 = vmatpush.msra.mxu0 %v4305
    %4346 = vmatmul.f32.gmra.mxu0 %v4282
    %v4347 = vpop.f32.mrf.mxu0
    %v4348 = vadd.f32 0.0, %v4347
    %4349 = vdwg.mxu0
    %4350 = vmatpush.msra.mxu0 0.0
    %4351 = vmatpush.msra.mxu0 0.0
    %4352 = vmatpush.msra.mxu0 0.0
    %4353 = vmatpush.msra.mxu0 0.0
    %4354 = vmatpush.msra.mxu0 0.0
    %4355 = vmatpush.msra.mxu0 0.0
    %4356 = vmatpush.msra.mxu0 0.0
    %4357 = vmatpush.msra.mxu0 0.0
    %4358 = vmatpush.msra.mxu0 0.0
    %4359 = vmatpush.msra.mxu0 0.0
    %4360 = vmatpush.msra.mxu0 %v4326
    %4361 = vmatpush.msra.mxu0 %v4325
    %4362 = vmatpush.msra.mxu0 %v4324
    %4363 = vmatpush.msra.mxu0 %v4323
    %4364 = vmatpush.msra.mxu0 %v4322
    %4365 = vmatpush.msra.mxu0 %v4321
    %4366 = vmatmul.f32.gmra.mxu0 %v4328
    %v4367 = vpop.f32.mrf.mxu0
    %v4368 = vadd.f32 %v4348, %v4367
    %4369 = vdwg.mxu0
    %v4370 = vadd.f32 %v4258, %v4368
    %s4371 = scalar_lea.vmem %s10, 12
    %v4372 = vld [vmem:[%s4371] sm:$0x3]
    %v4374 = vsel %vm3696, %v4372, 0
    %4376 = vmatpush.msra.mxu0 0.0
    %4377 = vmatpush.msra.mxu0 0.0
    %4378 = vmatpush.msra.mxu0 0.0
    %4379 = vmatpush.msra.mxu0 0.0
    %4380 = vmatpush.msra.mxu0 0.0
    %4381 = vmatpush.msra.mxu0 0.0
    %4382 = vmatpush.msra.mxu0 0.0
    %4383 = vmatpush.msra.mxu0 0.0
    %4384 = vmatpush.msra.mxu0 0.0
    %4385 = vmatpush.msra.mxu0 0.0
    %4386 = vmatpush.msra.mxu0 0.0
    %4387 = vmatpush.msra.mxu0 0.0
    %4388 = vmatpush.msra.mxu0 0.0
    %4389 = vmatpush.msra.mxu0 %v3702
    %4390 = vmatpush.msra.mxu0 %v3691
    %4391 = vmatpush.msra.mxu0 %v3689
    %4392 = vmatmul.f32.gmra.mxu0 %v4374
    %v4393 = vpop.f32.mrf.mxu0
    %v4394 = vadd.f32 0.0, %v4393
    %4395 = vdwg.mxu0
    %4396 = vmatpush.msra.mxu0 0.0
    %4397 = vmatpush.msra.mxu0 0.0
    %4398 = vmatpush.msra.mxu0 0.0
    %4399 = vmatpush.msra.mxu0 0.0
    %4400 = vmatpush.msra.mxu0 0.0
    %4401 = vmatpush.msra.mxu0 0.0
    %4402 = vmatpush.msra.mxu0 0.0
    %4403 = vmatpush.msra.mxu0 0.0
    %4404 = vmatpush.msra.mxu0 0.0
    %4405 = vmatpush.msra.mxu0 0.0
    %4406 = vmatpush.msra.mxu0 0.0
    %4407 = vmatpush.msra.mxu0 0.0
    %4408 = vmatpush.msra.mxu0 0.0
    %4409 = vmatpush.msra.mxu0 %v3705
    %4410 = vmatpush.msra.mxu0 %v3692
    %4411 = vmatpush.msra.mxu0 %v3690
    %4412 = vmatmul.f32.gmra.mxu0 %v4374
    %v4413 = vpop.f32.mrf.mxu0
    %v4414 = vadd.f32 0.0, %v4413
    %4415 = vdwg.mxu0
    %s4416 = scalar_lea.vmem %s11, 1056
    %v4417 = vld [vmem:[%s4416] sm:$0xff]
    %v4418 = vld [vmem:[%s4416 + $0x8] sm:$0xff]
    %v4419 = vld [vmem:[%s4416 + $0x10] sm:$0xff]
    %v4420 = vld [vmem:[%s4416 + $0x18] sm:$0xff]
    %v4421 = vld [vmem:[%s4416 + $0x20] sm:$0xff]
    %v4422 = vld [vmem:[%s4416 + $0x28] sm:$0xff]
    %v4423 = vld [vmem:[%s4416 + $0x30] sm:$0xff]
    %v4424 = vld [vmem:[%s4416 + $0x38] sm:$0xff]
    %v4425 = vld [vmem:[%s4416 + $0x40] sm:$0xff]
    %v4426 = vld [vmem:[%s4416 + $0x48] sm:$0xff]
    %v4427 = vld [vmem:[%s4416 + $0x50] sm:$0xff]
    %v4428 = vld [vmem:[%s4416 + $0x58] sm:$0xff]
    %v4429 = vld [vmem:[%s4416 + $0x60] sm:$0xff]
    %v4430 = vld [vmem:[%s4416 + $0x68] sm:$0xff]
    %v4431 = vld [vmem:[%s4416 + $0x70] sm:$0xff]
    %v4432 = vld [vmem:[%s4416 + $0x78] sm:$0xff]
    %v4433 = vld [vmem:[%s4416 + $0x80] sm:$0xff]
    %v4434 = vld [vmem:[%s4416 + $0x88] sm:$0xff]
    %v4435 = vld [vmem:[%s4416 + $0x90] sm:$0xff]
    %v4436 = vld [vmem:[%s4416 + $0x98] sm:$0xff]
    %v4437 = vld [vmem:[%s4416 + $0xa0] sm:$0xff]
    %v4438 = vld [vmem:[%s4416 + $0xa8] sm:$0xff]
    %v4440 = vsel %vm1800, %v4414, 0
    %4442 = vmatpush.msra.mxu0 %v4432
    %4443 = vmatpush.msra.mxu0 %v4431
    %4444 = vmatpush.msra.mxu0 %v4430
    %4445 = vmatpush.msra.mxu0 %v4429
    %4446 = vmatpush.msra.mxu0 %v4428
    %4447 = vmatpush.msra.mxu0 %v4427
    %4448 = vmatpush.msra.mxu0 %v4426
    %4449 = vmatpush.msra.mxu0 %v4425
    %4450 = vmatpush.msra.mxu0 %v4424
    %4451 = vmatpush.msra.mxu0 %v4423
    %4452 = vmatpush.msra.mxu0 %v4422
    %4453 = vmatpush.msra.mxu0 %v4421
    %4454 = vmatpush.msra.mxu0 %v4420
    %4455 = vmatpush.msra.mxu0 %v4419
    %4456 = vmatpush.msra.mxu0 %v4418
    %4457 = vmatpush.msra.mxu0 %v4417
    %4458 = vmatmul.f32.gmra.mxu0 %v4394
    %v4459 = vpop.f32.mrf.mxu0
    %v4460 = vadd.f32 0.0, %v4459
    %4461 = vdwg.mxu0
    %4462 = vmatpush.msra.mxu0 0.0
    %4463 = vmatpush.msra.mxu0 0.0
    %4464 = vmatpush.msra.mxu0 0.0
    %4465 = vmatpush.msra.mxu0 0.0
    %4466 = vmatpush.msra.mxu0 0.0
    %4467 = vmatpush.msra.mxu0 0.0
    %4468 = vmatpush.msra.mxu0 0.0
    %4469 = vmatpush.msra.mxu0 0.0
    %4470 = vmatpush.msra.mxu0 0.0
    %4471 = vmatpush.msra.mxu0 0.0
    %4472 = vmatpush.msra.mxu0 %v4438
    %4473 = vmatpush.msra.mxu0 %v4437
    %4474 = vmatpush.msra.mxu0 %v4436
    %4475 = vmatpush.msra.mxu0 %v4435
    %4476 = vmatpush.msra.mxu0 %v4434
    %4477 = vmatpush.msra.mxu0 %v4433
    %4478 = vmatmul.f32.gmra.mxu0 %v4440
    %v4479 = vpop.f32.mrf.mxu0
    %v4480 = vadd.f32 %v4460, %v4479
    %4481 = vdwg.mxu0
    %v4482 = vadd.f32 %v4370, %v4480
    %s4483 = scalar_lea.vmem %s10, 14
    %v4484 = vld [vmem:[%s4483] sm:$0x3]
    %v4486 = vsel %vm3696, %v4484, 0
    %4488 = vmatpush.msra.mxu0 0.0
    %4489 = vmatpush.msra.mxu0 0.0
    %4490 = vmatpush.msra.mxu0 0.0
    %4491 = vmatpush.msra.mxu0 0.0
    %4492 = vmatpush.msra.mxu0 0.0
    %4493 = vmatpush.msra.mxu0 0.0
    %4494 = vmatpush.msra.mxu0 0.0
    %4495 = vmatpush.msra.mxu0 0.0
    %4496 = vmatpush.msra.mxu0 0.0
    %4497 = vmatpush.msra.mxu0 0.0
    %4498 = vmatpush.msra.mxu0 0.0
    %4499 = vmatpush.msra.mxu0 0.0
    %4500 = vmatpush.msra.mxu0 0.0
    %4501 = vmatpush.msra.mxu0 %v3702
    %4502 = vmatpush.msra.mxu0 %v3691
    %4503 = vmatpush.msra.mxu0 %v3689
    %4504 = vmatmul.f32.gmra.mxu0 %v4486
    %v4505 = vpop.f32.mrf.mxu0
    %v4506 = vadd.f32 0.0, %v4505
    %4507 = vdwg.mxu0
    %4508 = vmatpush.msra.mxu0 0.0
    %4509 = vmatpush.msra.mxu0 0.0
    %4510 = vmatpush.msra.mxu0 0.0
    %4511 = vmatpush.msra.mxu0 0.0
    %4512 = vmatpush.msra.mxu0 0.0
    %4513 = vmatpush.msra.mxu0 0.0
    %4514 = vmatpush.msra.mxu0 0.0
    %4515 = vmatpush.msra.mxu0 0.0
    %4516 = vmatpush.msra.mxu0 0.0
    %4517 = vmatpush.msra.mxu0 0.0
    %4518 = vmatpush.msra.mxu0 0.0
    %4519 = vmatpush.msra.mxu0 0.0
    %4520 = vmatpush.msra.mxu0 0.0
    %4521 = vmatpush.msra.mxu0 %v3705
    %4522 = vmatpush.msra.mxu0 %v3692
    %4523 = vmatpush.msra.mxu0 %v3690
    %4524 = vmatmul.f32.gmra.mxu0 %v4486
    %v4525 = vpop.f32.mrf.mxu0
    %v4526 = vadd.f32 0.0, %v4525
    %4527 = vdwg.mxu0
    %s4528 = scalar_lea.vmem %s11, 1232
    %v4529 = vld [vmem:[%s4528] sm:$0xff]
    %v4530 = vld [vmem:[%s4528 + $0x8] sm:$0xff]
    %v4531 = vld [vmem:[%s4528 + $0x10] sm:$0xff]
    %v4532 = vld [vmem:[%s4528 + $0x18] sm:$0xff]
    %v4533 = vld [vmem:[%s4528 + $0x20] sm:$0xff]
    %v4534 = vld [vmem:[%s4528 + $0x28] sm:$0xff]
    %v4535 = vld [vmem:[%s4528 + $0x30] sm:$0xff]
    %v4536 = vld [vmem:[%s4528 + $0x38] sm:$0xff]
    %v4537 = vld [vmem:[%s4528 + $0x40] sm:$0xff]
    %v4538 = vld [vmem:[%s4528 + $0x48] sm:$0xff]
    %v4539 = vld [vmem:[%s4528 + $0x50] sm:$0xff]
    %v4540 = vld [vmem:[%s4528 + $0x58] sm:$0xff]
    %v4541 = vld [vmem:[%s4528 + $0x60] sm:$0xff]
    %v4542 = vld [vmem:[%s4528 + $0x68] sm:$0xff]
    %v4543 = vld [vmem:[%s4528 + $0x70] sm:$0xff]
    %v4544 = vld [vmem:[%s4528 + $0x78] sm:$0xff]
    %v4545 = vld [vmem:[%s4528 + $0x80] sm:$0xff]
    %v4546 = vld [vmem:[%s4528 + $0x88] sm:$0xff]
    %v4547 = vld [vmem:[%s4528 + $0x90] sm:$0xff]
    %v4548 = vld [vmem:[%s4528 + $0x98] sm:$0xff]
    %v4549 = vld [vmem:[%s4528 + $0xa0] sm:$0xff]
    %v4550 = vld [vmem:[%s4528 + $0xa8] sm:$0xff]
    %v4552 = vsel %vm1800, %v4526, 0
    %4554 = vmatpush.msra.mxu0 %v4544
    %4555 = vmatpush.msra.mxu0 %v4543
    %4556 = vmatpush.msra.mxu0 %v4542
    %4557 = vmatpush.msra.mxu0 %v4541
    %4558 = vmatpush.msra.mxu0 %v4540
    %4559 = vmatpush.msra.mxu0 %v4539
    %4560 = vmatpush.msra.mxu0 %v4538
    %4561 = vmatpush.msra.mxu0 %v4537
    %4562 = vmatpush.msra.mxu0 %v4536
    %4563 = vmatpush.msra.mxu0 %v4535
    %4564 = vmatpush.msra.mxu0 %v4534
    %4565 = vmatpush.msra.mxu0 %v4533
    %4566 = vmatpush.msra.mxu0 %v4532
    %4567 = vmatpush.msra.mxu0 %v4531
    %4568 = vmatpush.msra.mxu0 %v4530
    %4569 = vmatpush.msra.mxu0 %v4529
    %4570 = vmatmul.f32.gmra.mxu0 %v4506
    %v4571 = vpop.f32.mrf.mxu0
    %v4572 = vadd.f32 0.0, %v4571
    %4573 = vdwg.mxu0
    %4574 = vmatpush.msra.mxu0 0.0
    %4575 = vmatpush.msra.mxu0 0.0
    %4576 = vmatpush.msra.mxu0 0.0
    %4577 = vmatpush.msra.mxu0 0.0
    %4578 = vmatpush.msra.mxu0 0.0
    %4579 = vmatpush.msra.mxu0 0.0
    %4580 = vmatpush.msra.mxu0 0.0
    %4581 = vmatpush.msra.mxu0 0.0
    %4582 = vmatpush.msra.mxu0 0.0
    %4583 = vmatpush.msra.mxu0 0.0
    %4584 = vmatpush.msra.mxu0 %v4550
    %4585 = vmatpush.msra.mxu0 %v4549
    %4586 = vmatpush.msra.mxu0 %v4548
    %4587 = vmatpush.msra.mxu0 %v4547
    %4588 = vmatpush.msra.mxu0 %v4546
    %4589 = vmatpush.msra.mxu0 %v4545
    %4590 = vmatmul.f32.gmra.mxu0 %v4552
    %v4591 = vpop.f32.mrf.mxu0
    %v4592 = vadd.f32 %v4572, %v4591
    %4593 = vdwg.mxu0
    %v4594 = vadd.f32 %v4482, %v4592
    %s4595 = scalar_lea.vmem %s10, 16
    %v4596 = vld [vmem:[%s4595] sm:$0x3]
    %v4598 = vsel %vm3696, %v4596, 0
    %4600 = vmatpush.msra.mxu0 0.0
    %4601 = vmatpush.msra.mxu0 0.0
    %4602 = vmatpush.msra.mxu0 0.0
    %4603 = vmatpush.msra.mxu0 0.0
    %4604 = vmatpush.msra.mxu0 0.0
    %4605 = vmatpush.msra.mxu0 0.0
    %4606 = vmatpush.msra.mxu0 0.0
    %4607 = vmatpush.msra.mxu0 0.0
    %4608 = vmatpush.msra.mxu0 0.0
    %4609 = vmatpush.msra.mxu0 0.0
    %4610 = vmatpush.msra.mxu0 0.0
    %4611 = vmatpush.msra.mxu0 0.0
    %4612 = vmatpush.msra.mxu0 0.0
    %4613 = vmatpush.msra.mxu0 %v3702
    %4614 = vmatpush.msra.mxu0 %v3691
    %4615 = vmatpush.msra.mxu0 %v3689
    %4616 = vmatmul.f32.gmra.mxu0 %v4598
    %v4617 = vpop.f32.mrf.mxu0
    %v4618 = vadd.f32 0.0, %v4617
    %4619 = vdwg.mxu0
    %4620 = vmatpush.msra.mxu0 0.0
    %4621 = vmatpush.msra.mxu0 0.0
    %4622 = vmatpush.msra.mxu0 0.0
    %4623 = vmatpush.msra.mxu0 0.0
    %4624 = vmatpush.msra.mxu0 0.0
    %4625 = vmatpush.msra.mxu0 0.0
    %4626 = vmatpush.msra.mxu0 0.0
    %4627 = vmatpush.msra.mxu0 0.0
    %4628 = vmatpush.msra.mxu0 0.0
    %4629 = vmatpush.msra.mxu0 0.0
    %4630 = vmatpush.msra.mxu0 0.0
    %4631 = vmatpush.msra.mxu0 0.0
    %4632 = vmatpush.msra.mxu0 0.0
    %4633 = vmatpush.msra.mxu0 %v3705
    %4634 = vmatpush.msra.mxu0 %v3692
    %4635 = vmatpush.msra.mxu0 %v3690
    %4636 = vmatmul.f32.gmra.mxu0 %v4598
    %v4637 = vpop.f32.mrf.mxu0
    %v4638 = vadd.f32 0.0, %v4637
    %4639 = vdwg.mxu0
    %s4640 = scalar_lea.vmem %s11, 1408
    %v4641 = vld [vmem:[%s4640] sm:$0xff]
    %v4642 = vld [vmem:[%s4640 + $0x8] sm:$0xff]
    %v4643 = vld [vmem:[%s4640 + $0x10] sm:$0xff]
    %v4644 = vld [vmem:[%s4640 + $0x18] sm:$0xff]
    %v4645 = vld [vmem:[%s4640 + $0x20] sm:$0xff]
    %v4646 = vld [vmem:[%s4640 + $0x28] sm:$0xff]
    %v4647 = vld [vmem:[%s4640 + $0x30] sm:$0xff]
    %v4648 = vld [vmem:[%s4640 + $0x38] sm:$0xff]
    %v4649 = vld [vmem:[%s4640 + $0x40] sm:$0xff]
    %v4650 = vld [vmem:[%s4640 + $0x48] sm:$0xff]
    %v4651 = vld [vmem:[%s4640 + $0x50] sm:$0xff]
    %v4652 = vld [vmem:[%s4640 + $0x58] sm:$0xff]
    %v4653 = vld [vmem:[%s4640 + $0x60] sm:$0xff]
    %v4654 = vld [vmem:[%s4640 + $0x68] sm:$0xff]
    %v4655 = vld [vmem:[%s4640 + $0x70] sm:$0xff]
    %v4656 = vld [vmem:[%s4640 + $0x78] sm:$0xff]
    %v4657 = vld [vmem:[%s4640 + $0x80] sm:$0xff]
    %v4658 = vld [vmem:[%s4640 + $0x88] sm:$0xff]
    %v4659 = vld [vmem:[%s4640 + $0x90] sm:$0xff]
    %v4660 = vld [vmem:[%s4640 + $0x98] sm:$0xff]
    %v4661 = vld [vmem:[%s4640 + $0xa0] sm:$0xff]
    %v4662 = vld [vmem:[%s4640 + $0xa8] sm:$0xff]
    %v4664 = vsel %vm1800, %v4638, 0
    %4666 = vmatpush.msra.mxu0 %v4656
    %4667 = vmatpush.msra.mxu0 %v4655
    %4668 = vmatpush.msra.mxu0 %v4654
    %4669 = vmatpush.msra.mxu0 %v4653
    %4670 = vmatpush.msra.mxu0 %v4652
    %4671 = vmatpush.msra.mxu0 %v4651
    %4672 = vmatpush.msra.mxu0 %v4650
    %4673 = vmatpush.msra.mxu0 %v4649
    %4674 = vmatpush.msra.mxu0 %v4648
    %4675 = vmatpush.msra.mxu0 %v4647
    %4676 = vmatpush.msra.mxu0 %v4646
    %4677 = vmatpush.msra.mxu0 %v4645
    %4678 = vmatpush.msra.mxu0 %v4644
    %4679 = vmatpush.msra.mxu0 %v4643
    %4680 = vmatpush.msra.mxu0 %v4642
    %4681 = vmatpush.msra.mxu0 %v4641
    %4682 = vmatmul.f32.gmra.mxu0 %v4618
    %v4683 = vpop.f32.mrf.mxu0
    %v4684 = vadd.f32 0.0, %v4683
    %4685 = vdwg.mxu0
    %4686 = vmatpush.msra.mxu0 0.0
    %4687 = vmatpush.msra.mxu0 0.0
    %4688 = vmatpush.msra.mxu0 0.0
    %4689 = vmatpush.msra.mxu0 0.0
    %4690 = vmatpush.msra.mxu0 0.0
    %4691 = vmatpush.msra.mxu0 0.0
    %4692 = vmatpush.msra.mxu0 0.0
    %4693 = vmatpush.msra.mxu0 0.0
    %4694 = vmatpush.msra.mxu0 0.0
    %4695 = vmatpush.msra.mxu0 0.0
    %4696 = vmatpush.msra.mxu0 %v4662
    %4697 = vmatpush.msra.mxu0 %v4661
    %4698 = vmatpush.msra.mxu0 %v4660
    %4699 = vmatpush.msra.mxu0 %v4659
    %4700 = vmatpush.msra.mxu0 %v4658
    %4701 = vmatpush.msra.mxu0 %v4657
    %4702 = vmatmul.f32.gmra.mxu0 %v4664
    %v4703 = vpop.f32.mrf.mxu0
    %v4704 = vadd.f32 %v4684, %v4703
    %4705 = vdwg.mxu0
    %v4706 = vadd.f32 %v4594, %v4704
    %s4707 = scalar_lea.vmem %s10, 18
    %v4708 = vld [vmem:[%s4707] sm:$0x3]
    %v4710 = vsel %vm3696, %v4708, 0
    %4712 = vmatpush.msra.mxu0 0.0
    %4713 = vmatpush.msra.mxu0 0.0
    %4714 = vmatpush.msra.mxu0 0.0
    %4715 = vmatpush.msra.mxu0 0.0
    %4716 = vmatpush.msra.mxu0 0.0
    %4717 = vmatpush.msra.mxu0 0.0
    %4718 = vmatpush.msra.mxu0 0.0
    %4719 = vmatpush.msra.mxu0 0.0
    %4720 = vmatpush.msra.mxu0 0.0
    %4721 = vmatpush.msra.mxu0 0.0
    %4722 = vmatpush.msra.mxu0 0.0
    %4723 = vmatpush.msra.mxu0 0.0
    %4724 = vmatpush.msra.mxu0 0.0
    %4725 = vmatpush.msra.mxu0 %v3702
    %4726 = vmatpush.msra.mxu0 %v3691
    %4727 = vmatpush.msra.mxu0 %v3689
    %4728 = vmatmul.f32.gmra.mxu0 %v4710
    %v4729 = vpop.f32.mrf.mxu0
    %v4730 = vadd.f32 0.0, %v4729
    %4731 = vdwg.mxu0
    %4732 = vmatpush.msra.mxu0 0.0
    %4733 = vmatpush.msra.mxu0 0.0
    %4734 = vmatpush.msra.mxu0 0.0
    %4735 = vmatpush.msra.mxu0 0.0
    %4736 = vmatpush.msra.mxu0 0.0
    %4737 = vmatpush.msra.mxu0 0.0
    %4738 = vmatpush.msra.mxu0 0.0
    %4739 = vmatpush.msra.mxu0 0.0
    %4740 = vmatpush.msra.mxu0 0.0
    %4741 = vmatpush.msra.mxu0 0.0
    %4742 = vmatpush.msra.mxu0 0.0
    %4743 = vmatpush.msra.mxu0 0.0
    %4744 = vmatpush.msra.mxu0 0.0
    %4745 = vmatpush.msra.mxu0 %v3705
    %4746 = vmatpush.msra.mxu0 %v3692
    %4747 = vmatpush.msra.mxu0 %v3690
    %4748 = vmatmul.f32.gmra.mxu0 %v4710
    %v4749 = vpop.f32.mrf.mxu0
    %v4750 = vadd.f32 0.0, %v4749
    %4751 = vdwg.mxu0
    %s4752 = scalar_lea.vmem %s11, 1584
    %v4753 = vld [vmem:[%s4752] sm:$0xff]
    %v4754 = vld [vmem:[%s4752 + $0x8] sm:$0xff]
    %v4755 = vld [vmem:[%s4752 + $0x10] sm:$0xff]
    %v4756 = vld [vmem:[%s4752 + $0x18] sm:$0xff]
    %v4757 = vld [vmem:[%s4752 + $0x20] sm:$0xff]
    %v4758 = vld [vmem:[%s4752 + $0x28] sm:$0xff]
    %v4759 = vld [vmem:[%s4752 + $0x30] sm:$0xff]
    %v4760 = vld [vmem:[%s4752 + $0x38] sm:$0xff]
    %v4761 = vld [vmem:[%s4752 + $0x40] sm:$0xff]
    %v4762 = vld [vmem:[%s4752 + $0x48] sm:$0xff]
    %v4763 = vld [vmem:[%s4752 + $0x50] sm:$0xff]
    %v4764 = vld [vmem:[%s4752 + $0x58] sm:$0xff]
    %v4765 = vld [vmem:[%s4752 + $0x60] sm:$0xff]
    %v4766 = vld [vmem:[%s4752 + $0x68] sm:$0xff]
    %v4767 = vld [vmem:[%s4752 + $0x70] sm:$0xff]
    %v4768 = vld [vmem:[%s4752 + $0x78] sm:$0xff]
    %v4769 = vld [vmem:[%s4752 + $0x80] sm:$0xff]
    %v4770 = vld [vmem:[%s4752 + $0x88] sm:$0xff]
    %v4771 = vld [vmem:[%s4752 + $0x90] sm:$0xff]
    %v4772 = vld [vmem:[%s4752 + $0x98] sm:$0xff]
    %v4773 = vld [vmem:[%s4752 + $0xa0] sm:$0xff]
    %v4774 = vld [vmem:[%s4752 + $0xa8] sm:$0xff]
    %v4776 = vsel %vm1800, %v4750, 0
    %4778 = vmatpush.msra.mxu0 %v4768
    %4779 = vmatpush.msra.mxu0 %v4767
    %4780 = vmatpush.msra.mxu0 %v4766
    %4781 = vmatpush.msra.mxu0 %v4765
    %4782 = vmatpush.msra.mxu0 %v4764
    %4783 = vmatpush.msra.mxu0 %v4763
    %4784 = vmatpush.msra.mxu0 %v4762
    %4785 = vmatpush.msra.mxu0 %v4761
    %4786 = vmatpush.msra.mxu0 %v4760
    %4787 = vmatpush.msra.mxu0 %v4759
    %4788 = vmatpush.msra.mxu0 %v4758
    %4789 = vmatpush.msra.mxu0 %v4757
    %4790 = vmatpush.msra.mxu0 %v4756
    %4791 = vmatpush.msra.mxu0 %v4755
    %4792 = vmatpush.msra.mxu0 %v4754
    %4793 = vmatpush.msra.mxu0 %v4753
    %4794 = vmatmul.f32.gmra.mxu0 %v4730
    %v4795 = vpop.f32.mrf.mxu0
    %v4796 = vadd.f32 0.0, %v4795
    %4797 = vdwg.mxu0
    %4798 = vmatpush.msra.mxu0 0.0
    %4799 = vmatpush.msra.mxu0 0.0
    %4800 = vmatpush.msra.mxu0 0.0
    %4801 = vmatpush.msra.mxu0 0.0
    %4802 = vmatpush.msra.mxu0 0.0
    %4803 = vmatpush.msra.mxu0 0.0
    %4804 = vmatpush.msra.mxu0 0.0
    %4805 = vmatpush.msra.mxu0 0.0
    %4806 = vmatpush.msra.mxu0 0.0
    %4807 = vmatpush.msra.mxu0 0.0
    %4808 = vmatpush.msra.mxu0 %v4774
    %4809 = vmatpush.msra.mxu0 %v4773
    %4810 = vmatpush.msra.mxu0 %v4772
    %4811 = vmatpush.msra.mxu0 %v4771
    %4812 = vmatpush.msra.mxu0 %v4770
    %4813 = vmatpush.msra.mxu0 %v4769
    %4814 = vmatmul.f32.gmra.mxu0 %v4776
    %v4815 = vpop.f32.mrf.mxu0
    %v4816 = vadd.f32 %v4796, %v4815
    %4817 = vdwg.mxu0
    %v4818 = vadd.f32 %v4706, %v4816
    %s4819 = scalar_lea.vmem %s10, 20
    %v4820 = vld [vmem:[%s4819] sm:$0x3]
    %v4822 = vsel %vm3696, %v4820, 0
    %4824 = vmatpush.msra.mxu0 0.0
    %4825 = vmatpush.msra.mxu0 0.0
    %4826 = vmatpush.msra.mxu0 0.0
    %4827 = vmatpush.msra.mxu0 0.0
    %4828 = vmatpush.msra.mxu0 0.0
    %4829 = vmatpush.msra.mxu0 0.0
    %4830 = vmatpush.msra.mxu0 0.0
    %4831 = vmatpush.msra.mxu0 0.0
    %4832 = vmatpush.msra.mxu0 0.0
    %4833 = vmatpush.msra.mxu0 0.0
    %4834 = vmatpush.msra.mxu0 0.0
    %4835 = vmatpush.msra.mxu0 0.0
    %4836 = vmatpush.msra.mxu0 0.0
    %4837 = vmatpush.msra.mxu0 %v3702
    %4838 = vmatpush.msra.mxu0 %v3691
    %4839 = vmatpush.msra.mxu0 %v3689
    %4840 = vmatmul.f32.gmra.mxu0 %v4822
    %v4841 = vpop.f32.mrf.mxu0
    %v4842 = vadd.f32 0.0, %v4841
    %4843 = vdwg.mxu0
    %4844 = vmatpush.msra.mxu0 0.0
    %4845 = vmatpush.msra.mxu0 0.0
    %4846 = vmatpush.msra.mxu0 0.0
    %4847 = vmatpush.msra.mxu0 0.0
    %4848 = vmatpush.msra.mxu0 0.0
    %4849 = vmatpush.msra.mxu0 0.0
    %4850 = vmatpush.msra.mxu0 0.0
    %4851 = vmatpush.msra.mxu0 0.0
    %4852 = vmatpush.msra.mxu0 0.0
    %4853 = vmatpush.msra.mxu0 0.0
    %4854 = vmatpush.msra.mxu0 0.0
    %4855 = vmatpush.msra.mxu0 0.0
    %4856 = vmatpush.msra.mxu0 0.0
    %4857 = vmatpush.msra.mxu0 %v3705
    %4858 = vmatpush.msra.mxu0 %v3692
    %4859 = vmatpush.msra.mxu0 %v3690
    %4860 = vmatmul.f32.gmra.mxu0 %v4822
    %v4861 = vpop.f32.mrf.mxu0
    %v4862 = vadd.f32 0.0, %v4861
    %4863 = vdwg.mxu0
    %s4864 = scalar_lea.vmem %s11, 1760
    %v4865 = vld [vmem:[%s4864] sm:$0xff]
    %v4866 = vld [vmem:[%s4864 + $0x8] sm:$0xff]
    %v4867 = vld [vmem:[%s4864 + $0x10] sm:$0xff]
    %v4868 = vld [vmem:[%s4864 + $0x18] sm:$0xff]
    %v4869 = vld [vmem:[%s4864 + $0x20] sm:$0xff]
    %v4870 = vld [vmem:[%s4864 + $0x28] sm:$0xff]
    %v4871 = vld [vmem:[%s4864 + $0x30] sm:$0xff]
    %v4872 = vld [vmem:[%s4864 + $0x38] sm:$0xff]
    %v4873 = vld [vmem:[%s4864 + $0x40] sm:$0xff]
    %v4874 = vld [vmem:[%s4864 + $0x48] sm:$0xff]
    %v4875 = vld [vmem:[%s4864 + $0x50] sm:$0xff]
    %v4876 = vld [vmem:[%s4864 + $0x58] sm:$0xff]
    %v4877 = vld [vmem:[%s4864 + $0x60] sm:$0xff]
    %v4878 = vld [vmem:[%s4864 + $0x68] sm:$0xff]
    %v4879 = vld [vmem:[%s4864 + $0x70] sm:$0xff]
    %v4880 = vld [vmem:[%s4864 + $0x78] sm:$0xff]
    %v4881 = vld [vmem:[%s4864 + $0x80] sm:$0xff]
    %v4882 = vld [vmem:[%s4864 + $0x88] sm:$0xff]
    %v4883 = vld [vmem:[%s4864 + $0x90] sm:$0xff]
    %v4884 = vld [vmem:[%s4864 + $0x98] sm:$0xff]
    %v4885 = vld [vmem:[%s4864 + $0xa0] sm:$0xff]
    %v4886 = vld [vmem:[%s4864 + $0xa8] sm:$0xff]
    %v4888 = vsel %vm1800, %v4862, 0
    %4890 = vmatpush.msra.mxu0 %v4880
    %4891 = vmatpush.msra.mxu0 %v4879
    %4892 = vmatpush.msra.mxu0 %v4878
    %4893 = vmatpush.msra.mxu0 %v4877
    %4894 = vmatpush.msra.mxu0 %v4876
    %4895 = vmatpush.msra.mxu0 %v4875
    %4896 = vmatpush.msra.mxu0 %v4874
    %4897 = vmatpush.msra.mxu0 %v4873
    %4898 = vmatpush.msra.mxu0 %v4872
    %4899 = vmatpush.msra.mxu0 %v4871
    %4900 = vmatpush.msra.mxu0 %v4870
    %4901 = vmatpush.msra.mxu0 %v4869
    %4902 = vmatpush.msra.mxu0 %v4868
    %4903 = vmatpush.msra.mxu0 %v4867
    %4904 = vmatpush.msra.mxu0 %v4866
    %4905 = vmatpush.msra.mxu0 %v4865
    %4906 = vmatmul.f32.gmra.mxu0 %v4842
    %v4907 = vpop.f32.mrf.mxu0
    %v4908 = vadd.f32 0.0, %v4907
    %4909 = vdwg.mxu0
    %4910 = vmatpush.msra.mxu0 0.0
    %4911 = vmatpush.msra.mxu0 0.0
    %4912 = vmatpush.msra.mxu0 0.0
    %4913 = vmatpush.msra.mxu0 0.0
    %4914 = vmatpush.msra.mxu0 0.0
    %4915 = vmatpush.msra.mxu0 0.0
    %4916 = vmatpush.msra.mxu0 0.0
    %4917 = vmatpush.msra.mxu0 0.0
    %4918 = vmatpush.msra.mxu0 0.0
    %4919 = vmatpush.msra.mxu0 0.0
    %4920 = vmatpush.msra.mxu0 %v4886
    %4921 = vmatpush.msra.mxu0 %v4885
    %4922 = vmatpush.msra.mxu0 %v4884
    %4923 = vmatpush.msra.mxu0 %v4883
    %4924 = vmatpush.msra.mxu0 %v4882
    %4925 = vmatpush.msra.mxu0 %v4881
    %4926 = vmatmul.f32.gmra.mxu0 %v4888
    %v4927 = vpop.f32.mrf.mxu0
    %v4928 = vadd.f32 %v4908, %v4927
    %4929 = vdwg.mxu0
    %v4930 = vadd.f32 %v4818, %v4928
    %v4931 = vld [vmem:[%s12] sm:$0x1]
    %v4933 = vperm.slane %v4931, 0
    %v4935 = vadd.f32 %v4930, %v4933
    %v4936 = vmax.f32 %v4935, 0.0
    %v4937 = vld [vmem:[%s13] sm:$0xff]
    %v4938 = vld [vmem:[%s13 + $0x8] sm:$0xff]
    %v4939 = vld [vmem:[%s13 + $0x10] sm:$0xff]
    %v4940 = vld [vmem:[%s13 + $0x18] sm:$0xff]
    %v4941 = vld [vmem:[%s13 + $0x20] sm:$0xff]
    %v4942 = vld [vmem:[%s13 + $0x28] sm:$0xff]
    %v4943 = vld [vmem:[%s13 + $0x30] sm:$0xff]
    %v4944 = vld [vmem:[%s13 + $0x38] sm:$0xff]
    %v4945 = vld [vmem:[%s13 + $0x40] sm:$0xff]
    %v4946 = vld [vmem:[%s13 + $0x48] sm:$0xff]
    %v4947 = vld [vmem:[%s13 + $0x50] sm:$0xff]
    %v4948 = vld [vmem:[%s13 + $0x58] sm:$0xff]
    %v4949 = vld [vmem:[%s13 + $0x60] sm:$0xff]
    %v4950 = vld [vmem:[%s13 + $0x68] sm:$0xff]
    %v4951 = vld [vmem:[%s13 + $0x70] sm:$0xff]
    %v4952 = vld [vmem:[%s13 + $0x78] sm:$0xff]
    %v4953 = vld [vmem:[%s14] sm:$0x1]
    %v4955 = vperm.slane %v4953, 0
    %4957 = vmatpush.msra.mxu0 %v4952
    %4958 = vmatpush.msra.mxu0 %v4951
    %4959 = vmatpush.msra.mxu0 %v4950
    %4960 = vmatpush.msra.mxu0 %v4949
    %4961 = vmatpush.msra.mxu0 %v4948
    %4962 = vmatpush.msra.mxu0 %v4947
    %4963 = vmatpush.msra.mxu0 %v4946
    %4964 = vmatpush.msra.mxu0 %v4945
    %4965 = vmatpush.msra.mxu0 %v4944
    %4966 = vmatpush.msra.mxu0 %v4943
    %4967 = vmatpush.msra.mxu0 %v4942
    %4968 = vmatpush.msra.mxu0 %v4941
    %4969 = vmatpush.msra.mxu0 %v4940
    %4970 = vmatpush.msra.mxu0 %v4939
    %4971 = vmatpush.msra.mxu0 %v4938
    %4972 = vmatpush.msra.mxu0 %v4937
    %4973 = vmatmul.f32.gmra.mxu0 %v4936
    %v4974 = vpop.f32.mrf.mxu0
    %v4975 = vadd.f32 %v4955, %v4974
    %4976 = vdwg.mxu0
    %v4977 = vmax.f32 %v4975, 0.0
    %v4978 = vld [vmem:[%s15] sm:$0xff]
    %v4979 = vld [vmem:[%s15 + $0x8] sm:$0xff]
    %v4980 = vld [vmem:[%s15 + $0x10] sm:$0xff]
    %v4981 = vld [vmem:[%s15 + $0x18] sm:$0xff]
    %v4982 = vld [vmem:[%s15 + $0x20] sm:$0xff]
    %v4983 = vld [vmem:[%s15 + $0x28] sm:$0xff]
    %v4984 = vld [vmem:[%s15 + $0x30] sm:$0xff]
    %v4985 = vld [vmem:[%s15 + $0x38] sm:$0xff]
    %v4986 = vld [vmem:[%s16] sm:$0x1]
    %v4988 = vperm.slane %v4986, 0
    %vm4990 = vcmask 523264
    %v4992 = vsel %vm4990, %v4977, 0
    %4994 = vmatpush.msra.mxu0 0.0
    %4995 = vmatpush.msra.mxu0 0.0
    %4996 = vmatpush.msra.mxu0 0.0
    %4997 = vmatpush.msra.mxu0 0.0
    %4998 = vmatpush.msra.mxu0 0.0
    %4999 = vmatpush.msra.mxu0 0.0
    %5000 = vmatpush.msra.mxu0 0.0
    %5001 = vmatpush.msra.mxu0 0.0
    %5002 = vmatpush.msra.mxu0 %v4985
    %5003 = vmatpush.msra.mxu0 %v4984
    %5004 = vmatpush.msra.mxu0 %v4983
    %5005 = vmatpush.msra.mxu0 %v4982
    %5006 = vmatpush.msra.mxu0 %v4981
    %5007 = vmatpush.msra.mxu0 %v4980
    %5008 = vmatpush.msra.mxu0 %v4979
    %5009 = vmatpush.msra.mxu0 %v4978
    %5010 = vmatmul.f32.gmra.mxu0 %v4992
    %v5011 = vpop.f32.mrf.mxu0
    %v5012 = vadd.f32 %v4988, %v5011
    %5013 = vdwg.mxu0
    %vm5014 = vcmask 17408
    %v5015 = vsel %vm5014, %v5012, -inf
    %5016 = vmax.xlane.f32.xlu0 %v5015
    %v5017 = vpop.xlane.xlu0 %5016
    %v5018 = vsub.f32 %v5012, %v5017
    %v5019 = vmul.f32 %v5018, 1.442695
    %v5020 = vpow.pop %v5019
    %v5021 = vsel %vm5014, %v5020, 0.0
    %5022 = vadd.xlane.f32.xlu0 %v5021
    %v5023 = vpop.xlane.xlu0 %5022
    %v5024 = vlog2.pop %v5023
    %v5025 = vmul.f32 %v5024, 0.6931472
    %v5026 = vsub.f32 %v5018, %v5025
    %5027 = vst.msk [vmem:[#allocation7] sm:$0x3] %vm5014, %v5026
    // Predicated region
    $region78: #{tpu_custom_call.1} parent=1 // pred_check
      _
    $region79: #{tpu_custom_call.1} parent=1 // pred_check_branch
      %5029 = sbr.rel (0) target = $region81
    $region80: #{tpu_custom_call.1} parent=1 // pred_region
      %5031 = vsyncadd [#allocation4], 0
      %s5033 = sshll.u32 [#allocation7], 4
      %s5034 = int_to_ptr.vmem [resolvable:$true] %s5033
      %s5035 = sshll.u32 %s17, 4
      %s5036 = int_to_ptr.hbm [resolvable:$true] %s5035
      %5038 = dma.vmem_to_hbm [thread:$0]  %s5034, 32, %s5036, [#allocation4]
    $region81: #{tpu_custom_call.1} parent=1 // pred_fallthru
      _
    // Predicated region
    $region82: #{tpu_custom_call.1} parent=1 // pred_check
      _
    $region83: #{tpu_custom_call.1} parent=1 // pred_check_branch
      %5040 = sbr.rel (0) target = $region85
    $region84: #{tpu_custom_call.1} parent=1 // pred_region
      %5042 = dma.done [#allocation4], 32
    $region85: #{tpu_custom_call.1} parent=1 // pred_fallthru
      _
    %5043 = vsyncpa [#allocation3], 1
    %5044 = vsyncpa [#allocation6], 1
    %5045 = vsyncpa [#allocation4], 1

</llo_original>
